<compile_context>
chip_gen: v7x
topology: tpu7x:2x2x1
jax: 0.10.0
libtpu: 0.0.40
codegen_flags: <defaults>
</compile_context>

<pallas_src>
import functools

import jax
import jax.numpy as jnp
from jax.experimental import pallas as pl
from jax.experimental.pallas import tpu as pltpu


# ----------------------------- in-kernel helpers ----------------------------

def _layernorm(x, w, b, eps=1e-5):
    # x: (N, D) f32, w/b: (1, D) f32.  Matches torch.nn.LayerNorm (biased variance).
    mu = jnp.mean(x, axis=-1, keepdims=True)
    xc = x - mu
    var = jnp.mean(xc * xc, axis=-1, keepdims=True)
    return xc * jax.lax.rsqrt(var + eps) * w + b


def _gelu_exact(x):
    # torch.nn.GELU default ('none' approximation): 0.5*x*(1+erf(x/sqrt(2)))
    return 0.5 * x * (1.0 + jax.lax.erf(x * 0.7071067811865476))


# ------------------------- transformer block kernel -------------------------

def block_kernel(x_ref, n1w_ref, n1b_ref,
                 wq_ref, bq_ref, wk_ref, bk_ref, wv_ref, bv_ref,
                 wo_ref, bo_ref,
                 n2w_ref, n2b_ref,
                 wfc1_ref, bfc1_ref, nmw_ref, nmb_ref, wfc2_ref, bfc2_ref,
                 o_ref, *, num_heads):
    x = x_ref[...]                               # (N, D) f32 (batch dim squeezed)
    N, D = x.shape
    hd = D // num_heads

    # --------- attention branch:  y = 2 * out_proj(MHA(norm1(x))) -----------
    xn1 = _layernorm(x, n1w_ref[...], n1b_ref[...])
    xb = xn1.astype(jnp.bfloat16)
    # 1/sqrt(hd) is already folded into wq / bq by the wrapper.
    q = jnp.dot(xb, wq_ref[...], preferred_element_type=jnp.float32) + bq_ref[...]
    k = jnp.dot(xb, wk_ref[...], preferred_element_type=jnp.float32) + bk_ref[...]
    v = jnp.dot(xb, wv_ref[...], preferred_element_type=jnp.float32) + bv_ref[...]

    wo = wo_ref[...]                             # (D, D) bf16, loaded once
    attn = None
    for h in range(num_heads):                   # static unrolled loop over heads
        sl = slice(h * hd, (h + 1) * hd)
        qh = q[:, sl].astype(jnp.bfloat16)
        kh = k[:, sl].astype(jnp.bfloat16)
        vh = v[:, sl].astype(jnp.bfloat16)
        # q @ k^T without materializing kh.T: contract on the head dim.
        s = jax.lax.dot_general(qh, kh, (((1,), (1,)), ((), ())),
                                preferred_element_type=jnp.float32)       # (N, N)
        s = s - jnp.max(s, axis=-1, keepdims=True)
        p = jnp.exp(s)
        p = p * pl.reciprocal(jnp.sum(p, axis=-1, keepdims=True), approx=True)
        oh = jnp.dot(p.astype(jnp.bfloat16), vh,
                     preferred_element_type=jnp.float32)                  # (N, hd)
        # fold each head directly into the output projection (no concatenate):
        contrib = jnp.dot(oh.astype(jnp.bfloat16), wo[sl, :],
                          preferred_element_type=jnp.float32)             # (N, D)
        attn = contrib if attn is None else attn + contrib
    y = 2.0 * (attn + bo_ref[...])               # dropout (eval) = id; "x = x + x" doubles

    # --------- MLP branch:  out = 2 * fc2(LN_h(GELU(fc1(norm2(y))))) --------
    yn = _layernorm(y, n2w_ref[...], n2b_ref[...])
    h1 = jnp.dot(yn.astype(jnp.bfloat16), wfc1_ref[...],
                 preferred_element_type=jnp.float32) + bfc1_ref[...]
    h1 = _gelu_exact(h1)
    h1 = _layernorm(h1, nmw_ref[...], nmb_ref[...])      # timm Mlp hidden LayerNorm
    h2 = jnp.dot(h1.astype(jnp.bfloat16), wfc2_ref[...],
                 preferred_element_type=jnp.float32) + bfc2_ref[...]
    o_ref[...] = (2.0 * h2).astype(o_ref.dtype)          # dropout = id; "x = x + x"


def build_block_call(B, N, D, param_shapes, num_heads, out_dtype):
    kernel = functools.partial(block_kernel, num_heads=num_heads)
    in_specs = [pl.BlockSpec((None, N, D), lambda b: (b, 0, 0))]
    in_specs += [pl.BlockSpec(shp, lambda b: (0, 0)) for shp in param_shapes]
    return pl.pallas_call(
        kernel,
        out_shape=jax.ShapeDtypeStruct((B, N, D), out_dtype),
        grid_spec=pltpu.PrefetchScalarGridSpec(
            num_scalar_prefetch=0,
            grid=(B,),
            in_specs=in_specs,
            out_specs=pl.BlockSpec((None, N, D), lambda b: (b, 0, 0)),
        ),
        compiler_params=pltpu.CompilerParams(
            dimension_semantics=("parallel",),
            vmem_limit_bytes=64 << 20,   # safe on v5e/v6e/v7x; retune per chip at real sizes
        ),
    )


# --------------------- final LayerNorm + classifier head --------------------

def head_kernel(x_ref, nw_ref, nb_ref, w_ref, b_ref, o_ref):
    xn = _layernorm(x_ref[...], nw_ref[...], nb_ref[...])
    logits = jnp.dot(xn.astype(jnp.bfloat16), w_ref[...],
                     preferred_element_type=jnp.float32) + b_ref[...]
    o_ref[...] = logits.astype(o_ref.dtype)


def build_head_call(B, D, num_classes):
    shapes = [(B, D), (1, D), (1, D), (D, num_classes), (1, num_classes)]
    return pl.pallas_call(
        head_kernel,
        out_shape=jax.ShapeDtypeStruct((B, num_classes), jnp.float32),
        grid_spec=pltpu.PrefetchScalarGridSpec(
            num_scalar_prefetch=0,
            grid=(1,),
            in_specs=[pl.BlockSpec(s, lambda i: (0, 0)) for s in shapes],
            out_specs=pl.BlockSpec((B, num_classes), lambda i: (0, 0)),
        ),
    )


# ------------------------------ JAX-side glue --------------------------------

def patchify(x_img, patch_w, patch_b, pos, cls_tok, patch_size):
    # (B, C, H, W) -> (B, L, C*P*P) -> linear embed -> +pos -> prepend cls (+pos[0]).
    B, C, H, W = x_img.shape
    P = patch_size
    hp, wp = H // P, W // P
    x = x_img.reshape(B, C, hp, P, wp, P).transpose(0, 2, 4, 1, 3, 5)
    x = x.reshape(B, hp * wp, C * P * P)
    x = x @ patch_w + patch_b
    x = x + pos[:, 1:, :]
    cls = jnp.broadcast_to(cls_tok, (B, 1, cls_tok.shape[-1]))
    x = jnp.concatenate([cls, x], axis=1)
    x = x.at[:, 0, :].add(pos[:, 0, :])
    return x


def prepare_kernel_params(p, num_heads):
    """bf16-cast matmul weights, fold 1/sqrt(hd) into Wq/bq, keep norm/bias params f32."""
    bf = lambda a: a.astype(jnp.bfloat16)
    blocks = []
    for bp in p["blocks"]:
        D = bp["wq"].shape[0]
        scale = float(D // num_heads) ** -0.5
        blocks.append((
            bp["n1w"], bp["n1b"],
            bf(bp["wq"] * scale), bp["bq"] * scale,
            bf(bp["wk"]), bp["bk"],
            bf(bp["wv"]), bp["bv"],
            bf(bp["wo"]), bp["bo"],
            bp["n2w"], bp["n2b"],
            bf(bp["wfc1"]), bp["bfc1"],
            bp["nmw"], bp["nmb"],
            bf(bp["wfc2"]), bp["bfc2"],
        ))
    return {
        "patch_w": p["patch_w"], "patch_b": p["patch_b"],
        "pos": p["pos"], "cls": p["cls"],
        "blocks": blocks,
        "norm_w": p["norm_w"], "norm_b": p["norm_b"],
        "head_w": bf(p["head_w"]), "head_b": p["head_b"],
    }


def vit_forward(x_img, kp, *, patch_size, num_heads):
    seq = patchify(x_img, kp["patch_w"], kp["patch_b"], kp["pos"], kp["cls"], patch_size)
    B, N, D = seq.shape
    block_fn = build_block_call(B, N, D, [a.shape for a in kp["blocks"][0]],
                                num_heads, seq.dtype)
    for args in kp["blocks"]:
        seq = block_fn(seq, *args)
    head_fn = build_head_call(B, D, kp["head_w"].shape[1])
    return head_fn(seq[:, 0, :], kp["norm_w"], kp["norm_b"], kp["head_w"], kp["head_b"])


# ----------------------------- pure-JAX reference ----------------------------

def _ln_ref(z, w, b, eps=1e-5):
    mu = jnp.mean(z, -1, keepdims=True)
    var = jnp.mean((z - mu) ** 2, -1, keepdims=True)
    return (z - mu) * jax.lax.rsqrt(var + eps) * w + b


def block_ref(x, p, num_heads):
    B, N, D = x.shape
    hd = D // num_heads
    scale = float(hd) ** -0.5
    xn = _ln_ref(x, p["n1w"], p["n1b"])
    q = (xn @ p["wq"] + p["bq"]).reshape(B, N, num_heads, hd).transpose(0, 2, 1, 3) * scale
    k = (xn @ p["wk"] + p["bk"]).reshape(B, N, num_heads, hd).transpose(0, 2, 1, 3)
    v = (xn @ p["wv"] + p["bv"]).reshape(B, N, num_heads, hd).transpose(0, 2, 1, 3)
    a = jax.nn.softmax(q @ jnp.swapaxes(k, -1, -2), axis=-1)
    o = (a @ v).transpose(0, 2, 1, 3).reshape(B, N, D)
    y = 2.0 * (o @ p["wo"] + p["bo"])                 # dropout(eval)=id; x = x + x
    z = _ln_ref(y, p["n2w"], p["n2b"])
    h = _gelu_exact(z @ p["wfc1"] + p["bfc1"])
    h = _ln_ref(h, p["nmw"], p["nmb"])
    h = h @ p["wfc2"] + p["bfc2"]
    return 2.0 * h                                    # dropout(eval)=id; x = x + x


def vit_forward_ref(x_img, p, *, patch_size, num_heads):
    seq = patchify(x_img, p["patch_w"], p["patch_b"], p["pos"], p["cls"], patch_size)
    for bp in p["blocks"]:
        seq = block_ref(seq, bp, num_heads)
    cls = _ln_ref(seq[:, 0, :], p["norm_w"], p["norm_b"])
    return cls @ p["head_w"] + p["head_b"]


# ----------------------------------- main ------------------------------------

def init_params(key, *, C, P, D, Hm, L, layers, num_classes):
    patch_dim = C * P * P
    keys = jax.random.split(key, 8 + layers)
    nrm = lambda k, s, sd: sd * jax.random.normal(k, s, jnp.float32)
    params = {
        "patch_w": nrm(keys[0], (patch_dim, D), 0.08),
        "patch_b": nrm(keys[1], (D,), 0.02),
        "pos":     nrm(keys[2], (1, L + 1, D), 0.02),
        "cls":     nrm(keys[3], (1, 1, D), 0.02),
        "norm_w":  1.0 + nrm(keys[4], (1, D), 0.05),
        "norm_b":  nrm(keys[5], (1, D), 0.02),
        "head_w":  nrm(keys[6], (D, num_classes), 0.1),
        "head_b":  nrm(keys[7], (1, num_classes), 0.02),
        "blocks": [],
    }
    for l in range(layers):
        ks = jax.random.split(keys[8 + l], 18)
        params["blocks"].append({
            "n1w": 1.0 + nrm(ks[0], (1, D), 0.05), "n1b": nrm(ks[1], (1, D), 0.02),
            "wq": nrm(ks[2], (D, D), 0.05),  "bq": nrm(ks[3], (1, D), 0.02),
            "wk": nrm(ks[4], (D, D), 0.05),  "bk": nrm(ks[5], (1, D), 0.02),
            "wv": nrm(ks[6], (D, D), 0.05),  "bv": nrm(ks[7], (1, D), 0.02),
            "wo": nrm(ks[8], (D, D), 0.1),   "bo": nrm(ks[9], (1, D), 0.02),
            "n2w": 1.0 + nrm(ks[10], (1, D), 0.05), "n2b": nrm(ks[11], (1, D), 0.02),
            "wfc1": nrm(ks[12], (D, Hm), 0.05), "bfc1": nrm(ks[13], (1, Hm), 0.02),
            "nmw": 1.0 + nrm(ks[14], (1, Hm), 0.05), "nmb": nrm(ks[15], (1, Hm), 0.02),
            "wfc2": nrm(ks[16], (Hm, D), 0.05), "bfc2": nrm(ks[17], (1, D), 0.02),
        })
    return params


if __name__ == "__main__":
    # Small shapes consistent with the module's forward (image input B,C,H,W).
    B, C, IMG, P = 2, 3, 16, 4
    D, num_heads, layers, num_classes = 64, 4, 2, 10
    mlp_ratio = 4.0
    Hm = int(D * mlp_ratio)
    L = (IMG // P) ** 2                                  # 16 patches, seq len = L + 1

    key = jax.random.PRNGKey(0)
    kx, kp = jax.random.split(key)
    x_img = jax.random.normal(kx, (B, C, IMG, IMG), jnp.float32)
    params = init_params(kp, C=C, P=P, D=D, Hm=Hm, L=L, layers=layers,
                         num_classes=num_classes)
    kparams = prepare_kernel_params(params, num_heads)

    out = vit_forward(x_img, kparams, patch_size=P, num_heads=num_heads)
    out = jax.block_until_ready(out)

    ref = vit_forward_ref(x_img, params, patch_size=P, num_heads=num_heads)

    assert out.shape == (B, num_classes)
    assert bool(jnp.isfinite(out).all()), "non-finite values in kernel output"
    rel = float(jnp.linalg.norm(out - ref) / (jnp.linalg.norm(ref) + 1e-12))
    # bf16 MXU operands (f32 accumulation) vs f32 reference over 2 blocks + head.
    assert rel < 6e-2, f"mismatch vs reference: rel_l2={rel:.4f}"

    print("KERNEL_OK")
</pallas_src>

<mosaic_0001>
module attributes {stable_mosaic.version = 11 : i64} {
  func.func @block_kernel(%arg0: i32, %arg1: memref<1x17x64xf32, #tpu.memory_space<vmem>>, %arg2: memref<1x64xf32, #tpu.memory_space<vmem>>, %arg3: memref<1x64xf32, #tpu.memory_space<vmem>>, %arg4: memref<64x64xbf16, #tpu.memory_space<vmem>>, %arg5: memref<1x64xf32, #tpu.memory_space<vmem>>, %arg6: memref<64x64xbf16, #tpu.memory_space<vmem>>, %arg7: memref<1x64xf32, #tpu.memory_space<vmem>>, %arg8: memref<64x64xbf16, #tpu.memory_space<vmem>>, %arg9: memref<1x64xf32, #tpu.memory_space<vmem>>, %arg10: memref<64x64xbf16, #tpu.memory_space<vmem>>, %arg11: memref<1x64xf32, #tpu.memory_space<vmem>>, %arg12: memref<1x64xf32, #tpu.memory_space<vmem>>, %arg13: memref<1x64xf32, #tpu.memory_space<vmem>>, %arg14: memref<64x256xbf16, #tpu.memory_space<vmem>>, %arg15: memref<1x256xf32, #tpu.memory_space<vmem>>, %arg16: memref<1x256xf32, #tpu.memory_space<vmem>>, %arg17: memref<1x256xf32, #tpu.memory_space<vmem>>, %arg18: memref<256x64xbf16, #tpu.memory_space<vmem>>, %arg19: memref<1x64xf32, #tpu.memory_space<vmem>>, %arg20: memref<1x17x64xf32, #tpu.memory_space<vmem>>) attributes {dimension_semantics = [#tpu.dimension_semantics<parallel>], iteration_bounds = array<i64: 2>, scalar_prefetch = 0 : i64, scratch_operands = 0 : i64, tpu.core_type = #tpu.core_type<tc>, window_params = [{transform_indices = @transform_0, window_bounds = array<i64: 1, 17, 64>}, {pipeline_mode = #tpu.pipeline_mode<synchronous>, transform_indices = @transform_1, window_bounds = array<i64: 1, 64>}, {pipeline_mode = #tpu.pipeline_mode<synchronous>, transform_indices = @transform_2, window_bounds = array<i64: 1, 64>}, {pipeline_mode = #tpu.pipeline_mode<synchronous>, transform_indices = @transform_3, window_bounds = array<i64: 64, 64>}, {pipeline_mode = #tpu.pipeline_mode<synchronous>, transform_indices = @transform_4, window_bounds = array<i64: 1, 64>}, {pipeline_mode = #tpu.pipeline_mode<synchronous>, transform_indices = @transform_5, window_bounds = array<i64: 64, 64>}, {pipeline_mode = #tpu.pipeline_mode<synchronous>, transform_indices = @transform_6, window_bounds = array<i64: 1, 64>}, {pipeline_mode = #tpu.pipeline_mode<synchronous>, transform_indices = @transform_7, window_bounds = array<i64: 64, 64>}, {pipeline_mode = #tpu.pipeline_mode<synchronous>, transform_indices = @transform_8, window_bounds = array<i64: 1, 64>}, {pipeline_mode = #tpu.pipeline_mode<synchronous>, transform_indices = @transform_9, window_bounds = array<i64: 64, 64>}, {pipeline_mode = #tpu.pipeline_mode<synchronous>, transform_indices = @transform_10, window_bounds = array<i64: 1, 64>}, {pipeline_mode = #tpu.pipeline_mode<synchronous>, transform_indices = @transform_11, window_bounds = array<i64: 1, 64>}, {pipeline_mode = #tpu.pipeline_mode<synchronous>, transform_indices = @transform_12, window_bounds = array<i64: 1, 64>}, {pipeline_mode = #tpu.pipeline_mode<synchronous>, transform_indices = @transform_13, window_bounds = array<i64: 64, 256>}, {pipeline_mode = #tpu.pipeline_mode<synchronous>, transform_indices = @transform_14, window_bounds = array<i64: 1, 256>}, {pipeline_mode = #tpu.pipeline_mode<synchronous>, transform_indices = @transform_15, window_bounds = array<i64: 1, 256>}, {pipeline_mode = #tpu.pipeline_mode<synchronous>, transform_indices = @transform_16, window_bounds = array<i64: 1, 256>}, {pipeline_mode = #tpu.pipeline_mode<synchronous>, transform_indices = @transform_17, window_bounds = array<i64: 256, 64>}, {pipeline_mode = #tpu.pipeline_mode<synchronous>, transform_indices = @transform_18, window_bounds = array<i64: 1, 64>}, {transform_indices = @transform_19, window_bounds = array<i64: 1, 17, 64>}]} {
    %c0 = arith.constant 0 : index
    %c0_0 = arith.constant 0 : index
    %c0_1 = arith.constant 0 : index
    %0 = vector.load %arg1[%c0, %c0_0, %c0_1] : memref<1x17x64xf32, #tpu.memory_space<vmem>>, vector<1x17x64xf32>
    %1 = vector.shape_cast %0 : vector<1x17x64xf32> to vector<17x64xf32>
    %c0_2 = arith.constant 0 : index
    %c0_3 = arith.constant 0 : index
    %2 = vector.load %arg2[%c0_2, %c0_3] : memref<1x64xf32, #tpu.memory_space<vmem>>, vector<1x64xf32>
    %c0_4 = arith.constant 0 : index
    %c0_5 = arith.constant 0 : index
    %3 = vector.load %arg3[%c0_4, %c0_5] : memref<1x64xf32, #tpu.memory_space<vmem>>, vector<1x64xf32>
    %cst = arith.constant dense<0.000000e+00> : vector<17xf32>
    %4 = vector.multi_reduction <add>, %1, %cst [1] : vector<17x64xf32> to vector<17xf32>
    %5 = vector.shape_cast %4 : vector<17xf32> to vector<17x1xf32>
    %cst_6 = arith.constant 6.400000e+01 : f32
    %6 = vector.broadcast %cst_6 : f32 to vector<17x1xf32>
    %7 = arith.divf %5, %6 : vector<17x1xf32>
    %8 = vector.broadcast %7 : vector<17x1xf32> to vector<17x64xf32>
    %9 = arith.subf %1, %8 : vector<17x64xf32>
    %10 = arith.mulf %9, %9 : vector<17x64xf32>
    %cst_7 = arith.constant dense<0.000000e+00> : vector<17xf32>
    %11 = vector.multi_reduction <add>, %10, %cst_7 [1] : vector<17x64xf32> to vector<17xf32>
    %12 = vector.shape_cast %11 : vector<17xf32> to vector<17x1xf32>
    %cst_8 = arith.constant 6.400000e+01 : f32
    %13 = vector.broadcast %cst_8 : f32 to vector<17x1xf32>
    %14 = arith.divf %12, %13 : vector<17x1xf32>
    %cst_9 = arith.constant 9.99999974E-6 : f32
    %15 = vector.broadcast %cst_9 : f32 to vector<17x1xf32>
    %16 = arith.addf %14, %15 : vector<17x1xf32>
    %17 = math.rsqrt %16 : vector<17x1xf32>
    %18 = vector.broadcast %17 : vector<17x1xf32> to vector<17x64xf32>
    %19 = arith.mulf %9, %18 : vector<17x64xf32>
    %20 = vector.broadcast %2 : vector<1x64xf32> to vector<17x64xf32>
    %21 = arith.mulf %19, %20 : vector<17x64xf32>
    %22 = vector.broadcast %3 : vector<1x64xf32> to vector<17x64xf32>
    %23 = arith.addf %21, %22 : vector<17x64xf32>
    %24 = arith.truncf %23 : vector<17x64xf32> to vector<17x64xbf16>
    %c0_10 = arith.constant 0 : index
    %c0_11 = arith.constant 0 : index
    %25 = vector.load %arg4[%c0_10, %c0_11] : memref<64x64xbf16, #tpu.memory_space<vmem>>, vector<64x64xbf16>
    %cst_12 = arith.constant dense<0.000000e+00> : vector<17x64xf32>
    %26 = tpu.matmul %24, %25, %cst_12 {dimension_numbers = #tpu.dot_dimension_numbers<[1], [0], [0], [1], [0, 0, 1, 1], [], []>} : vector<17x64xbf16>, vector<64x64xbf16>, vector<17x64xf32> -> vector<17x64xf32>
    %c0_13 = arith.constant 0 : index
    %c0_14 = arith.constant 0 : index
    %27 = vector.load %arg5[%c0_13, %c0_14] : memref<1x64xf32, #tpu.memory_space<vmem>>, vector<1x64xf32>
    %28 = vector.broadcast %27 : vector<1x64xf32> to vector<17x64xf32>
    %29 = arith.addf %26, %28 : vector<17x64xf32>
    %c0_15 = arith.constant 0 : index
    %c0_16 = arith.constant 0 : index
    %30 = vector.load %arg6[%c0_15, %c0_16] : memref<64x64xbf16, #tpu.memory_space<vmem>>, vector<64x64xbf16>
    %cst_17 = arith.constant dense<0.000000e+00> : vector<17x64xf32>
    %31 = tpu.matmul %24, %30, %cst_17 {dimension_numbers = #tpu.dot_dimension_numbers<[1], [0], [0], [1], [0, 0, 1, 1], [], []>} : vector<17x64xbf16>, vector<64x64xbf16>, vector<17x64xf32> -> vector<17x64xf32>
    %c0_18 = arith.constant 0 : index
    %c0_19 = arith.constant 0 : index
    %32 = vector.load %arg7[%c0_18, %c0_19] : memref<1x64xf32, #tpu.memory_space<vmem>>, vector<1x64xf32>
    %33 = vector.broadcast %32 : vector<1x64xf32> to vector<17x64xf32>
    %34 = arith.addf %31, %33 : vector<17x64xf32>
    %c0_20 = arith.constant 0 : index
    %c0_21 = arith.constant 0 : index
    %35 = vector.load %arg8[%c0_20, %c0_21] : memref<64x64xbf16, #tpu.memory_space<vmem>>, vector<64x64xbf16>
    %cst_22 = arith.constant dense<0.000000e+00> : vector<17x64xf32>
    %36 = tpu.matmul %24, %35, %cst_22 {dimension_numbers = #tpu.dot_dimension_numbers<[1], [0], [0], [1], [0, 0, 1, 1], [], []>} : vector<17x64xbf16>, vector<64x64xbf16>, vector<17x64xf32> -> vector<17x64xf32>
    %c0_23 = arith.constant 0 : index
    %c0_24 = arith.constant 0 : index
    %37 = vector.load %arg9[%c0_23, %c0_24] : memref<1x64xf32, #tpu.memory_space<vmem>>, vector<1x64xf32>
    %38 = vector.broadcast %37 : vector<1x64xf32> to vector<17x64xf32>
    %39 = arith.addf %36, %38 : vector<17x64xf32>
    %c0_25 = arith.constant 0 : index
    %c0_26 = arith.constant 0 : index
    %40 = vector.load %arg10[%c0_25, %c0_26] : memref<64x64xbf16, #tpu.memory_space<vmem>>, vector<64x64xbf16>
    %41 = vector.extract_strided_slice %29 {offsets = [0, 0], sizes = [17, 16], strides = [1, 1]} : vector<17x64xf32> to vector<17x16xf32>
    %42 = arith.truncf %41 : vector<17x16xf32> to vector<17x16xbf16>
    %43 = vector.extract_strided_slice %34 {offsets = [0, 0], sizes = [17, 16], strides = [1, 1]} : vector<17x64xf32> to vector<17x16xf32>
    %44 = arith.truncf %43 : vector<17x16xf32> to vector<17x16xbf16>
    %45 = vector.extract_strided_slice %39 {offsets = [0, 0], sizes = [17, 16], strides = [1, 1]} : vector<17x64xf32> to vector<17x16xf32>
    %46 = arith.truncf %45 : vector<17x16xf32> to vector<17x16xbf16>
    %cst_27 = arith.constant dense<0.000000e+00> : vector<17x17xf32>
    %47 = tpu.matmul %42, %44, %cst_27 {dimension_numbers = #tpu.dot_dimension_numbers<[1], [1], [0], [0], [0, 0, 1, 0], [], []>} : vector<17x16xbf16>, vector<17x16xbf16>, vector<17x17xf32> -> vector<17x17xf32>
    %cst_28 = arith.constant dense<0xFF800000> : vector<17xf32>
    %48 = vector.multi_reduction <maximumf>, %47, %cst_28 [1] : vector<17x17xf32> to vector<17xf32>
    %49 = vector.shape_cast %48 : vector<17xf32> to vector<17x1xf32>
    %50 = vector.broadcast %49 : vector<17x1xf32> to vector<17x17xf32>
    %51 = arith.subf %47, %50 : vector<17x17xf32>
    %52 = math.exp %51 : vector<17x17xf32>
    %cst_29 = arith.constant dense<0.000000e+00> : vector<17xf32>
    %53 = vector.multi_reduction <add>, %52, %cst_29 [1] : vector<17x17xf32> to vector<17xf32>
    %54 = vector.shape_cast %53 : vector<17xf32> to vector<17x1xf32>
    %55 = tpu.reciprocal %54 {approx = true} : vector<17x1xf32> -> vector<17x1xf32>
    %56 = vector.broadcast %55 : vector<17x1xf32> to vector<17x17xf32>
    %57 = arith.mulf %52, %56 : vector<17x17xf32>
    %58 = arith.truncf %57 : vector<17x17xf32> to vector<17x17xbf16>
    %cst_30 = arith.constant dense<0.000000e+00> : vector<17x16xf32>
    %59 = tpu.matmul %58, %46, %cst_30 {dimension_numbers = #tpu.dot_dimension_numbers<[1], [0], [0], [1], [0, 0, 1, 1], [], []>} : vector<17x17xbf16>, vector<17x16xbf16>, vector<17x16xf32> -> vector<17x16xf32>
    %60 = arith.truncf %59 : vector<17x16xf32> to vector<17x16xbf16>
    %61 = vector.extract_strided_slice %40 {offsets = [0, 0], sizes = [16, 64], strides = [1, 1]} : vector<64x64xbf16> to vector<16x64xbf16>
    %cst_31 = arith.constant dense<0.000000e+00> : vector<17x64xf32>
    %62 = tpu.matmul %60, %61, %cst_31 {dimension_numbers = #tpu.dot_dimension_numbers<[1], [0], [0], [1], [0, 0, 1, 1], [], []>} : vector<17x16xbf16>, vector<16x64xbf16>, vector<17x64xf32> -> vector<17x64xf32>
    %63 = vector.extract_strided_slice %29 {offsets = [0, 16], sizes = [17, 16], strides = [1, 1]} : vector<17x64xf32> to vector<17x16xf32>
    %64 = arith.truncf %63 : vector<17x16xf32> to vector<17x16xbf16>
    %65 = vector.extract_strided_slice %34 {offsets = [0, 16], sizes = [17, 16], strides = [1, 1]} : vector<17x64xf32> to vector<17x16xf32>
    %66 = arith.truncf %65 : vector<17x16xf32> to vector<17x16xbf16>
    %67 = vector.extract_strided_slice %39 {offsets = [0, 16], sizes = [17, 16], strides = [1, 1]} : vector<17x64xf32> to vector<17x16xf32>
    %68 = arith.truncf %67 : vector<17x16xf32> to vector<17x16xbf16>
    %cst_32 = arith.constant dense<0.000000e+00> : vector<17x17xf32>
    %69 = tpu.matmul %64, %66, %cst_32 {dimension_numbers = #tpu.dot_dimension_numbers<[1], [1], [0], [0], [0, 0, 1, 0], [], []>} : vector<17x16xbf16>, vector<17x16xbf16>, vector<17x17xf32> -> vector<17x17xf32>
    %cst_33 = arith.constant dense<0xFF800000> : vector<17xf32>
    %70 = vector.multi_reduction <maximumf>, %69, %cst_33 [1] : vector<17x17xf32> to vector<17xf32>
    %71 = vector.shape_cast %70 : vector<17xf32> to vector<17x1xf32>
    %72 = vector.broadcast %71 : vector<17x1xf32> to vector<17x17xf32>
    %73 = arith.subf %69, %72 : vector<17x17xf32>
    %74 = math.exp %73 : vector<17x17xf32>
    %cst_34 = arith.constant dense<0.000000e+00> : vector<17xf32>
    %75 = vector.multi_reduction <add>, %74, %cst_34 [1] : vector<17x17xf32> to vector<17xf32>
    %76 = vector.shape_cast %75 : vector<17xf32> to vector<17x1xf32>
    %77 = tpu.reciprocal %76 {approx = true} : vector<17x1xf32> -> vector<17x1xf32>
    %78 = vector.broadcast %77 : vector<17x1xf32> to vector<17x17xf32>
    %79 = arith.mulf %74, %78 : vector<17x17xf32>
    %80 = arith.truncf %79 : vector<17x17xf32> to vector<17x17xbf16>
    %cst_35 = arith.constant dense<0.000000e+00> : vector<17x16xf32>
    %81 = tpu.matmul %80, %68, %cst_35 {dimension_numbers = #tpu.dot_dimension_numbers<[1], [0], [0], [1], [0, 0, 1, 1], [], []>} : vector<17x17xbf16>, vector<17x16xbf16>, vector<17x16xf32> -> vector<17x16xf32>
    %82 = arith.truncf %81 : vector<17x16xf32> to vector<17x16xbf16>
    %83 = vector.extract_strided_slice %40 {offsets = [16, 0], sizes = [16, 64], strides = [1, 1]} : vector<64x64xbf16> to vector<16x64xbf16>
    %cst_36 = arith.constant dense<0.000000e+00> : vector<17x64xf32>
    %84 = tpu.matmul %82, %83, %cst_36 {dimension_numbers = #tpu.dot_dimension_numbers<[1], [0], [0], [1], [0, 0, 1, 1], [], []>} : vector<17x16xbf16>, vector<16x64xbf16>, vector<17x64xf32> -> vector<17x64xf32>
    %85 = arith.addf %62, %84 : vector<17x64xf32>
    %86 = vector.extract_strided_slice %29 {offsets = [0, 32], sizes = [17, 16], strides = [1, 1]} : vector<17x64xf32> to vector<17x16xf32>
    %87 = arith.truncf %86 : vector<17x16xf32> to vector<17x16xbf16>
    %88 = vector.extract_strided_slice %34 {offsets = [0, 32], sizes = [17, 16], strides = [1, 1]} : vector<17x64xf32> to vector<17x16xf32>
    %89 = arith.truncf %88 : vector<17x16xf32> to vector<17x16xbf16>
    %90 = vector.extract_strided_slice %39 {offsets = [0, 32], sizes = [17, 16], strides = [1, 1]} : vector<17x64xf32> to vector<17x16xf32>
    %91 = arith.truncf %90 : vector<17x16xf32> to vector<17x16xbf16>
    %cst_37 = arith.constant dense<0.000000e+00> : vector<17x17xf32>
    %92 = tpu.matmul %87, %89, %cst_37 {dimension_numbers = #tpu.dot_dimension_numbers<[1], [1], [0], [0], [0, 0, 1, 0], [], []>} : vector<17x16xbf16>, vector<17x16xbf16>, vector<17x17xf32> -> vector<17x17xf32>
    %cst_38 = arith.constant dense<0xFF800000> : vector<17xf32>
    %93 = vector.multi_reduction <maximumf>, %92, %cst_38 [1] : vector<17x17xf32> to vector<17xf32>
    %94 = vector.shape_cast %93 : vector<17xf32> to vector<17x1xf32>
    %95 = vector.broadcast %94 : vector<17x1xf32> to vector<17x17xf32>
    %96 = arith.subf %92, %95 : vector<17x17xf32>
    %97 = math.exp %96 : vector<17x17xf32>
    %cst_39 = arith.constant dense<0.000000e+00> : vector<17xf32>
    %98 = vector.multi_reduction <add>, %97, %cst_39 [1] : vector<17x17xf32> to vector<17xf32>
    %99 = vector.shape_cast %98 : vector<17xf32> to vector<17x1xf32>
    %100 = tpu.reciprocal %99 {approx = true} : vector<17x1xf32> -> vector<17x1xf32>
    %101 = vector.broadcast %100 : vector<17x1xf32> to vector<17x17xf32>
    %102 = arith.mulf %97, %101 : vector<17x17xf32>
    %103 = arith.truncf %102 : vector<17x17xf32> to vector<17x17xbf16>
    %cst_40 = arith.constant dense<0.000000e+00> : vector<17x16xf32>
    %104 = tpu.matmul %103, %91, %cst_40 {dimension_numbers = #tpu.dot_dimension_numbers<[1], [0], [0], [1], [0, 0, 1, 1], [], []>} : vector<17x17xbf16>, vector<17x16xbf16>, vector<17x16xf32> -> vector<17x16xf32>
    %105 = arith.truncf %104 : vector<17x16xf32> to vector<17x16xbf16>
    %106 = vector.extract_strided_slice %40 {offsets = [32, 0], sizes = [16, 64], strides = [1, 1]} : vector<64x64xbf16> to vector<16x64xbf16>
    %cst_41 = arith.constant dense<0.000000e+00> : vector<17x64xf32>
    %107 = tpu.matmul %105, %106, %cst_41 {dimension_numbers = #tpu.dot_dimension_numbers<[1], [0], [0], [1], [0, 0, 1, 1], [], []>} : vector<17x16xbf16>, vector<16x64xbf16>, vector<17x64xf32> -> vector<17x64xf32>
    %108 = arith.addf %85, %107 : vector<17x64xf32>
    %109 = vector.extract_strided_slice %29 {offsets = [0, 48], sizes = [17, 16], strides = [1, 1]} : vector<17x64xf32> to vector<17x16xf32>
    %110 = arith.truncf %109 : vector<17x16xf32> to vector<17x16xbf16>
    %111 = vector.extract_strided_slice %34 {offsets = [0, 48], sizes = [17, 16], strides = [1, 1]} : vector<17x64xf32> to vector<17x16xf32>
    %112 = arith.truncf %111 : vector<17x16xf32> to vector<17x16xbf16>
    %113 = vector.extract_strided_slice %39 {offsets = [0, 48], sizes = [17, 16], strides = [1, 1]} : vector<17x64xf32> to vector<17x16xf32>
    %114 = arith.truncf %113 : vector<17x16xf32> to vector<17x16xbf16>
    %cst_42 = arith.constant dense<0.000000e+00> : vector<17x17xf32>
    %115 = tpu.matmul %110, %112, %cst_42 {dimension_numbers = #tpu.dot_dimension_numbers<[1], [1], [0], [0], [0, 0, 1, 0], [], []>} : vector<17x16xbf16>, vector<17x16xbf16>, vector<17x17xf32> -> vector<17x17xf32>
    %cst_43 = arith.constant dense<0xFF800000> : vector<17xf32>
    %116 = vector.multi_reduction <maximumf>, %115, %cst_43 [1] : vector<17x17xf32> to vector<17xf32>
    %117 = vector.shape_cast %116 : vector<17xf32> to vector<17x1xf32>
    %118 = vector.broadcast %117 : vector<17x1xf32> to vector<17x17xf32>
    %119 = arith.subf %115, %118 : vector<17x17xf32>
    %120 = math.exp %119 : vector<17x17xf32>
    %cst_44 = arith.constant dense<0.000000e+00> : vector<17xf32>
    %121 = vector.multi_reduction <add>, %120, %cst_44 [1] : vector<17x17xf32> to vector<17xf32>
    %122 = vector.shape_cast %121 : vector<17xf32> to vector<17x1xf32>
    %123 = tpu.reciprocal %122 {approx = true} : vector<17x1xf32> -> vector<17x1xf32>
    %124 = vector.broadcast %123 : vector<17x1xf32> to vector<17x17xf32>
    %125 = arith.mulf %120, %124 : vector<17x17xf32>
    %126 = arith.truncf %125 : vector<17x17xf32> to vector<17x17xbf16>
    %cst_45 = arith.constant dense<0.000000e+00> : vector<17x16xf32>
    %127 = tpu.matmul %126, %114, %cst_45 {dimension_numbers = #tpu.dot_dimension_numbers<[1], [0], [0], [1], [0, 0, 1, 1], [], []>} : vector<17x17xbf16>, vector<17x16xbf16>, vector<17x16xf32> -> vector<17x16xf32>
    %128 = arith.truncf %127 : vector<17x16xf32> to vector<17x16xbf16>
    %129 = vector.extract_strided_slice %40 {offsets = [48, 0], sizes = [16, 64], strides = [1, 1]} : vector<64x64xbf16> to vector<16x64xbf16>
    %cst_46 = arith.constant dense<0.000000e+00> : vector<17x64xf32>
    %130 = tpu.matmul %128, %129, %cst_46 {dimension_numbers = #tpu.dot_dimension_numbers<[1], [0], [0], [1], [0, 0, 1, 1], [], []>} : vector<17x16xbf16>, vector<16x64xbf16>, vector<17x64xf32> -> vector<17x64xf32>
    %131 = arith.addf %108, %130 : vector<17x64xf32>
    %c0_47 = arith.constant 0 : index
    %c0_48 = arith.constant 0 : index
    %132 = vector.load %arg11[%c0_47, %c0_48] : memref<1x64xf32, #tpu.memory_space<vmem>>, vector<1x64xf32>
    %133 = vector.broadcast %132 : vector<1x64xf32> to vector<17x64xf32>
    %134 = arith.addf %131, %133 : vector<17x64xf32>
    %cst_49 = arith.constant 2.000000e+00 : f32
    %135 = vector.broadcast %cst_49 : f32 to vector<17x64xf32>
    %136 = arith.mulf %135, %134 : vector<17x64xf32>
    %c0_50 = arith.constant 0 : index
    %c0_51 = arith.constant 0 : index
    %137 = vector.load %arg12[%c0_50, %c0_51] : memref<1x64xf32, #tpu.memory_space<vmem>>, vector<1x64xf32>
    %c0_52 = arith.constant 0 : index
    %c0_53 = arith.constant 0 : index
    %138 = vector.load %arg13[%c0_52, %c0_53] : memref<1x64xf32, #tpu.memory_space<vmem>>, vector<1x64xf32>
    %cst_54 = arith.constant dense<0.000000e+00> : vector<17xf32>
    %139 = vector.multi_reduction <add>, %136, %cst_54 [1] : vector<17x64xf32> to vector<17xf32>
    %140 = vector.shape_cast %139 : vector<17xf32> to vector<17x1xf32>
    %cst_55 = arith.constant 6.400000e+01 : f32
    %141 = vector.broadcast %cst_55 : f32 to vector<17x1xf32>
    %142 = arith.divf %140, %141 : vector<17x1xf32>
    %143 = vector.broadcast %142 : vector<17x1xf32> to vector<17x64xf32>
    %144 = arith.subf %136, %143 : vector<17x64xf32>
    %145 = arith.mulf %144, %144 : vector<17x64xf32>
    %cst_56 = arith.constant dense<0.000000e+00> : vector<17xf32>
    %146 = vector.multi_reduction <add>, %145, %cst_56 [1] : vector<17x64xf32> to vector<17xf32>
    %147 = vector.shape_cast %146 : vector<17xf32> to vector<17x1xf32>
    %cst_57 = arith.constant 6.400000e+01 : f32
    %148 = vector.broadcast %cst_57 : f32 to vector<17x1xf32>
    %149 = arith.divf %147, %148 : vector<17x1xf32>
    %cst_58 = arith.constant 9.99999974E-6 : f32
    %150 = vector.broadcast %cst_58 : f32 to vector<17x1xf32>
    %151 = arith.addf %149, %150 : vector<17x1xf32>
    %152 = math.rsqrt %151 : vector<17x1xf32>
    %153 = vector.broadcast %152 : vector<17x1xf32> to vector<17x64xf32>
    %154 = arith.mulf %144, %153 : vector<17x64xf32>
    %155 = vector.broadcast %137 : vector<1x64xf32> to vector<17x64xf32>
    %156 = arith.mulf %154, %155 : vector<17x64xf32>
    %157 = vector.broadcast %138 : vector<1x64xf32> to vector<17x64xf32>
    %158 = arith.addf %156, %157 : vector<17x64xf32>
    %159 = arith.truncf %158 : vector<17x64xf32> to vector<17x64xbf16>
    %c0_59 = arith.constant 0 : index
    %c0_60 = arith.constant 0 : index
    %160 = vector.load %arg14[%c0_59, %c0_60] : memref<64x256xbf16, #tpu.memory_space<vmem>>, vector<64x256xbf16>
    %cst_61 = arith.constant dense<0.000000e+00> : vector<17x256xf32>
    %161 = tpu.matmul %159, %160, %cst_61 {dimension_numbers = #tpu.dot_dimension_numbers<[1], [0], [0], [1], [0, 0, 1, 1], [], []>} : vector<17x64xbf16>, vector<64x256xbf16>, vector<17x256xf32> -> vector<17x256xf32>
    %c0_62 = arith.constant 0 : index
    %c0_63 = arith.constant 0 : index
    %162 = vector.load %arg15[%c0_62, %c0_63] : memref<1x256xf32, #tpu.memory_space<vmem>>, vector<1x256xf32>
    %163 = vector.broadcast %162 : vector<1x256xf32> to vector<17x256xf32>
    %164 = arith.addf %161, %163 : vector<17x256xf32>
    %cst_64 = arith.constant 5.000000e-01 : f32
    %165 = vector.broadcast %cst_64 : f32 to vector<17x256xf32>
    %166 = arith.mulf %165, %164 : vector<17x256xf32>
    %cst_65 = arith.constant 0.707106769 : f32
    %167 = vector.broadcast %cst_65 : f32 to vector<17x256xf32>
    %168 = arith.mulf %164, %167 : vector<17x256xf32>
    %169 = math.erf %168 : vector<17x256xf32>
    %cst_66 = arith.constant 1.000000e+00 : f32
    %170 = vector.broadcast %cst_66 : f32 to vector<17x256xf32>
    %171 = arith.addf %170, %169 : vector<17x256xf32>
    %172 = arith.mulf %166, %171 : vector<17x256xf32>
    %c0_67 = arith.constant 0 : index
    %c0_68 = arith.constant 0 : index
    %173 = vector.load %arg16[%c0_67, %c0_68] : memref<1x256xf32, #tpu.memory_space<vmem>>, vector<1x256xf32>
    %c0_69 = arith.constant 0 : index
    %c0_70 = arith.constant 0 : index
    %174 = vector.load %arg17[%c0_69, %c0_70] : memref<1x256xf32, #tpu.memory_space<vmem>>, vector<1x256xf32>
    %cst_71 = arith.constant dense<0.000000e+00> : vector<17xf32>
    %175 = vector.multi_reduction <add>, %172, %cst_71 [1] : vector<17x256xf32> to vector<17xf32>
    %176 = vector.shape_cast %175 : vector<17xf32> to vector<17x1xf32>
    %cst_72 = arith.constant 2.560000e+02 : f32
    %177 = vector.broadcast %cst_72 : f32 to vector<17x1xf32>
    %178 = arith.divf %176, %177 : vector<17x1xf32>
    %179 = vector.broadcast %178 : vector<17x1xf32> to vector<17x256xf32>
    %180 = arith.subf %172, %179 : vector<17x256xf32>
    %181 = arith.mulf %180, %180 : vector<17x256xf32>
    %cst_73 = arith.constant dense<0.000000e+00> : vector<17xf32>
    %182 = vector.multi_reduction <add>, %181, %cst_73 [1] : vector<17x256xf32> to vector<17xf32>
    %183 = vector.shape_cast %182 : vector<17xf32> to vector<17x1xf32>
    %cst_74 = arith.constant 2.560000e+02 : f32
    %184 = vector.broadcast %cst_74 : f32 to vector<17x1xf32>
    %185 = arith.divf %183, %184 : vector<17x1xf32>
    %cst_75 = arith.constant 9.99999974E-6 : f32
    %186 = vector.broadcast %cst_75 : f32 to vector<17x1xf32>
    %187 = arith.addf %185, %186 : vector<17x1xf32>
    %188 = math.rsqrt %187 : vector<17x1xf32>
    %189 = vector.broadcast %188 : vector<17x1xf32> to vector<17x256xf32>
    %190 = arith.mulf %180, %189 : vector<17x256xf32>
    %191 = vector.broadcast %173 : vector<1x256xf32> to vector<17x256xf32>
    %192 = arith.mulf %190, %191 : vector<17x256xf32>
    %193 = vector.broadcast %174 : vector<1x256xf32> to vector<17x256xf32>
    %194 = arith.addf %192, %193 : vector<17x256xf32>
    %195 = arith.truncf %194 : vector<17x256xf32> to vector<17x256xbf16>
    %c0_76 = arith.constant 0 : index
    %c0_77 = arith.constant 0 : index
    %196 = vector.load %arg18[%c0_76, %c0_77] : memref<256x64xbf16, #tpu.memory_space<vmem>>, vector<256x64xbf16>
    %cst_78 = arith.constant dense<0.000000e+00> : vector<17x64xf32>
    %197 = tpu.matmul %195, %196, %cst_78 {dimension_numbers = #tpu.dot_dimension_numbers<[1], [0], [0], [1], [0, 0, 1, 1], [], []>} : vector<17x256xbf16>, vector<256x64xbf16>, vector<17x64xf32> -> vector<17x64xf32>
    %c0_79 = arith.constant 0 : index
    %c0_80 = arith.constant 0 : index
    %198 = vector.load %arg19[%c0_79, %c0_80] : memref<1x64xf32, #tpu.memory_space<vmem>>, vector<1x64xf32>
    %199 = vector.broadcast %198 : vector<1x64xf32> to vector<17x64xf32>
    %200 = arith.addf %197, %199 : vector<17x64xf32>
    %cst_81 = arith.constant 2.000000e+00 : f32
    %201 = vector.broadcast %cst_81 : f32 to vector<17x64xf32>
    %202 = arith.mulf %201, %200 : vector<17x64xf32>
    %c0_82 = arith.constant 0 : index
    %c0_83 = arith.constant 0 : index
    %c0_84 = arith.constant 0 : index
    %203 = vector.load %arg20[%c0_82, %c0_83, %c0_84] : memref<1x17x64xf32, #tpu.memory_space<vmem>>, vector<1x17x64xf32>
    %204 = vector.shape_cast %203 : vector<1x17x64xf32> to vector<17x64xf32>
    %205 = vector.shape_cast %202 : vector<17x64xf32> to vector<1x17x64xf32>
    tpu.vector_store %arg20[%c0_82, %c0_83, %c0_84], %205 {strides = array<i32>} : memref<1x17x64xf32, #tpu.memory_space<vmem>>, vector<1x17x64xf32>,
    return
  }
  func.func @transform_0(%arg0: i32) -> (i32, i32, i32) {
    %c0_i32 = arith.constant 0 : i32
    %c0_i32_0 = arith.constant 0 : i32
    %c0_i32_1 = arith.constant 0 : i32
    return %arg0, %c0_i32, %c0_i32_0 : i32, i32, i32
  }
  func.func @transform_1(%arg0: i32) -> (i32, i32) {
    %c0_i32 = arith.constant 0 : i32
    %c0_i32_0 = arith.constant 0 : i32
    %c0_i32_1 = arith.constant 0 : i32
    return %c0_i32, %c0_i32_0 : i32, i32
  }
  func.func @transform_2(%arg0: i32) -> (i32, i32) {
    %c0_i32 = arith.constant 0 : i32
    %c0_i32_0 = arith.constant 0 : i32
    %c0_i32_1 = arith.constant 0 : i32
    return %c0_i32, %c0_i32_0 : i32, i32
  }
  func.func @transform_3(%arg0: i32) -> (i32, i32) {
    %c0_i32 = arith.constant 0 : i32
    %c0_i32_0 = arith.constant 0 : i32
    %c0_i32_1 = arith.constant 0 : i32
    return %c0_i32, %c0_i32_0 : i32, i32
  }
  func.func @transform_4(%arg0: i32) -> (i32, i32) {
    %c0_i32 = arith.constant 0 : i32
    %c0_i32_0 = arith.constant 0 : i32
    %c0_i32_1 = arith.constant 0 : i32
    return %c0_i32, %c0_i32_0 : i32, i32
  }
  func.func @transform_5(%arg0: i32) -> (i32, i32) {
    %c0_i32 = arith.constant 0 : i32
    %c0_i32_0 = arith.constant 0 : i32
    %c0_i32_1 = arith.constant 0 : i32
    return %c0_i32, %c0_i32_0 : i32, i32
  }
  func.func @transform_6(%arg0: i32) -> (i32, i32) {
    %c0_i32 = arith.constant 0 : i32
    %c0_i32_0 = arith.constant 0 : i32
    %c0_i32_1 = arith.constant 0 : i32
    return %c0_i32, %c0_i32_0 : i32, i32
  }
  func.func @transform_7(%arg0: i32) -> (i32, i32) {
    %c0_i32 = arith.constant 0 : i32
    %c0_i32_0 = arith.constant 0 : i32
    %c0_i32_1 = arith.constant 0 : i32
    return %c0_i32, %c0_i32_0 : i32, i32
  }
  func.func @transform_8(%arg0: i32) -> (i32, i32) {
    %c0_i32 = arith.constant 0 : i32
    %c0_i32_0 = arith.constant 0 : i32
    %c0_i32_1 = arith.constant 0 : i32
    return %c0_i32, %c0_i32_0 : i32, i32
  }
  func.func @transform_9(%arg0: i32) -> (i32, i32) {
    %c0_i32 = arith.constant 0 : i32
    %c0_i32_0 = arith.constant 0 : i32
    %c0_i32_1 = arith.constant 0 : i32
    return %c0_i32, %c0_i32_0 : i32, i32
  }
  func.func @transform_10(%arg0: i32) -> (i32, i32) {
    %c0_i32 = arith.constant 0 : i32
    %c0_i32_0 = arith.constant 0 : i32
    %c0_i32_1 = arith.constant 0 : i32
    return %c0_i32, %c0_i32_0 : i32, i32
  }
  func.func @transform_11(%arg0: i32) -> (i32, i32) {
    %c0_i32 = arith.constant 0 : i32
    %c0_i32_0 = arith.constant 0 : i32
    %c0_i32_1 = arith.constant 0 : i32
    return %c0_i32, %c0_i32_0 : i32, i32
  }
  func.func @transform_12(%arg0: i32) -> (i32, i32) {
    %c0_i32 = arith.constant 0 : i32
    %c0_i32_0 = arith.constant 0 : i32
    %c0_i32_1 = arith.constant 0 : i32
    return %c0_i32, %c0_i32_0 : i32, i32
  }
  func.func @transform_13(%arg0: i32) -> (i32, i32) {
    %c0_i32 = arith.constant 0 : i32
    %c0_i32_0 = arith.constant 0 : i32
    %c0_i32_1 = arith.constant 0 : i32
    return %c0_i32, %c0_i32_0 : i32, i32
  }
  func.func @transform_14(%arg0: i32) -> (i32, i32) {
    %c0_i32 = arith.constant 0 : i32
    %c0_i32_0 = arith.constant 0 : i32
    %c0_i32_1 = arith.constant 0 : i32
    return %c0_i32, %c0_i32_0 : i32, i32
  }
  func.func @transform_15(%arg0: i32) -> (i32, i32) {
    %c0_i32 = arith.constant 0 : i32
    %c0_i32_0 = arith.constant 0 : i32
    %c0_i32_1 = arith.constant 0 : i32
    return %c0_i32, %c0_i32_0 : i32, i32
  }
  func.func @transform_16(%arg0: i32) -> (i32, i32) {
    %c0_i32 = arith.constant 0 : i32
    %c0_i32_0 = arith.constant 0 : i32
    %c0_i32_1 = arith.constant 0 : i32
    return %c0_i32, %c0_i32_0 : i32, i32
  }
  func.func @transform_17(%arg0: i32) -> (i32, i32) {
    %c0_i32 = arith.constant 0 : i32
    %c0_i32_0 = arith.constant 0 : i32
    %c0_i32_1 = arith.constant 0 : i32
    return %c0_i32, %c0_i32_0 : i32, i32
  }
  func.func @transform_18(%arg0: i32) -> (i32, i32) {
    %c0_i32 = arith.constant 0 : i32
    %c0_i32_0 = arith.constant 0 : i32
    %c0_i32_1 = arith.constant 0 : i32
    return %c0_i32, %c0_i32_0 : i32, i32
  }
  func.func @transform_19(%arg0: i32) -> (i32, i32, i32) {
    %c0_i32 = arith.constant 0 : i32
    %c0_i32_0 = arith.constant 0 : i32
    %c0_i32_1 = arith.constant 0 : i32
    return %arg0, %c0_i32, %c0_i32_0 : i32, i32, i32
  }
}

</mosaic_0001>

<llo_original>
// kernel: tpu_custom_call.1
$region0: #{tpu_custom_call.1}
  #allocation0 [shape = 'u32[]', space=smem, size = 0x4, offset = 0x4, fixed_abs, tag = 'smem constant byte address 0x4 - core index']
  #allocation1 [shape = 'u32[144,128]{1,0:T(1,128)}', space=vmem, size = 0x12000, scoped, tag = 'internal scratch']
  %s0 = inlined_call_operand.hbm [shape: f32[2,17,64], index: 0, kind: input, shape index: {}]
  %s1 = inlined_call_operand.hbm [shape: f32[1,64], index: 1, kind: input, shape index: {}]
  %s2 = inlined_call_operand.hbm [shape: f32[1,64], index: 2, kind: input, shape index: {}]
  %s3 = inlined_call_operand.hbm [shape: bf16[64,64], index: 3, kind: input, shape index: {}]
  %s4 = inlined_call_operand.hbm [shape: f32[1,64], index: 4, kind: input, shape index: {}]
  %s5 = inlined_call_operand.hbm [shape: bf16[64,64], index: 5, kind: input, shape index: {}]
  %s6 = inlined_call_operand.hbm [shape: f32[1,64], index: 6, kind: input, shape index: {}]
  %s7 = inlined_call_operand.hbm [shape: bf16[64,64], index: 7, kind: input, shape index: {}]
  %s8 = inlined_call_operand.hbm [shape: f32[1,64], index: 8, kind: input, shape index: {}]
  %s9 = inlined_call_operand.hbm [shape: bf16[64,64], index: 9, kind: input, shape index: {}]
  %s10 = inlined_call_operand.hbm [shape: f32[1,64], index: 10, kind: input, shape index: {}]
  %s11 = inlined_call_operand.hbm [shape: f32[1,64], index: 11, kind: input, shape index: {}]
  %s12 = inlined_call_operand.hbm [shape: f32[1,64], index: 12, kind: input, shape index: {}]
  %s13 = inlined_call_operand.hbm [shape: bf16[64,256], index: 13, kind: input, shape index: {}]
  %s14 = inlined_call_operand.hbm [shape: f32[1,256], index: 14, kind: input, shape index: {}]
  %s15 = inlined_call_operand.hbm [shape: f32[1,256], index: 15, kind: input, shape index: {}]
  %s16 = inlined_call_operand.hbm [shape: f32[1,256], index: 16, kind: input, shape index: {}]
  %s17 = inlined_call_operand.hbm [shape: bf16[256,64], index: 17, kind: input, shape index: {}]
  %s18 = inlined_call_operand.hbm [shape: f32[1,64], index: 18, kind: input, shape index: {}]
  %s19 = inlined_call_operand.hbm [shape: f32[2,17,64], index: 19, kind: output, shape index: {}]
  %s20 = sld [smem:[#allocation0]]
  $region185: #{tpu_custom_call.1} parent=0
    _
  %s22 = ssub.s32 1, %s20
  %s23 = scalar_select 0, %s22, %s20
  $region1: #{tpu_custom_call.1} parent=0
    #allocation2 [shape = 'u8[24576]{0}', space=vmem, size = 0x6000, scoped, tag = 'input window, operand 0']
    #allocation3 [shape = 's32[2]{0}', space=sflag, size = 0x8, scoped, tag = 'scoped memory for tpu_custom_call.1']
    #allocation4 [shape = 's32[2]{0}', space=sflag, size = 0x8, scoped, tag = 'scoped memory for tpu_custom_call.1']
    #allocation5 [shape = 'u8[512]{0}', space=vmem, size = 0x400, scoped, tag = 'input window, operand 1, single buffered']
    #allocation6 [shape = 's32[1]{0}', space=sflag, size = 0x4, scoped, tag = 'scoped memory for tpu_custom_call.1']
    #allocation7 [shape = 'u8[512]{0}', space=vmem, size = 0x400, scoped, tag = 'input window, operand 2, single buffered']
    #allocation8 [shape = 'u8[16384]{0}', space=vmem, size = 0x4000, scoped, tag = 'input window, operand 3, single buffered']
    #allocation9 [shape = 's32[1]{0}', space=sflag, size = 0x4, scoped, tag = 'scoped memory for tpu_custom_call.1']
    #allocation10 [shape = 'u8[512]{0}', space=vmem, size = 0x400, scoped, tag = 'input window, operand 4, single buffered']
    #allocation11 [shape = 'u8[16384]{0}', space=vmem, size = 0x4000, scoped, tag = 'input window, operand 5, single buffered']
    #allocation12 [shape = 's32[1]{0}', space=sflag, size = 0x4, scoped, tag = 'scoped memory for tpu_custom_call.1']
    #allocation13 [shape = 'u8[512]{0}', space=vmem, size = 0x400, scoped, tag = 'input window, operand 6, single buffered']
    #allocation14 [shape = 'u8[16384]{0}', space=vmem, size = 0x4000, scoped, tag = 'input window, operand 7, single buffered']
    #allocation15 [shape = 's32[1]{0}', space=sflag, size = 0x4, scoped, tag = 'scoped memory for tpu_custom_call.1']
    #allocation16 [shape = 'u8[512]{0}', space=vmem, size = 0x400, scoped, tag = 'input window, operand 8, single buffered']
    #allocation17 [shape = 'u8[16384]{0}', space=vmem, size = 0x4000, scoped, tag = 'input window, operand 9, single buffered']
    #allocation18 [shape = 's32[1]{0}', space=sflag, size = 0x4, scoped, tag = 'scoped memory for tpu_custom_call.1']
    #allocation19 [shape = 'u8[512]{0}', space=vmem, size = 0x400, scoped, tag = 'input window, operand 10, single buffered']
    #allocation20 [shape = 'u8[512]{0}', space=vmem, size = 0x400, scoped, tag = 'input window, operand 11, single buffered']
    #allocation21 [shape = 's32[1]{0}', space=sflag, size = 0x4, scoped, tag = 'scoped memory for tpu_custom_call.1']
    #allocation22 [shape = 'u8[512]{0}', space=vmem, size = 0x400, scoped, tag = 'input window, operand 12, single buffered']
    #allocation23 [shape = 'u8[32768]{0}', space=vmem, size = 0x8000, scoped, tag = 'input window, operand 13, single buffered']
    #allocation24 [shape = 's32[1]{0}', space=sflag, size = 0x4, scoped, tag = 'scoped memory for tpu_custom_call.1']
    #allocation25 [shape = 'u8[1024]{0}', space=vmem, size = 0x400, scoped, tag = 'input window, operand 14, single buffered']
    #allocation26 [shape = 'u8[1024]{0}', space=vmem, size = 0x400, scoped, tag = 'input window, operand 15, single buffered']
    #allocation27 [shape = 's32[1]{0}', space=sflag, size = 0x4, scoped, tag = 'scoped memory for tpu_custom_call.1']
    #allocation28 [shape = 'u8[1024]{0}', space=vmem, size = 0x400, scoped, tag = 'input window, operand 16, single buffered']
    #allocation29 [shape = 'u8[65536]{0}', space=vmem, size = 0x10000, scoped, tag = 'input window, operand 17, single buffered']
    #allocation30 [shape = 's32[1]{0}', space=sflag, size = 0x4, scoped, tag = 'scoped memory for tpu_custom_call.1']
    #allocation31 [shape = 'u8[512]{0}', space=vmem, size = 0x400, scoped, tag = 'input window, operand 18, single buffered']
    #allocation32 [shape = 'u8[24576]{0}', space=vmem, size = 0x6000, scoped, tag = 'output window, operand 0']
    %24 = vsyncpa [#allocation3], 0
    %s25 = scalar_lea.sflag [#allocation3], 1
    %26 = vsyncpa %s25, 0
    %27 = vsyncpa [#allocation6], 0
    %28 = vsyncpa [#allocation9], 0
    %29 = vsyncpa [#allocation12], 0
    %30 = vsyncpa [#allocation15], 0
    %31 = vsyncpa [#allocation18], 0
    %32 = vsyncpa [#allocation21], 0
    %33 = vsyncpa [#allocation24], 0
    %34 = vsyncpa [#allocation27], 0
    %35 = vsyncpa [#allocation30], 0
    %36 = vsyncpa [#allocation4], 0
    %s37 = scalar_lea.sflag [#allocation4], 1
    %38 = vsyncpa %s37, 0
    loop: start=0, step=1, limit=4
    $region2: #{tpu_custom_call.1} parent=1 // loop_pre_header
      _
    $region3: #{tpu_custom_call.1} parent=1 // loop_header
      %s40 = sphi 0, %s44
      %p41 = scmp.ge.s32.totalorder %s40, 4
      %s50 = sphi 0, %s52
      %s53 = sphi 0, %s50
      %s54 = sphi 0, %s53
      %s70 = sphi 0, %s54
      %s74 = sphi 0, %s74
      %s76 = sphi 0, %s74
      %s77 = sphi 0, %s76
      %s91 = sphi 0, %s77
      %s95 = sphi 0, %s95
      %s97 = sphi 0, %s95
      %s98 = sphi 0, %s97
      %s112 = sphi 0, %s98
      %s116 = sphi 0, %s116
      %s118 = sphi 0, %s116
      %s119 = sphi 0, %s118
      %s133 = sphi 0, %s119
      %s137 = sphi 0, %s137
      %s139 = sphi 0, %s137
      %s140 = sphi 0, %s139
      %s154 = sphi 0, %s140
      %s158 = sphi 0, %s158
      %s160 = sphi 0, %s158
      %s161 = sphi 0, %s160
      %s175 = sphi 0, %s161
      %s179 = sphi 0, %s179
      %s181 = sphi 0, %s179
      %s182 = sphi 0, %s181
      %s196 = sphi 0, %s182
      %s200 = sphi 0, %s200
      %s202 = sphi 0, %s200
      %s203 = sphi 0, %s202
      %s217 = sphi 0, %s203
      %s221 = sphi 0, %s221
      %s223 = sphi 0, %s221
      %s224 = sphi 0, %s223
      %s238 = sphi 0, %s224
      %s242 = sphi 0, %s242
      %s244 = sphi 0, %s242
      %s245 = sphi 0, %s244
      %s259 = sphi 0, %s245
      %s263 = sphi 0, %s263
      %s265 = sphi 0, %s263
      %s266 = sphi 0, %s265
      %s280 = sphi 0, %s266
      %s284 = sphi 0, %s284
      %s286 = sphi 0, %s284
      %s287 = sphi 0, %s286
      %s301 = sphi 0, %s287
      %s305 = sphi 0, %s305
      %s307 = sphi 0, %s305
      %s308 = sphi 0, %s307
      %s322 = sphi 0, %s308
      %s326 = sphi 0, %s326
      %s328 = sphi 0, %s326
      %s329 = sphi 0, %s328
      %s343 = sphi 0, %s329
      %s347 = sphi 0, %s347
      %s349 = sphi 0, %s347
      %s350 = sphi 0, %s349
      %s364 = sphi 0, %s350
      %s368 = sphi 0, %s368
      %s370 = sphi 0, %s368
      %s371 = sphi 0, %s370
      %s385 = sphi 0, %s371
      %s389 = sphi 0, %s389
      %s391 = sphi 0, %s389
      %s392 = sphi 0, %s391
      %s406 = sphi 0, %s392
      %s410 = sphi 0, %s410
      %s412 = sphi 0, %s410
      %s413 = sphi 0, %s412
      %s427 = sphi 0, %s413
      %s431 = sphi 0, %s431
      %s433 = sphi 0, %s431
      %s434 = sphi 0, %s433
      %s448 = sphi 0, %s434
      %s454 = sphi 0, %s456
      %s457 = sphi 0, %s454
      %s458 = sphi 0, %s457
      %s474 = sphi 0, %s458
    $region4: #{tpu_custom_call.1} parent=1 // loop_header_branch
      %43 = sbr.rel (%p41) target = $region8
    $region5: #{tpu_custom_call.1} parent=1 // loop_body
      %s45 = ssub.s32 %s40, 1
      %s46 = ssub.s32 %s40, 2
      %s47 = sadd.s32 %s40, 1
      %s48 = ssub.s32 %s40, %s47
      %p49 = scmp.eq.s32.totalorder %s48, 0
      %s51 = sadd.s32 %s50, 1
      %s52 = scalar_select %p49, %s50, %s51
      %p55 = pneg %p49
      %p56 = scmp.eq.s32.totalorder %s40, 1
      %p57 = por %p55, %p56
      %p58 = scmp.ne.s32.totalorder %s50, %s53
      %p59 = scmp.eq.s32.totalorder %s40, 0
      %p60 = por %p58, %p59
      %p61 = scmp.ne.s32.totalorder %s50, %s53
      %p62 = scmp.eq.s32.totalorder %s45, 1
      %p63 = por %p61, %p62
      %p64 = scmp.ne.s32.totalorder %s53, %s54
      %p65 = scmp.eq.s32.totalorder %s45, 0
      %p66 = por %p64, %p65
      %p67 = scmp.ne.s32.totalorder %s53, %s54
      %p68 = scmp.eq.s32.totalorder %s46, 1
      %p69 = por %p67, %p68
      %p71 = scmp.ne.s32.totalorder %s54, %s70
      %p72 = scmp.eq.s32.totalorder %s46, 0
      %p73 = por %p71, %p72
      %s75 = sadd.s32 %s74, 1
      %p78 = scmp.eq.s32.totalorder %s40, 1
      %p79 = scmp.ne.s32.totalorder %s74, %s76
      %p80 = scmp.eq.s32.totalorder %s40, 0
      %p81 = por %p79, %p80
      %p82 = scmp.ne.s32.totalorder %s74, %s76
      %p83 = scmp.eq.s32.totalorder %s45, 1
      %p84 = por %p82, %p83
      %p85 = scmp.ne.s32.totalorder %s76, %s77
      %p86 = scmp.eq.s32.totalorder %s45, 0
      %p87 = por %p85, %p86
      %p88 = scmp.ne.s32.totalorder %s76, %s77
      %p89 = scmp.eq.s32.totalorder %s46, 1
      %p90 = por %p88, %p89
      %p92 = scmp.ne.s32.totalorder %s77, %s91
      %p93 = scmp.eq.s32.totalorder %s46, 0
      %p94 = por %p92, %p93
      %s96 = sadd.s32 %s95, 1
      %p99 = scmp.eq.s32.totalorder %s40, 1
      %p100 = scmp.ne.s32.totalorder %s95, %s97
      %p101 = scmp.eq.s32.totalorder %s40, 0
      %p102 = por %p100, %p101
      %p103 = scmp.ne.s32.totalorder %s95, %s97
      %p104 = scmp.eq.s32.totalorder %s45, 1
      %p105 = por %p103, %p104
      %p106 = scmp.ne.s32.totalorder %s97, %s98
      %p107 = scmp.eq.s32.totalorder %s45, 0
      %p108 = por %p106, %p107
      %p109 = scmp.ne.s32.totalorder %s97, %s98
      %p110 = scmp.eq.s32.totalorder %s46, 1
      %p111 = por %p109, %p110
      %p113 = scmp.ne.s32.totalorder %s98, %s112
      %p114 = scmp.eq.s32.totalorder %s46, 0
      %p115 = por %p113, %p114
      %s117 = sadd.s32 %s116, 1
      %p120 = scmp.eq.s32.totalorder %s40, 1
      %p121 = scmp.ne.s32.totalorder %s116, %s118
      %p122 = scmp.eq.s32.totalorder %s40, 0
      %p123 = por %p121, %p122
      %p124 = scmp.ne.s32.totalorder %s116, %s118
      %p125 = scmp.eq.s32.totalorder %s45, 1
      %p126 = por %p124, %p125
      %p127 = scmp.ne.s32.totalorder %s118, %s119
      %p128 = scmp.eq.s32.totalorder %s45, 0
      %p129 = por %p127, %p128
      %p130 = scmp.ne.s32.totalorder %s118, %s119
      %p131 = scmp.eq.s32.totalorder %s46, 1
      %p132 = por %p130, %p131
      %p134 = scmp.ne.s32.totalorder %s119, %s133
      %p135 = scmp.eq.s32.totalorder %s46, 0
      %p136 = por %p134, %p135
      %s138 = sadd.s32 %s137, 1
      %p141 = scmp.eq.s32.totalorder %s40, 1
      %p142 = scmp.ne.s32.totalorder %s137, %s139
      %p143 = scmp.eq.s32.totalorder %s40, 0
      %p144 = por %p142, %p143
      %p145 = scmp.ne.s32.totalorder %s137, %s139
      %p146 = scmp.eq.s32.totalorder %s45, 1
      %p147 = por %p145, %p146
      %p148 = scmp.ne.s32.totalorder %s139, %s140
      %p149 = scmp.eq.s32.totalorder %s45, 0
      %p150 = por %p148, %p149
      %p151 = scmp.ne.s32.totalorder %s139, %s140
      %p152 = scmp.eq.s32.totalorder %s46, 1
      %p153 = por %p151, %p152
      %p155 = scmp.ne.s32.totalorder %s140, %s154
      %p156 = scmp.eq.s32.totalorder %s46, 0
      %p157 = por %p155, %p156
      %s159 = sadd.s32 %s158, 1
      %p162 = scmp.eq.s32.totalorder %s40, 1
      %p163 = scmp.ne.s32.totalorder %s158, %s160
      %p164 = scmp.eq.s32.totalorder %s40, 0
      %p165 = por %p163, %p164
      %p166 = scmp.ne.s32.totalorder %s158, %s160
      %p167 = scmp.eq.s32.totalorder %s45, 1
      %p168 = por %p166, %p167
      %p169 = scmp.ne.s32.totalorder %s160, %s161
      %p170 = scmp.eq.s32.totalorder %s45, 0
      %p171 = por %p169, %p170
      %p172 = scmp.ne.s32.totalorder %s160, %s161
      %p173 = scmp.eq.s32.totalorder %s46, 1
      %p174 = por %p172, %p173
      %p176 = scmp.ne.s32.totalorder %s161, %s175
      %p177 = scmp.eq.s32.totalorder %s46, 0
      %p178 = por %p176, %p177
      %s180 = sadd.s32 %s179, 1
      %p183 = scmp.eq.s32.totalorder %s40, 1
      %p184 = scmp.ne.s32.totalorder %s179, %s181
      %p185 = scmp.eq.s32.totalorder %s40, 0
      %p186 = por %p184, %p185
      %p187 = scmp.ne.s32.totalorder %s179, %s181
      %p188 = scmp.eq.s32.totalorder %s45, 1
      %p189 = por %p187, %p188
      %p190 = scmp.ne.s32.totalorder %s181, %s182
      %p191 = scmp.eq.s32.totalorder %s45, 0
      %p192 = por %p190, %p191
      %p193 = scmp.ne.s32.totalorder %s181, %s182
      %p194 = scmp.eq.s32.totalorder %s46, 1
      %p195 = por %p193, %p194
      %p197 = scmp.ne.s32.totalorder %s182, %s196
      %p198 = scmp.eq.s32.totalorder %s46, 0
      %p199 = por %p197, %p198
      %s201 = sadd.s32 %s200, 1
      %p204 = scmp.eq.s32.totalorder %s40, 1
      %p205 = scmp.ne.s32.totalorder %s200, %s202
      %p206 = scmp.eq.s32.totalorder %s40, 0
      %p207 = por %p205, %p206
      %p208 = scmp.ne.s32.totalorder %s200, %s202
      %p209 = scmp.eq.s32.totalorder %s45, 1
      %p210 = por %p208, %p209
      %p211 = scmp.ne.s32.totalorder %s202, %s203
      %p212 = scmp.eq.s32.totalorder %s45, 0
      %p213 = por %p211, %p212
      %p214 = scmp.ne.s32.totalorder %s202, %s203
      %p215 = scmp.eq.s32.totalorder %s46, 1
      %p216 = por %p214, %p215
      %p218 = scmp.ne.s32.totalorder %s203, %s217
      %p219 = scmp.eq.s32.totalorder %s46, 0
      %p220 = por %p218, %p219
      %s222 = sadd.s32 %s221, 1
      %p225 = scmp.eq.s32.totalorder %s40, 1
      %p226 = scmp.ne.s32.totalorder %s221, %s223
      %p227 = scmp.eq.s32.totalorder %s40, 0
      %p228 = por %p226, %p227
      %p229 = scmp.ne.s32.totalorder %s221, %s223
      %p230 = scmp.eq.s32.totalorder %s45, 1
      %p231 = por %p229, %p230
      %p232 = scmp.ne.s32.totalorder %s223, %s224
      %p233 = scmp.eq.s32.totalorder %s45, 0
      %p234 = por %p232, %p233
      %p235 = scmp.ne.s32.totalorder %s223, %s224
      %p236 = scmp.eq.s32.totalorder %s46, 1
      %p237 = por %p235, %p236
      %p239 = scmp.ne.s32.totalorder %s224, %s238
      %p240 = scmp.eq.s32.totalorder %s46, 0
      %p241 = por %p239, %p240
      %s243 = sadd.s32 %s242, 1
      %p246 = scmp.eq.s32.totalorder %s40, 1
      %p247 = scmp.ne.s32.totalorder %s242, %s244
      %p248 = scmp.eq.s32.totalorder %s40, 0
      %p249 = por %p247, %p248
      %p250 = scmp.ne.s32.totalorder %s242, %s244
      %p251 = scmp.eq.s32.totalorder %s45, 1
      %p252 = por %p250, %p251
      %p253 = scmp.ne.s32.totalorder %s244, %s245
      %p254 = scmp.eq.s32.totalorder %s45, 0
      %p255 = por %p253, %p254
      %p256 = scmp.ne.s32.totalorder %s244, %s245
      %p257 = scmp.eq.s32.totalorder %s46, 1
      %p258 = por %p256, %p257
      %p260 = scmp.ne.s32.totalorder %s245, %s259
      %p261 = scmp.eq.s32.totalorder %s46, 0
      %p262 = por %p260, %p261
      %s264 = sadd.s32 %s263, 1
      %p267 = scmp.eq.s32.totalorder %s40, 1
      %p268 = scmp.ne.s32.totalorder %s263, %s265
      %p269 = scmp.eq.s32.totalorder %s40, 0
      %p270 = por %p268, %p269
      %p271 = scmp.ne.s32.totalorder %s263, %s265
      %p272 = scmp.eq.s32.totalorder %s45, 1
      %p273 = por %p271, %p272
      %p274 = scmp.ne.s32.totalorder %s265, %s266
      %p275 = scmp.eq.s32.totalorder %s45, 0
      %p276 = por %p274, %p275
      %p277 = scmp.ne.s32.totalorder %s265, %s266
      %p278 = scmp.eq.s32.totalorder %s46, 1
      %p279 = por %p277, %p278
      %p281 = scmp.ne.s32.totalorder %s266, %s280
      %p282 = scmp.eq.s32.totalorder %s46, 0
      %p283 = por %p281, %p282
      %s285 = sadd.s32 %s284, 1
      %p288 = scmp.eq.s32.totalorder %s40, 1
      %p289 = scmp.ne.s32.totalorder %s284, %s286
      %p290 = scmp.eq.s32.totalorder %s40, 0
      %p291 = por %p289, %p290
      %p292 = scmp.ne.s32.totalorder %s284, %s286
      %p293 = scmp.eq.s32.totalorder %s45, 1
      %p294 = por %p292, %p293
      %p295 = scmp.ne.s32.totalorder %s286, %s287
      %p296 = scmp.eq.s32.totalorder %s45, 0
      %p297 = por %p295, %p296
      %p298 = scmp.ne.s32.totalorder %s286, %s287
      %p299 = scmp.eq.s32.totalorder %s46, 1
      %p300 = por %p298, %p299
      %p302 = scmp.ne.s32.totalorder %s287, %s301
      %p303 = scmp.eq.s32.totalorder %s46, 0
      %p304 = por %p302, %p303
      %s306 = sadd.s32 %s305, 1
      %p309 = scmp.eq.s32.totalorder %s40, 1
      %p310 = scmp.ne.s32.totalorder %s305, %s307
      %p311 = scmp.eq.s32.totalorder %s40, 0
      %p312 = por %p310, %p311
      %p313 = scmp.ne.s32.totalorder %s305, %s307
      %p314 = scmp.eq.s32.totalorder %s45, 1
      %p315 = por %p313, %p314
      %p316 = scmp.ne.s32.totalorder %s307, %s308
      %p317 = scmp.eq.s32.totalorder %s45, 0
      %p318 = por %p316, %p317
      %p319 = scmp.ne.s32.totalorder %s307, %s308
      %p320 = scmp.eq.s32.totalorder %s46, 1
      %p321 = por %p319, %p320
      %p323 = scmp.ne.s32.totalorder %s308, %s322
      %p324 = scmp.eq.s32.totalorder %s46, 0
      %p325 = por %p323, %p324
      %s327 = sadd.s32 %s326, 1
      %p330 = scmp.eq.s32.totalorder %s40, 1
      %p331 = scmp.ne.s32.totalorder %s326, %s328
      %p332 = scmp.eq.s32.totalorder %s40, 0
      %p333 = por %p331, %p332
      %p334 = scmp.ne.s32.totalorder %s326, %s328
      %p335 = scmp.eq.s32.totalorder %s45, 1
      %p336 = por %p334, %p335
      %p337 = scmp.ne.s32.totalorder %s328, %s329
      %p338 = scmp.eq.s32.totalorder %s45, 0
      %p339 = por %p337, %p338
      %p340 = scmp.ne.s32.totalorder %s328, %s329
      %p341 = scmp.eq.s32.totalorder %s46, 1
      %p342 = por %p340, %p341
      %p344 = scmp.ne.s32.totalorder %s329, %s343
      %p345 = scmp.eq.s32.totalorder %s46, 0
      %p346 = por %p344, %p345
      %s348 = sadd.s32 %s347, 1
      %p351 = scmp.eq.s32.totalorder %s40, 1
      %p352 = scmp.ne.s32.totalorder %s347, %s349
      %p353 = scmp.eq.s32.totalorder %s40, 0
      %p354 = por %p352, %p353
      %p355 = scmp.ne.s32.totalorder %s347, %s349
      %p356 = scmp.eq.s32.totalorder %s45, 1
      %p357 = por %p355, %p356
      %p358 = scmp.ne.s32.totalorder %s349, %s350
      %p359 = scmp.eq.s32.totalorder %s45, 0
      %p360 = por %p358, %p359
      %p361 = scmp.ne.s32.totalorder %s349, %s350
      %p362 = scmp.eq.s32.totalorder %s46, 1
      %p363 = por %p361, %p362
      %p365 = scmp.ne.s32.totalorder %s350, %s364
      %p366 = scmp.eq.s32.totalorder %s46, 0
      %p367 = por %p365, %p366
      %s369 = sadd.s32 %s368, 1
      %p372 = scmp.eq.s32.totalorder %s40, 1
      %p373 = scmp.ne.s32.totalorder %s368, %s370
      %p374 = scmp.eq.s32.totalorder %s40, 0
      %p375 = por %p373, %p374
      %p376 = scmp.ne.s32.totalorder %s368, %s370
      %p377 = scmp.eq.s32.totalorder %s45, 1
      %p378 = por %p376, %p377
      %p379 = scmp.ne.s32.totalorder %s370, %s371
      %p380 = scmp.eq.s32.totalorder %s45, 0
      %p381 = por %p379, %p380
      %p382 = scmp.ne.s32.totalorder %s370, %s371
      %p383 = scmp.eq.s32.totalorder %s46, 1
      %p384 = por %p382, %p383
      %p386 = scmp.ne.s32.totalorder %s371, %s385
      %p387 = scmp.eq.s32.totalorder %s46, 0
      %p388 = por %p386, %p387
      %s390 = sadd.s32 %s389, 1
      %p393 = scmp.eq.s32.totalorder %s40, 1
      %p394 = scmp.ne.s32.totalorder %s389, %s391
      %p395 = scmp.eq.s32.totalorder %s40, 0
      %p396 = por %p394, %p395
      %p397 = scmp.ne.s32.totalorder %s389, %s391
      %p398 = scmp.eq.s32.totalorder %s45, 1
      %p399 = por %p397, %p398
      %p400 = scmp.ne.s32.totalorder %s391, %s392
      %p401 = scmp.eq.s32.totalorder %s45, 0
      %p402 = por %p400, %p401
      %p403 = scmp.ne.s32.totalorder %s391, %s392
      %p404 = scmp.eq.s32.totalorder %s46, 1
      %p405 = por %p403, %p404
      %p407 = scmp.ne.s32.totalorder %s392, %s406
      %p408 = scmp.eq.s32.totalorder %s46, 0
      %p409 = por %p407, %p408
      %s411 = sadd.s32 %s410, 1
      %p414 = scmp.eq.s32.totalorder %s40, 1
      %p415 = scmp.ne.s32.totalorder %s410, %s412
      %p416 = scmp.eq.s32.totalorder %s40, 0
      %p417 = por %p415, %p416
      %p418 = scmp.ne.s32.totalorder %s410, %s412
      %p419 = scmp.eq.s32.totalorder %s45, 1
      %p420 = por %p418, %p419
      %p421 = scmp.ne.s32.totalorder %s412, %s413
      %p422 = scmp.eq.s32.totalorder %s45, 0
      %p423 = por %p421, %p422
      %p424 = scmp.ne.s32.totalorder %s412, %s413
      %p425 = scmp.eq.s32.totalorder %s46, 1
      %p426 = por %p424, %p425
      %p428 = scmp.ne.s32.totalorder %s413, %s427
      %p429 = scmp.eq.s32.totalorder %s46, 0
      %p430 = por %p428, %p429
      %s432 = sadd.s32 %s431, 1
      %p435 = scmp.eq.s32.totalorder %s40, 1
      %p436 = scmp.ne.s32.totalorder %s431, %s433
      %p437 = scmp.eq.s32.totalorder %s40, 0
      %p438 = por %p436, %p437
      %p439 = scmp.ne.s32.totalorder %s431, %s433
      %p440 = scmp.eq.s32.totalorder %s45, 1
      %p441 = por %p439, %p440
      %p442 = scmp.ne.s32.totalorder %s433, %s434
      %p443 = scmp.eq.s32.totalorder %s45, 0
      %p444 = por %p442, %p443
      %p445 = scmp.ne.s32.totalorder %s433, %s434
      %p446 = scmp.eq.s32.totalorder %s46, 1
      %p447 = por %p445, %p446
      %p449 = scmp.ne.s32.totalorder %s434, %s448
      %p450 = scmp.eq.s32.totalorder %s46, 0
      %p451 = por %p449, %p450
      %s452 = ssub.s32 %s40, %s47
      %p453 = scmp.eq.s32.totalorder %s452, 0
      %s455 = sadd.s32 %s454, 1
      %s456 = scalar_select %p453, %s454, %s455
      %p459 = pneg %p453
      %p460 = scmp.eq.s32.totalorder %s40, 1
      %p461 = por %p459, %p460
      %p462 = scmp.ne.s32.totalorder %s454, %s457
      %p463 = scmp.eq.s32.totalorder %s40, 0
      %p464 = por %p462, %p463
      %p465 = scmp.ne.s32.totalorder %s454, %s457
      %p466 = scmp.eq.s32.totalorder %s45, 1
      %p467 = por %p465, %p466
      %p468 = scmp.ne.s32.totalorder %s457, %s458
      %p469 = scmp.eq.s32.totalorder %s45, 0
      %p470 = por %p468, %p469
      %p471 = scmp.ne.s32.totalorder %s457, %s458
      %p472 = scmp.eq.s32.totalorder %s46, 1
      %p473 = por %p471, %p472
      %p475 = scmp.ne.s32.totalorder %s458, %s474
      %p476 = scmp.eq.s32.totalorder %s46, 0
      %p477 = por %p475, %p476
      %p478 = scmp.le.s32.totalorder 1, %s40
      %p479 = scmp.lt.s32.totalorder %s40, 3
      %p480 = pnand %p478, %p479
      %p481 = pneg %p480
      // Predicated region
      $region9: #{tpu_custom_call.1} parent=5 // pred_check
        _
      $region10: #{tpu_custom_call.1} parent=5 // pred_check_branch
        %483 = sbr.rel (%p480) target = $region12
      $region11: #{tpu_custom_call.1} parent=5 // pred_region
        %s484 = ssub.s32 %s40, 1
        // Predicated region
        $region13: #{tpu_custom_call.1} parent=11 // pred_check
          %p485 = pneg %p87
        $region14: #{tpu_custom_call.1} parent=11 // pred_check_branch
          %487 = sbr.rel (%p485) target = $region16
        $region15: #{tpu_custom_call.1} parent=11 // pred_region
          %s489 = ssub.s32 16, 16
          %490 = vsyncadd [#allocation6], %s489
          %s492 = sshll.u32 [#allocation5], 4
          %s493 = int_to_ptr.vmem [resolvable:$true] %s492
          %495 = dma.hbm_to_vmem [thread:$0]  %s1, 16, %s493, [#allocation6]
        $region16: #{tpu_custom_call.1} parent=11 // pred_fallthru
          _
        // Predicated region
        $region17: #{tpu_custom_call.1} parent=11 // pred_check
          %p496 = pneg %p108
        $region18: #{tpu_custom_call.1} parent=11 // pred_check_branch
          %498 = sbr.rel (%p496) target = $region20
        $region19: #{tpu_custom_call.1} parent=11 // pred_region
          %s500 = ssub.s32 16, 16
          %501 = vsyncadd [#allocation6], %s500
          %s503 = sshll.u32 [#allocation7], 4
          %s504 = int_to_ptr.vmem [resolvable:$true] %s503
          %506 = dma.hbm_to_vmem [thread:$0]  %s2, 16, %s504, [#allocation6]
        $region20: #{tpu_custom_call.1} parent=11 // pred_fallthru
          _
        // Predicated region
        $region21: #{tpu_custom_call.1} parent=11 // pred_check
          %p507 = pneg %p129
        $region22: #{tpu_custom_call.1} parent=11 // pred_check_branch
          %509 = sbr.rel (%p507) target = $region24
        $region23: #{tpu_custom_call.1} parent=11 // pred_region
          %s511 = ssub.s32 512, 512
          %512 = vsyncadd [#allocation9], %s511
          %s513 = sshll.u32 [#allocation8], 4
          %s514 = int_to_ptr.vmem [resolvable:$true] %s513
          %519 = dma.hbm_to_vmem [thread:$0]  %s3, 512, %s514, [#allocation9], 64, 64, 4
        $region24: #{tpu_custom_call.1} parent=11 // pred_fallthru
          _
        // Predicated region
        $region25: #{tpu_custom_call.1} parent=11 // pred_check
          %p520 = pneg %p150
        $region26: #{tpu_custom_call.1} parent=11 // pred_check_branch
          %522 = sbr.rel (%p520) target = $region28
        $region27: #{tpu_custom_call.1} parent=11 // pred_region
          %s524 = ssub.s32 16, 16
          %525 = vsyncadd [#allocation9], %s524
          %s527 = sshll.u32 [#allocation10], 4
          %s528 = int_to_ptr.vmem [resolvable:$true] %s527
          %530 = dma.hbm_to_vmem [thread:$0]  %s4, 16, %s528, [#allocation9]
        $region28: #{tpu_custom_call.1} parent=11 // pred_fallthru
          _
        // Predicated region
        $region29: #{tpu_custom_call.1} parent=11 // pred_check
          %p531 = pneg %p171
        $region30: #{tpu_custom_call.1} parent=11 // pred_check_branch
          %533 = sbr.rel (%p531) target = $region32
        $region31: #{tpu_custom_call.1} parent=11 // pred_region
          %s535 = ssub.s32 512, 512
          %536 = vsyncadd [#allocation12], %s535
          %s537 = sshll.u32 [#allocation11], 4
          %s538 = int_to_ptr.vmem [resolvable:$true] %s537
          %543 = dma.hbm_to_vmem [thread:$0]  %s5, 512, %s538, [#allocation12], 64, 64, 4
        $region32: #{tpu_custom_call.1} parent=11 // pred_fallthru
          _
        // Predicated region
        $region33: #{tpu_custom_call.1} parent=11 // pred_check
          %p544 = pneg %p192
        $region34: #{tpu_custom_call.1} parent=11 // pred_check_branch
          %546 = sbr.rel (%p544) target = $region36
        $region35: #{tpu_custom_call.1} parent=11 // pred_region
          %s548 = ssub.s32 16, 16
          %549 = vsyncadd [#allocation12], %s548
          %s551 = sshll.u32 [#allocation13], 4
          %s552 = int_to_ptr.vmem [resolvable:$true] %s551
          %554 = dma.hbm_to_vmem [thread:$0]  %s6, 16, %s552, [#allocation12]
        $region36: #{tpu_custom_call.1} parent=11 // pred_fallthru
          _
        // Predicated region
        $region37: #{tpu_custom_call.1} parent=11 // pred_check
          %p555 = pneg %p213
        $region38: #{tpu_custom_call.1} parent=11 // pred_check_branch
          %557 = sbr.rel (%p555) target = $region40
        $region39: #{tpu_custom_call.1} parent=11 // pred_region
          %s559 = ssub.s32 512, 512
          %560 = vsyncadd [#allocation15], %s559
          %s561 = sshll.u32 [#allocation14], 4
          %s562 = int_to_ptr.vmem [resolvable:$true] %s561
          %567 = dma.hbm_to_vmem [thread:$0]  %s7, 512, %s562, [#allocation15], 64, 64, 4
        $region40: #{tpu_custom_call.1} parent=11 // pred_fallthru
          _
        // Predicated region
        $region41: #{tpu_custom_call.1} parent=11 // pred_check
          %p568 = pneg %p234
        $region42: #{tpu_custom_call.1} parent=11 // pred_check_branch
          %570 = sbr.rel (%p568) target = $region44
        $region43: #{tpu_custom_call.1} parent=11 // pred_region
          %s572 = ssub.s32 16, 16
          %573 = vsyncadd [#allocation15], %s572
          %s575 = sshll.u32 [#allocation16], 4
          %s576 = int_to_ptr.vmem [resolvable:$true] %s575
          %578 = dma.hbm_to_vmem [thread:$0]  %s8, 16, %s576, [#allocation15]
        $region44: #{tpu_custom_call.1} parent=11 // pred_fallthru
          _
        // Predicated region
        $region45: #{tpu_custom_call.1} parent=11 // pred_check
          %p579 = pneg %p255
        $region46: #{tpu_custom_call.1} parent=11 // pred_check_branch
          %581 = sbr.rel (%p579) target = $region48
        $region47: #{tpu_custom_call.1} parent=11 // pred_region
          %s583 = ssub.s32 512, 512
          %584 = vsyncadd [#allocation18], %s583
          %s585 = sshll.u32 [#allocation17], 4
          %s586 = int_to_ptr.vmem [resolvable:$true] %s585
          %591 = dma.hbm_to_vmem [thread:$0]  %s9, 512, %s586, [#allocation18], 64, 64, 4
        $region48: #{tpu_custom_call.1} parent=11 // pred_fallthru
          _
        // Predicated region
        $region49: #{tpu_custom_call.1} parent=11 // pred_check
          %p592 = pneg %p276
        $region50: #{tpu_custom_call.1} parent=11 // pred_check_branch
          %594 = sbr.rel (%p592) target = $region52
        $region51: #{tpu_custom_call.1} parent=11 // pred_region
          %s596 = ssub.s32 16, 16
          %597 = vsyncadd [#allocation18], %s596
          %s599 = sshll.u32 [#allocation19], 4
          %s600 = int_to_ptr.vmem [resolvable:$true] %s599
          %602 = dma.hbm_to_vmem [thread:$0]  %s10, 16, %s600, [#allocation18]
        $region52: #{tpu_custom_call.1} parent=11 // pred_fallthru
          _
        // Predicated region
        $region53: #{tpu_custom_call.1} parent=11 // pred_check
          %p603 = pneg %p297
        $region54: #{tpu_custom_call.1} parent=11 // pred_check_branch
          %605 = sbr.rel (%p603) target = $region56
        $region55: #{tpu_custom_call.1} parent=11 // pred_region
          %s607 = ssub.s32 16, 16
          %608 = vsyncadd [#allocation21], %s607
          %s610 = sshll.u32 [#allocation20], 4
          %s611 = int_to_ptr.vmem [resolvable:$true] %s610
          %613 = dma.hbm_to_vmem [thread:$0]  %s11, 16, %s611, [#allocation21]
        $region56: #{tpu_custom_call.1} parent=11 // pred_fallthru
          _
        // Predicated region
        $region57: #{tpu_custom_call.1} parent=11 // pred_check
          %p614 = pneg %p318
        $region58: #{tpu_custom_call.1} parent=11 // pred_check_branch
          %616 = sbr.rel (%p614) target = $region60
        $region59: #{tpu_custom_call.1} parent=11 // pred_region
          %s618 = ssub.s32 16, 16
          %619 = vsyncadd [#allocation21], %s618
          %s621 = sshll.u32 [#allocation22], 4
          %s622 = int_to_ptr.vmem [resolvable:$true] %s621
          %624 = dma.hbm_to_vmem [thread:$0]  %s12, 16, %s622, [#allocation21]
        $region60: #{tpu_custom_call.1} parent=11 // pred_fallthru
          _
        // Predicated region
        $region61: #{tpu_custom_call.1} parent=11 // pred_check
          %p625 = pneg %p339
        $region62: #{tpu_custom_call.1} parent=11 // pred_check_branch
          %627 = sbr.rel (%p625) target = $region64
        $region63: #{tpu_custom_call.1} parent=11 // pred_region
          %s629 = ssub.s32 1024, 1024
          %630 = vsyncadd [#allocation24], %s629
          %s631 = sshll.u32 [#allocation23], 4
          %s632 = int_to_ptr.vmem [resolvable:$true] %s631
          %637 = dma.hbm_to_vmem [thread:$0]  %s13, 1024, %s632, [#allocation24], 128, 128, 8
        $region64: #{tpu_custom_call.1} parent=11 // pred_fallthru
          _
        // Predicated region
        $region65: #{tpu_custom_call.1} parent=11 // pred_check
          %p638 = pneg %p360
        $region66: #{tpu_custom_call.1} parent=11 // pred_check_branch
          %640 = sbr.rel (%p638) target = $region68
        $region67: #{tpu_custom_call.1} parent=11 // pred_region
          %s642 = ssub.s32 32, 32
          %643 = vsyncadd [#allocation24], %s642
          %s645 = sshll.u32 [#allocation25], 4
          %s646 = int_to_ptr.vmem [resolvable:$true] %s645
          %648 = dma.hbm_to_vmem [thread:$0]  %s14, 32, %s646, [#allocation24]
        $region68: #{tpu_custom_call.1} parent=11 // pred_fallthru
          _
        // Predicated region
        $region69: #{tpu_custom_call.1} parent=11 // pred_check
          %p649 = pneg %p381
        $region70: #{tpu_custom_call.1} parent=11 // pred_check_branch
          %651 = sbr.rel (%p649) target = $region72
        $region71: #{tpu_custom_call.1} parent=11 // pred_region
          %s653 = ssub.s32 32, 32
          %654 = vsyncadd [#allocation27], %s653
          %s656 = sshll.u32 [#allocation26], 4
          %s657 = int_to_ptr.vmem [resolvable:$true] %s656
          %659 = dma.hbm_to_vmem [thread:$0]  %s15, 32, %s657, [#allocation27]
        $region72: #{tpu_custom_call.1} parent=11 // pred_fallthru
          _
        // Predicated region
        $region73: #{tpu_custom_call.1} parent=11 // pred_check
          %p660 = pneg %p402
        $region74: #{tpu_custom_call.1} parent=11 // pred_check_branch
          %662 = sbr.rel (%p660) target = $region76
        $region75: #{tpu_custom_call.1} parent=11 // pred_region
          %s664 = ssub.s32 32, 32
          %665 = vsyncadd [#allocation27], %s664
          %s667 = sshll.u32 [#allocation28], 4
          %s668 = int_to_ptr.vmem [resolvable:$true] %s667
          %670 = dma.hbm_to_vmem [thread:$0]  %s16, 32, %s668, [#allocation27]
        $region76: #{tpu_custom_call.1} parent=11 // pred_fallthru
          _
        // Predicated region
        $region77: #{tpu_custom_call.1} parent=11 // pred_check
          %p671 = pneg %p423
        $region78: #{tpu_custom_call.1} parent=11 // pred_check_branch
          %673 = sbr.rel (%p671) target = $region80
        $region79: #{tpu_custom_call.1} parent=11 // pred_region
          %s675 = ssub.s32 2048, 2048
          %676 = vsyncadd [#allocation30], %s675
          %s677 = sshll.u32 [#allocation29], 4
          %s678 = int_to_ptr.vmem [resolvable:$true] %s677
          %683 = dma.hbm_to_vmem [thread:$0]  %s17, 2048, %s678, [#allocation30], 64, 64, 4
        $region80: #{tpu_custom_call.1} parent=11 // pred_fallthru
          _
        // Predicated region
        $region81: #{tpu_custom_call.1} parent=11 // pred_check
          %p684 = pneg %p444
        $region82: #{tpu_custom_call.1} parent=11 // pred_check_branch
          %686 = sbr.rel (%p684) target = $region84
        $region83: #{tpu_custom_call.1} parent=11 // pred_region
          %s688 = ssub.s32 16, 16
          %689 = vsyncadd [#allocation30], %s688
          %s691 = sshll.u32 [#allocation31], 4
          %s692 = int_to_ptr.vmem [resolvable:$true] %s691
          %694 = dma.hbm_to_vmem [thread:$0]  %s18, 16, %s692, [#allocation30]
        $region84: #{tpu_custom_call.1} parent=11 // pred_fallthru
          _
      $region12: #{tpu_custom_call.1} parent=5 // pred_fallthru
        _
      %p695 = scmp.lt.s32.totalorder %s40, 2
      // Predicated region
      $region85: #{tpu_custom_call.1} parent=5 // pred_check
        %p696 = pneg %p695
      $region86: #{tpu_custom_call.1} parent=5 // pred_check_branch
        %698 = sbr.rel (%p696) target = $region88
      $region87: #{tpu_custom_call.1} parent=5 // pred_region
        // Predicated region
        $region89: #{tpu_custom_call.1} parent=87 // pred_check
          %p699 = pneg %p60
        $region90: #{tpu_custom_call.1} parent=87 // pred_check_branch
          %701 = sbr.rel (%p699) target = $region92
        $region91: #{tpu_custom_call.1} parent=87 // pred_region
          %s702 = sand.u32 %s50, 1
          %s703 = scalar_lea.sflag [#allocation3], %s702
          %s704 = sand.u32 %s50, 1
          %s705 = smul.addr %s704, 24
          %s706 = scalar_lea.vmem [#allocation2], %s705
          %s708 = ssub.s32 384, 384
          %709 = vsyncadd %s703, %s708
          %s710 = smul.addr %s40, 3
          %s711 = smul.addr %s710, 128
          %s712 = scalar_lea.hbm %s0, %s711
          %s713 = sshll.u32 %s706, 4
          %s714 = int_to_ptr.vmem [resolvable:$true] %s713
          %719 = dma.hbm_to_vmem [thread:$0]  %s712, 384, %s714, %s703, 128, 128, 8
        $region92: #{tpu_custom_call.1} parent=87 // pred_fallthru
          _
      $region88: #{tpu_custom_call.1} parent=5 // pred_fallthru
        _
      %p720 = scmp.le.s32.totalorder 1, %s40
      %p721 = scmp.lt.s32.totalorder %s40, 3
      %p722 = pnand %p720, %p721
      %p723 = pneg %p722
      // Predicated region
      $region93: #{tpu_custom_call.1} parent=5 // pred_check
        _
      $region94: #{tpu_custom_call.1} parent=5 // pred_check_branch
        %725 = sbr.rel (%p722) target = $region96
      $region95: #{tpu_custom_call.1} parent=5 // pred_region
        %s726 = ssub.s32 %s40, 1
        %s727 = sand.u32 %s53, 1
        %s728 = scalar_lea.sflag [#allocation3], %s727
        %s729 = sand.u32 %s53, 1
        %s730 = smul.addr %s729, 24
        %s731 = scalar_lea.vmem [#allocation2], %s730
        // Predicated region
        $region97: #{tpu_custom_call.1} parent=95 // pred_check
          %p732 = pneg %p66
        $region98: #{tpu_custom_call.1} parent=95 // pred_check_branch
          %734 = sbr.rel (%p732) target = $region100
        $region99: #{tpu_custom_call.1} parent=95 // pred_region
          %735 = dma.done %s728, 384
        $region100: #{tpu_custom_call.1} parent=95 // pred_fallthru
          _
        // Predicated region
        $region101: #{tpu_custom_call.1} parent=95 // pred_check
          %p736 = pneg %p87
        $region102: #{tpu_custom_call.1} parent=95 // pred_check_branch
          %738 = sbr.rel (%p736) target = $region104
        $region103: #{tpu_custom_call.1} parent=95 // pred_region
          %739 = dma.done [#allocation6], 16
        $region104: #{tpu_custom_call.1} parent=95 // pred_fallthru
          _
        // Predicated region
        $region105: #{tpu_custom_call.1} parent=95 // pred_check
          %p740 = pneg %p108
        $region106: #{tpu_custom_call.1} parent=95 // pred_check_branch
          %742 = sbr.rel (%p740) target = $region108
        $region107: #{tpu_custom_call.1} parent=95 // pred_region
          %743 = dma.done [#allocation6], 16
        $region108: #{tpu_custom_call.1} parent=95 // pred_fallthru
          _
        // Predicated region
        $region109: #{tpu_custom_call.1} parent=95 // pred_check
          %p744 = pneg %p129
        $region110: #{tpu_custom_call.1} parent=95 // pred_check_branch
          %746 = sbr.rel (%p744) target = $region112
        $region111: #{tpu_custom_call.1} parent=95 // pred_region
          %747 = dma.done [#allocation9], 512
        $region112: #{tpu_custom_call.1} parent=95 // pred_fallthru
          _
        // Predicated region
        $region113: #{tpu_custom_call.1} parent=95 // pred_check
          %p748 = pneg %p150
        $region114: #{tpu_custom_call.1} parent=95 // pred_check_branch
          %750 = sbr.rel (%p748) target = $region116
        $region115: #{tpu_custom_call.1} parent=95 // pred_region
          %751 = dma.done [#allocation9], 16
        $region116: #{tpu_custom_call.1} parent=95 // pred_fallthru
          _
        // Predicated region
        $region117: #{tpu_custom_call.1} parent=95 // pred_check
          %p752 = pneg %p171
        $region118: #{tpu_custom_call.1} parent=95 // pred_check_branch
          %754 = sbr.rel (%p752) target = $region120
        $region119: #{tpu_custom_call.1} parent=95 // pred_region
          %755 = dma.done [#allocation12], 512
        $region120: #{tpu_custom_call.1} parent=95 // pred_fallthru
          _
        // Predicated region
        $region121: #{tpu_custom_call.1} parent=95 // pred_check
          %p756 = pneg %p192
        $region122: #{tpu_custom_call.1} parent=95 // pred_check_branch
          %758 = sbr.rel (%p756) target = $region124
        $region123: #{tpu_custom_call.1} parent=95 // pred_region
          %759 = dma.done [#allocation12], 16
        $region124: #{tpu_custom_call.1} parent=95 // pred_fallthru
          _
        // Predicated region
        $region125: #{tpu_custom_call.1} parent=95 // pred_check
          %p760 = pneg %p213
        $region126: #{tpu_custom_call.1} parent=95 // pred_check_branch
          %762 = sbr.rel (%p760) target = $region128
        $region127: #{tpu_custom_call.1} parent=95 // pred_region
          %763 = dma.done [#allocation15], 512
        $region128: #{tpu_custom_call.1} parent=95 // pred_fallthru
          _
        // Predicated region
        $region129: #{tpu_custom_call.1} parent=95 // pred_check
          %p764 = pneg %p234
        $region130: #{tpu_custom_call.1} parent=95 // pred_check_branch
          %766 = sbr.rel (%p764) target = $region132
        $region131: #{tpu_custom_call.1} parent=95 // pred_region
          %767 = dma.done [#allocation15], 16
        $region132: #{tpu_custom_call.1} parent=95 // pred_fallthru
          _
        // Predicated region
        $region133: #{tpu_custom_call.1} parent=95 // pred_check
          %p768 = pneg %p255
        $region134: #{tpu_custom_call.1} parent=95 // pred_check_branch
          %770 = sbr.rel (%p768) target = $region136
        $region135: #{tpu_custom_call.1} parent=95 // pred_region
          %771 = dma.done [#allocation18], 512
        $region136: #{tpu_custom_call.1} parent=95 // pred_fallthru
          _
        // Predicated region
        $region137: #{tpu_custom_call.1} parent=95 // pred_check
          %p772 = pneg %p276
        $region138: #{tpu_custom_call.1} parent=95 // pred_check_branch
          %774 = sbr.rel (%p772) target = $region140
        $region139: #{tpu_custom_call.1} parent=95 // pred_region
          %775 = dma.done [#allocation18], 16
        $region140: #{tpu_custom_call.1} parent=95 // pred_fallthru
          _
        // Predicated region
        $region141: #{tpu_custom_call.1} parent=95 // pred_check
          %p776 = pneg %p297
        $region142: #{tpu_custom_call.1} parent=95 // pred_check_branch
          %778 = sbr.rel (%p776) target = $region144
        $region143: #{tpu_custom_call.1} parent=95 // pred_region
          %779 = dma.done [#allocation21], 16
        $region144: #{tpu_custom_call.1} parent=95 // pred_fallthru
          _
        // Predicated region
        $region145: #{tpu_custom_call.1} parent=95 // pred_check
          %p780 = pneg %p318
        $region146: #{tpu_custom_call.1} parent=95 // pred_check_branch
          %782 = sbr.rel (%p780) target = $region148
        $region147: #{tpu_custom_call.1} parent=95 // pred_region
          %783 = dma.done [#allocation21], 16
        $region148: #{tpu_custom_call.1} parent=95 // pred_fallthru
          _
        // Predicated region
        $region149: #{tpu_custom_call.1} parent=95 // pred_check
          %p784 = pneg %p339
        $region150: #{tpu_custom_call.1} parent=95 // pred_check_branch
          %786 = sbr.rel (%p784) target = $region152
        $region151: #{tpu_custom_call.1} parent=95 // pred_region
          %787 = dma.done [#allocation24], 1024
        $region152: #{tpu_custom_call.1} parent=95 // pred_fallthru
          _
        // Predicated region
        $region153: #{tpu_custom_call.1} parent=95 // pred_check
          %p788 = pneg %p360
        $region154: #{tpu_custom_call.1} parent=95 // pred_check_branch
          %790 = sbr.rel (%p788) target = $region156
        $region155: #{tpu_custom_call.1} parent=95 // pred_region
          %791 = dma.done [#allocation24], 32
        $region156: #{tpu_custom_call.1} parent=95 // pred_fallthru
          _
        // Predicated region
        $region157: #{tpu_custom_call.1} parent=95 // pred_check
          %p792 = pneg %p381
        $region158: #{tpu_custom_call.1} parent=95 // pred_check_branch
          %794 = sbr.rel (%p792) target = $region160
        $region159: #{tpu_custom_call.1} parent=95 // pred_region
          %795 = dma.done [#allocation27], 32
        $region160: #{tpu_custom_call.1} parent=95 // pred_fallthru
          _
        // Predicated region
        $region161: #{tpu_custom_call.1} parent=95 // pred_check
          %p796 = pneg %p402
        $region162: #{tpu_custom_call.1} parent=95 // pred_check_branch
          %798 = sbr.rel (%p796) target = $region164
        $region163: #{tpu_custom_call.1} parent=95 // pred_region
          %799 = dma.done [#allocation27], 32
        $region164: #{tpu_custom_call.1} parent=95 // pred_fallthru
          _
        // Predicated region
        $region165: #{tpu_custom_call.1} parent=95 // pred_check
          %p800 = pneg %p423
        $region166: #{tpu_custom_call.1} parent=95 // pred_check_branch
          %802 = sbr.rel (%p800) target = $region168
        $region167: #{tpu_custom_call.1} parent=95 // pred_region
          %803 = dma.done [#allocation30], 2048
        $region168: #{tpu_custom_call.1} parent=95 // pred_fallthru
          _
        // Predicated region
        $region169: #{tpu_custom_call.1} parent=95 // pred_check
          %p804 = pneg %p444
        $region170: #{tpu_custom_call.1} parent=95 // pred_check_branch
          %806 = sbr.rel (%p804) target = $region172
        $region171: #{tpu_custom_call.1} parent=95 // pred_region
          %807 = dma.done [#allocation30], 16
        $region172: #{tpu_custom_call.1} parent=95 // pred_fallthru
          _
        %s808 = sand.u32 %s53, 1
        %s809 = scalar_lea.sflag [#allocation3], %s808
        %s810 = sand.u32 %s53, 1
        %s811 = smul.addr %s810, 24
        %s812 = scalar_lea.vmem [#allocation2], %s811
        %p813 = pneg %p66
        %p814 = pneg %p63
        %p815 = pneg %p87
        %p816 = pneg %p84
        %p817 = pneg %p108
        %p818 = pneg %p105
        %p819 = pneg %p129
        %p820 = pneg %p126
        %p821 = pneg %p150
        %p822 = pneg %p147
        %p823 = pneg %p171
        %p824 = pneg %p168
        %p825 = pneg %p192
        %p826 = pneg %p189
        %p827 = pneg %p213
        %p828 = pneg %p210
        %p829 = pneg %p234
        %p830 = pneg %p231
        %p831 = pneg %p255
        %p832 = pneg %p252
        %p833 = pneg %p276
        %p834 = pneg %p273
        %p835 = pneg %p297
        %p836 = pneg %p294
        %p837 = pneg %p318
        %p838 = pneg %p315
        %p839 = pneg %p339
        %p840 = pneg %p336
        %p841 = pneg %p360
        %p842 = pneg %p357
        %p843 = pneg %p381
        %p844 = pneg %p378
        %p845 = pneg %p402
        %p846 = pneg %p399
        %p847 = pneg %p423
        %p848 = pneg %p420
        %p849 = pneg %p444
        %p850 = pneg %p441
        %p851 = pneg %p470
        %p852 = pneg %p467
        %s853 = sand.u32 %s457, 1
        %s854 = scalar_lea.sflag [#allocation4], %s853
        %s855 = sand.u32 %s457, 1
        %s856 = smul.addr %s855, 24
        %s857 = scalar_lea.vmem [#allocation32], %s856
        %v859 = vld [vmem:[%s731] sm:$0xff]
        %v860 = vld [vmem:[%s731 + $0x8] sm:$0xff]
        %v861 = vld [vmem:[%s731 + $0x10] sm:$0x1]
        %v862 = vld [vmem:[#allocation5] sm:$0x1]
        %v863 = vld [vmem:[#allocation7] sm:$0x1]
        %vm864 = vcmask 523264
        %v865 = vsel %vm864, %v859, 0.0
        %866 = vadd.xlane.f32.xlu0 %v865
        %v867 = vpop.xlane.xlu0 %866
        %v868 = vsel %vm864, %v860, 0.0
        %869 = vadd.xlane.f32.xlu0 %v868
        %v870 = vpop.xlane.xlu0 %869
        %vm871 = vcmask 516096
        %v872 = vsel %vm871, %v861, 0.0
        %873 = vadd.xlane.f32.xlu0 %v872
        %v874 = vpop.xlane.xlu0 %873
        %v875 = vrcp.pop 64.0
        %v876 = vmul.f32 %v867, %v875
        %v877 = vmul.f32 %v870, %v875
        %v878 = vmul.f32 %v874, %v875
        %v879 = vsub.f32 %v859, %v876
        %v880 = vsub.f32 %v860, %v877
        %v881 = vsub.f32 %v861, %v878
        %v882 = vmul.f32 %v879, %v879
        %v883 = vmul.f32 %v880, %v880
        %v884 = vmul.f32 %v881, %v881
        %v885 = vsel %vm864, %v882, 0.0
        %886 = vadd.xlane.f32.xlu0 %v885
        %v887 = vpop.xlane.xlu0 %886
        %v888 = vsel %vm864, %v883, 0.0
        %889 = vadd.xlane.f32.xlu0 %v888
        %v890 = vpop.xlane.xlu0 %889
        %v891 = vsel %vm871, %v884, 0.0
        %892 = vadd.xlane.f32.xlu0 %v891
        %v893 = vpop.xlane.xlu0 %892
        %v894 = vmul.f32 %v887, %v875
        %v895 = vmul.f32 %v890, %v875
        %v896 = vmul.f32 %v893, %v875
        %v897 = vadd.f32 %v894, 1e-05
        %v898 = vadd.f32 %v895, 1e-05
        %v899 = vadd.f32 %v896, 1e-05
        %v900 = vrsqrt.pop %v897
        %v901 = vrsqrt.pop %v898
        %v902 = vrsqrt.pop %v899
        %v903 = vmul.f32 %v879, %v900
        %v904 = vmul.f32 %v880, %v901
        %v905 = vmul.f32 %v881, %v902
        %v907 = vlaneseq
        %v908 = vshrl.u32 %v907, 7
        %v909 = vsub.s32 0, %v908
        %v910 = vrot.slane %v862, %v909
        %v912 = vmul.f32 %v903, %v910
        %v913 = vmul.f32 %v904, %v910
        %v914 = vmul.f32 %v905, %v910
        %v916 = vlaneseq
        %v917 = vshrl.u32 %v916, 7
        %v918 = vsub.s32 0, %v917
        %v919 = vrot.slane %v863, %v918
        %v921 = vadd.f32 %v912, %v919
        %v922 = vadd.f32 %v913, %v919
        %v923 = vadd.f32 %v914, %v919
        %v924 = vpack.c.bf16 %v922, %v921
        %v925 = vpack.c.bf16 %v923, %v923
        %v926 = vld [vmem:[#allocation8] sm:$0xf]
        %v927 = vld [vmem:[#allocation8 + $0x4] sm:$0xf]
        %v928 = vld [vmem:[#allocation8 + $0x8] sm:$0xf]
        %v929 = vld [vmem:[#allocation8 + $0xc] sm:$0xf]
        %v930 = vld [vmem:[#allocation8 + $0x10] sm:$0xf]
        %v931 = vld [vmem:[#allocation8 + $0x14] sm:$0xf]
        %v932 = vld [vmem:[#allocation8 + $0x18] sm:$0xf]
        %v933 = vld [vmem:[#allocation8 + $0x1c] sm:$0xf]
        %v934 = vld [vmem:[#allocation10] sm:$0x1]
        %v936 = vlaneseq
        %v937 = vshrl.u32 %v936, 7
        %v938 = vsub.s32 0, %v937
        %v939 = vrot.slane %v934, %v938
        %v949 = vunpack.c.l.b16 %v926
        %v950 = vunpack.c.l.b16 %v927
        %v951 = vunpack.c.l.b16 %v928
        %v952 = vunpack.c.l.b16 %v929
        %v953 = vunpack.c.l.b16 %v930
        %v954 = vunpack.c.l.b16 %v931
        %v955 = vunpack.c.l.b16 %v932
        %v956 = vunpack.c.l.b16 %v933
        %v957 = vpack.c.b16 %v950, %v949
        %v958 = vpack.c.b16 %v952, %v951
        %v959 = vpack.c.b16 %v954, %v953
        %v960 = vpack.c.b16 %v956, %v955
        %v966 = vsel %vm864, %v924, 0
        %v969 = vsel %vm864, %v925, 0
        %971 = vmatprep.subr.bf16.mxu0 0
        %972 = vmatpush1.bf16.msra.mxu0 %v957
        %973 = vmatprep.subr.bf16.mxu0 0
        %974 = vmatpush1.bf16.msra.mxu0 %v958
        %975 = vmatprep.subr.bf16.mxu0 0
        %976 = vmatpush1.bf16.msra.mxu0 %v959
        %977 = vmatprep.subr.bf16.mxu0 0
        %978 = vmatpush1.bf16.msra.mxu0 %v960
        %979 = vmatprep.subr.bf16.mxu0 0
        %980 = vmatpush1.bf16.msra.mxu0 0
        %981 = vmatprep.subr.bf16.mxu0 0
        %982 = vmatpush1.bf16.msra.mxu0 0
        %983 = vmatprep.subr.bf16.mxu0 0
        %984 = vmatpush1.bf16.msra.mxu0 0
        %985 = vmatprep.subr.bf16.mxu0 0
        %986 = vmatpush1.bf16.msra.mxu0 0
        %987 = vmatprep.subr.bf16.mxu0 0
        %988 = vmatpush1.bf16.msra.mxu0 0
        %989 = vmatprep.subr.bf16.mxu0 0
        %990 = vmatpush1.bf16.msra.mxu0 0
        %991 = vmatprep.subr.bf16.mxu0 0
        %992 = vmatpush1.bf16.msra.mxu0 0
        %993 = vmatprep.subr.bf16.mxu0 0
        %994 = vmatpush1.bf16.msra.mxu0 0
        %995 = vmatprep.subr.bf16.mxu0 0
        %996 = vmatpush1.bf16.msra.mxu0 0
        %997 = vmatprep.subr.bf16.mxu0 0
        %998 = vmatpush1.bf16.msra.mxu0 0
        %999 = vmatprep.subr.bf16.mxu0 0
        %1000 = vmatpush1.bf16.msra.mxu0 0
        %1001 = vmatprep.subr.bf16.mxu0 0
        %1002 = vmatpush1.bf16.msra.mxu0 0
        %1003 = vmatprep.mubr.bf16.mxu0 0
        %1004 = vmatmul.mubr.bf16.gmra.mrb[0].mxu0 %v966
        %v1005 = vpop.f32.mrb[0].mxu0
        %v1006 = vadd.f32 %v939, %v1005
        %v1007 = vpop.f32.mrb[0].mxu0
        %v1008 = vpop.f32.mrb[0].mxu0
        %v1009 = vadd.f32 %v939, %v1008
        %v1010 = vpop.f32.mrb[0].mxu0
        %1011 = vmatprep.mubr.bf16.mxu0 0
        %1012 = vmatmul.mubr.bf16.gmra.mrb[0].mxu0 %v969
        %v1013 = vpop.f32.mrb[0].mxu0
        %v1014 = vadd.f32 %v939, %v1013
        %v1015 = vpop.f32.mrb[0].mxu0
        %v1016 = vpop.f32.mrb[0].mxu0
        %v1017 = vpop.f32.mrb[0].mxu0
        %1018 = vdwg.mxu0
        %v1019 = vld [vmem:[#allocation11] sm:$0xf]
        %v1020 = vld [vmem:[#allocation11 + $0x4] sm:$0xf]
        %v1021 = vld [vmem:[#allocation11 + $0x8] sm:$0xf]
        %v1022 = vld [vmem:[#allocation11 + $0xc] sm:$0xf]
        %v1023 = vld [vmem:[#allocation11 + $0x10] sm:$0xf]
        %v1024 = vld [vmem:[#allocation11 + $0x14] sm:$0xf]
        %v1025 = vld [vmem:[#allocation11 + $0x18] sm:$0xf]
        %v1026 = vld [vmem:[#allocation11 + $0x1c] sm:$0xf]
        %v1027 = vld [vmem:[#allocation13] sm:$0x1]
        %v1029 = vlaneseq
        %v1030 = vshrl.u32 %v1029, 7
        %v1031 = vsub.s32 0, %v1030
        %v1032 = vrot.slane %v1027, %v1031
        %v1042 = vunpack.c.l.b16 %v1019
        %v1043 = vunpack.c.l.b16 %v1020
        %v1044 = vunpack.c.l.b16 %v1021
        %v1045 = vunpack.c.l.b16 %v1022
        %v1046 = vunpack.c.l.b16 %v1023
        %v1047 = vunpack.c.l.b16 %v1024
        %v1048 = vunpack.c.l.b16 %v1025
        %v1049 = vunpack.c.l.b16 %v1026
        %v1050 = vpack.c.b16 %v1043, %v1042
        %v1051 = vpack.c.b16 %v1045, %v1044
        %v1052 = vpack.c.b16 %v1047, %v1046
        %v1053 = vpack.c.b16 %v1049, %v1048
        %1058 = vmatprep.subr.bf16.mxu0 0
        %1059 = vmatpush1.bf16.msra.mxu0 %v1050
        %1060 = vmatprep.subr.bf16.mxu0 0
        %1061 = vmatpush1.bf16.msra.mxu0 %v1051
        %1062 = vmatprep.subr.bf16.mxu0 0
        %1063 = vmatpush1.bf16.msra.mxu0 %v1052
        %1064 = vmatprep.subr.bf16.mxu0 0
        %1065 = vmatpush1.bf16.msra.mxu0 %v1053
        %1066 = vmatprep.subr.bf16.mxu0 0
        %1067 = vmatpush1.bf16.msra.mxu0 0
        %1068 = vmatprep.subr.bf16.mxu0 0
        %1069 = vmatpush1.bf16.msra.mxu0 0
        %1070 = vmatprep.subr.bf16.mxu0 0
        %1071 = vmatpush1.bf16.msra.mxu0 0
        %1072 = vmatprep.subr.bf16.mxu0 0
        %1073 = vmatpush1.bf16.msra.mxu0 0
        %1074 = vmatprep.subr.bf16.mxu0 0
        %1075 = vmatpush1.bf16.msra.mxu0 0
        %1076 = vmatprep.subr.bf16.mxu0 0
        %1077 = vmatpush1.bf16.msra.mxu0 0
        %1078 = vmatprep.subr.bf16.mxu0 0
        %1079 = vmatpush1.bf16.msra.mxu0 0
        %1080 = vmatprep.subr.bf16.mxu0 0
        %1081 = vmatpush1.bf16.msra.mxu0 0
        %1082 = vmatprep.subr.bf16.mxu0 0
        %1083 = vmatpush1.bf16.msra.mxu0 0
        %1084 = vmatprep.subr.bf16.mxu0 0
        %1085 = vmatpush1.bf16.msra.mxu0 0
        %1086 = vmatprep.subr.bf16.mxu0 0
        %1087 = vmatpush1.bf16.msra.mxu0 0
        %1088 = vmatprep.subr.bf16.mxu0 0
        %1089 = vmatpush1.bf16.msra.mxu0 0
        %1090 = vmatprep.mubr.bf16.mxu0 0
        %1091 = vmatmul.mubr.bf16.gmra.mrb[0].mxu0 %v966
        %v1092 = vpop.f32.mrb[0].mxu0
        %v1093 = vadd.f32 %v1032, %v1092
        %v1094 = vpop.f32.mrb[0].mxu0
        %v1095 = vpop.f32.mrb[0].mxu0
        %v1096 = vadd.f32 %v1032, %v1095
        %v1097 = vpop.f32.mrb[0].mxu0
        %1098 = vmatprep.mubr.bf16.mxu0 0
        %1099 = vmatmul.mubr.bf16.gmra.mrb[0].mxu0 %v969
        %v1100 = vpop.f32.mrb[0].mxu0
        %v1101 = vadd.f32 %v1032, %v1100
        %v1102 = vpop.f32.mrb[0].mxu0
        %v1103 = vpop.f32.mrb[0].mxu0
        %v1104 = vpop.f32.mrb[0].mxu0
        %1105 = vdwg.mxu0
        %v1106 = vld [vmem:[#allocation14] sm:$0xf]
        %v1107 = vld [vmem:[#allocation14 + $0x4] sm:$0xf]
        %v1108 = vld [vmem:[#allocation14 + $0x8] sm:$0xf]
        %v1109 = vld [vmem:[#allocation14 + $0xc] sm:$0xf]
        %v1110 = vld [vmem:[#allocation14 + $0x10] sm:$0xf]
        %v1111 = vld [vmem:[#allocation14 + $0x14] sm:$0xf]
        %v1112 = vld [vmem:[#allocation14 + $0x18] sm:$0xf]
        %v1113 = vld [vmem:[#allocation14 + $0x1c] sm:$0xf]
        %v1114 = vld [vmem:[#allocation16] sm:$0x1]
        %v1116 = vlaneseq
        %v1117 = vshrl.u32 %v1116, 7
        %v1118 = vsub.s32 0, %v1117
        %v1119 = vrot.slane %v1114, %v1118
        %v1129 = vunpack.c.l.b16 %v1106
        %v1130 = vunpack.c.l.b16 %v1107
        %v1131 = vunpack.c.l.b16 %v1108
        %v1132 = vunpack.c.l.b16 %v1109
        %v1133 = vunpack.c.l.b16 %v1110
        %v1134 = vunpack.c.l.b16 %v1111
        %v1135 = vunpack.c.l.b16 %v1112
        %v1136 = vunpack.c.l.b16 %v1113
        %v1137 = vpack.c.b16 %v1130, %v1129
        %v1138 = vpack.c.b16 %v1132, %v1131
        %v1139 = vpack.c.b16 %v1134, %v1133
        %v1140 = vpack.c.b16 %v1136, %v1135
        %1145 = vmatprep.subr.bf16.mxu0 0
        %1146 = vmatpush1.bf16.msra.mxu0 %v1137
        %1147 = vmatprep.subr.bf16.mxu0 0
        %1148 = vmatpush1.bf16.msra.mxu0 %v1138
        %1149 = vmatprep.subr.bf16.mxu0 0
        %1150 = vmatpush1.bf16.msra.mxu0 %v1139
        %1151 = vmatprep.subr.bf16.mxu0 0
        %1152 = vmatpush1.bf16.msra.mxu0 %v1140
        %1153 = vmatprep.subr.bf16.mxu0 0
        %1154 = vmatpush1.bf16.msra.mxu0 0
        %1155 = vmatprep.subr.bf16.mxu0 0
        %1156 = vmatpush1.bf16.msra.mxu0 0
        %1157 = vmatprep.subr.bf16.mxu0 0
        %1158 = vmatpush1.bf16.msra.mxu0 0
        %1159 = vmatprep.subr.bf16.mxu0 0
        %1160 = vmatpush1.bf16.msra.mxu0 0
        %1161 = vmatprep.subr.bf16.mxu0 0
        %1162 = vmatpush1.bf16.msra.mxu0 0
        %1163 = vmatprep.subr.bf16.mxu0 0
        %1164 = vmatpush1.bf16.msra.mxu0 0
        %1165 = vmatprep.subr.bf16.mxu0 0
        %1166 = vmatpush1.bf16.msra.mxu0 0
        %1167 = vmatprep.subr.bf16.mxu0 0
        %1168 = vmatpush1.bf16.msra.mxu0 0
        %1169 = vmatprep.subr.bf16.mxu0 0
        %1170 = vmatpush1.bf16.msra.mxu0 0
        %1171 = vmatprep.subr.bf16.mxu0 0
        %1172 = vmatpush1.bf16.msra.mxu0 0
        %1173 = vmatprep.subr.bf16.mxu0 0
        %1174 = vmatpush1.bf16.msra.mxu0 0
        %1175 = vmatprep.subr.bf16.mxu0 0
        %1176 = vmatpush1.bf16.msra.mxu0 0
        %1177 = vmatprep.mubr.bf16.mxu0 0
        %1178 = vmatmul.mubr.bf16.gmra.mrb[0].mxu0 %v966
        %v1179 = vpop.f32.mrb[0].mxu0
        %v1180 = vadd.f32 %v1119, %v1179
        %v1181 = vpop.f32.mrb[0].mxu0
        %v1182 = vpop.f32.mrb[0].mxu0
        %v1183 = vadd.f32 %v1119, %v1182
        %v1184 = vpop.f32.mrb[0].mxu0
        %1185 = vmatprep.mubr.bf16.mxu0 0
        %1186 = vmatmul.mubr.bf16.gmra.mrb[0].mxu0 %v969
        %v1187 = vpop.f32.mrb[0].mxu0
        %v1188 = vadd.f32 %v1119, %v1187
        %v1189 = vpop.f32.mrb[0].mxu0
        %v1190 = vpop.f32.mrb[0].mxu0
        %v1191 = vpop.f32.mrb[0].mxu0
        %1192 = vdwg.mxu0
        %v1193 = vld [vmem:[#allocation17] sm:$0xf]
        %v1194 = vld [vmem:[#allocation17 + $0x4] sm:$0xf]
        %v1195 = vld [vmem:[#allocation17 + $0x8] sm:$0xf]
        %v1196 = vld [vmem:[#allocation17 + $0xc] sm:$0xf]
        %v1197 = vld [vmem:[#allocation17 + $0x10] sm:$0xf]
        %v1198 = vld [vmem:[#allocation17 + $0x14] sm:$0xf]
        %v1199 = vld [vmem:[#allocation17 + $0x18] sm:$0xf]
        %v1200 = vld [vmem:[#allocation17 + $0x1c] sm:$0xf]
        %v1201 = vpack.c.bf16 %v1009, %v1006
        %v1202 = vpack.c.bf16 %v1014, %v1014
        %v1203 = vpack.c.bf16 %v1096, %v1093
        %v1204 = vpack.c.bf16 %v1101, %v1101
        %v1205 = vpack.c.bf16 %v1183, %v1180
        %v1206 = vpack.c.bf16 %v1188, %v1188
        %vm1207 = vcmask 130048
        %v1209 = vsel %vm1207, %v1201, 0
        %v1212 = vsel %vm1207, %v1202, 0
        %v1215 = vsel %vm1207, %v1203, 0
        %v1218 = vsel %vm1207, %v1204, 0
        %1220 = vmatprep.subr.bf16.mxu0 0
        %1221 = vmatpush1.bf16.xpose.msra.mxu0 %v1215
        %1222 = vmatprep.subr.bf16.mxu0 0
        %1223 = vmatpush1.bf16.xpose.msra.mxu0 %v1218
        %1224 = vmatprep.subr.bf16.mxu0 0
        %1225 = vmatpush1.bf16.xpose.msra.mxu0 0
        %1226 = vmatprep.subr.bf16.mxu0 0
        %1227 = vmatpush1.bf16.xpose.msra.mxu0 0
        %1228 = vmatprep.subr.bf16.mxu0 0
        %1229 = vmatpush1.bf16.xpose.msra.mxu0 0
        %1230 = vmatprep.subr.bf16.mxu0 0
        %1231 = vmatpush1.bf16.xpose.msra.mxu0 0
        %1232 = vmatprep.subr.bf16.mxu0 0
        %1233 = vmatpush1.bf16.xpose.msra.mxu0 0
        %1234 = vmatprep.subr.bf16.mxu0 0
        %1235 = vmatpush1.bf16.xpose.msra.mxu0 0
        %1236 = vmatprep.subr.bf16.mxu0 0
        %1237 = vmatpush1.bf16.xpose.msra.mxu0 0
        %1238 = vmatprep.subr.bf16.mxu0 0
        %1239 = vmatpush1.bf16.xpose.msra.mxu0 0
        %1240 = vmatprep.subr.bf16.mxu0 0
        %1241 = vmatpush1.bf16.xpose.msra.mxu0 0
        %1242 = vmatprep.subr.bf16.mxu0 0
        %1243 = vmatpush1.bf16.xpose.msra.mxu0 0
        %1244 = vmatprep.subr.bf16.mxu0 0
        %1245 = vmatpush1.bf16.xpose.msra.mxu0 0
        %1246 = vmatprep.subr.bf16.mxu0 0
        %1247 = vmatpush1.bf16.xpose.msra.mxu0 0
        %1248 = vmatprep.subr.bf16.mxu0 0
        %1249 = vmatpush1.bf16.xpose.msra.mxu0 0
        %1250 = vmatprep.subr.bf16.mxu0 0
        %1251 = vmatpush1.bf16.xpose.msra.mxu0 0
        %1252 = vmatprep.mubr.bf16.mxu0 0
        %1253 = vmatmul.mubr.bf16.gmra.mrb[0].mxu0 %v1209
        %v1254 = vpop.f32.mrb[0].mxu0
        %v1255 = vadd.f32 0.0, %v1254
        %v1256 = vpop.f32.mrb[0].mxu0
        %v1257 = vpop.f32.mrb[0].mxu0
        %v1258 = vadd.f32 0.0, %v1257
        %v1259 = vpop.f32.mrb[0].mxu0
        %1260 = vmatprep.mubr.bf16.mxu0 0
        %1261 = vmatmul.mubr.bf16.gmra.mrb[0].mxu0 %v1212
        %v1262 = vpop.f32.mrb[0].mxu0
        %v1263 = vadd.f32 0.0, %v1262
        %v1264 = vpop.f32.mrb[0].mxu0
        %v1265 = vpop.f32.mrb[0].mxu0
        %v1266 = vpop.f32.mrb[0].mxu0
        %1267 = vdwg.mxu0
        %vm1268 = vcmask 138240
        %v1269 = vsel %vm1268, %v1255, -inf
        %1270 = vmax.xlane.f32.xlu0 %v1269
        %v1271 = vpop.xlane.xlu0 %1270
        %v1272 = vsel %vm1268, %v1258, -inf
        %1273 = vmax.xlane.f32.xlu0 %v1272
        %v1274 = vpop.xlane.xlu0 %1273
        %vm1275 = vcmask 131072
        %v1276 = vsel %vm1275, %v1263, -inf
        %1277 = vmax.xlane.f32.xlu0 %v1276
        %v1278 = vpop.xlane.xlu0 %1277
        %v1279 = vsub.f32 %v1255, %v1271
        %v1280 = vsub.f32 %v1258, %v1274
        %v1281 = vsub.f32 %v1263, %v1278
        %v1282 = vmul.f32 %v1279, 1.442695
        %v1283 = vpow.pop %v1282
        %v1284 = vmul.f32 %v1280, 1.442695
        %v1285 = vpow.pop %v1284
        %v1286 = vmul.f32 %v1281, 1.442695
        %v1287 = vpow.pop %v1286
        %v1288 = vsel %vm1268, %v1283, 0.0
        %1289 = vadd.xlane.f32.xlu0 %v1288
        %v1290 = vpop.xlane.xlu0 %1289
        %v1291 = vsel %vm1268, %v1285, 0.0
        %1292 = vadd.xlane.f32.xlu0 %v1291
        %v1293 = vpop.xlane.xlu0 %1292
        %v1294 = vsel %vm1275, %v1287, 0.0
        %1295 = vadd.xlane.f32.xlu0 %v1294
        %v1296 = vpop.xlane.xlu0 %1295
        %v1297 = vrcp.pop %v1290
        %v1298 = vrcp.pop %v1293
        %v1299 = vrcp.pop %v1296
        %v1300 = vmul.f32 %v1283, %v1297
        %v1301 = vmul.f32 %v1285, %v1298
        %v1302 = vmul.f32 %v1287, %v1299
        %v1303 = vpack.c.bf16 %v1301, %v1300
        %v1304 = vpack.c.bf16 %v1302, %v1302
        %v1306 = vsel %vm1268, %v1303, 0
        %v1309 = vsel %vm1268, %v1304, 0
        %vm1311 = vcmask 1040384
        %v1312 = vsel 0, 4294967295, 65535
        %v1313 = vsel %vm1311, %v1312, 0
        %v1315 = vand.u32 %v1206, %v1313
        %1317 = vmatprep.subr.bf16.mxu0 0
        %1318 = vmatpush1.bf16.msra.mxu0 %v1205
        %1319 = vmatprep.subr.bf16.mxu0 0
        %1320 = vmatpush1.bf16.msra.mxu0 %v1315
        %1321 = vmatprep.subr.bf16.mxu0 0
        %1322 = vmatpush1.bf16.msra.mxu0 0
        %1323 = vmatprep.subr.bf16.mxu0 0
        %1324 = vmatpush1.bf16.msra.mxu0 0
        %1325 = vmatprep.subr.bf16.mxu0 0
        %1326 = vmatpush1.bf16.msra.mxu0 0
        %1327 = vmatprep.subr.bf16.mxu0 0
        %1328 = vmatpush1.bf16.msra.mxu0 0
        %1329 = vmatprep.subr.bf16.mxu0 0
        %1330 = vmatpush1.bf16.msra.mxu0 0
        %1331 = vmatprep.subr.bf16.mxu0 0
        %1332 = vmatpush1.bf16.msra.mxu0 0
        %1333 = vmatprep.subr.bf16.mxu0 0
        %1334 = vmatpush1.bf16.msra.mxu0 0
        %1335 = vmatprep.subr.bf16.mxu0 0
        %1336 = vmatpush1.bf16.msra.mxu0 0
        %1337 = vmatprep.subr.bf16.mxu0 0
        %1338 = vmatpush1.bf16.msra.mxu0 0
        %1339 = vmatprep.subr.bf16.mxu0 0
        %1340 = vmatpush1.bf16.msra.mxu0 0
        %1341 = vmatprep.subr.bf16.mxu0 0
        %1342 = vmatpush1.bf16.msra.mxu0 0
        %1343 = vmatprep.subr.bf16.mxu0 0
        %1344 = vmatpush1.bf16.msra.mxu0 0
        %1345 = vmatprep.subr.bf16.mxu0 0
        %1346 = vmatpush1.bf16.msra.mxu0 0
        %1347 = vmatprep.subr.bf16.mxu0 0
        %1348 = vmatpush1.bf16.msra.mxu0 0
        %1349 = vmatprep.mubr.bf16.mxu0 0
        %1350 = vmatmul.mubr.bf16.gmra.mrb[0].mxu0 %v1306
        %v1351 = vpop.f32.mrb[0].mxu0
        %v1352 = vadd.f32 0.0, %v1351
        %v1353 = vpop.f32.mrb[0].mxu0
        %v1354 = vpop.f32.mrb[0].mxu0
        %v1355 = vadd.f32 0.0, %v1354
        %v1356 = vpop.f32.mrb[0].mxu0
        %1357 = vmatprep.mubr.bf16.mxu0 0
        %1358 = vmatmul.mubr.bf16.gmra.mrb[0].mxu0 %v1309
        %v1359 = vpop.f32.mrb[0].mxu0
        %v1360 = vadd.f32 0.0, %v1359
        %v1361 = vpop.f32.mrb[0].mxu0
        %v1362 = vpop.f32.mrb[0].mxu0
        %v1363 = vpop.f32.mrb[0].mxu0
        %1364 = vdwg.mxu0
        %v1365 = vpack.c.bf16 %v1355, %v1352
        %v1366 = vpack.c.bf16 %v1360, %v1360
        %1369 = vrot.lane.b32.xlu0 %v1201, 112
        %v1370 = vpop.permute.xlu0 %1369
        %1371 = vrot.lane.b32.xlu0 %v1202, 112
        %v1372 = vpop.permute.xlu0 %1371
        %1375 = vrot.lane.b32.xlu0 %v1203, 112
        %v1376 = vpop.permute.xlu0 %1375
        %1377 = vrot.lane.b32.xlu0 %v1204, 112
        %v1378 = vpop.permute.xlu0 %1377
        %v1380 = vsel %vm1207, %v1370, 0
        %v1383 = vsel %vm1207, %v1372, 0
        %v1386 = vsel %vm1207, %v1376, 0
        %v1389 = vsel %vm1207, %v1378, 0
        %1391 = vmatprep.subr.bf16.mxu0 0
        %1392 = vmatpush1.bf16.xpose.msra.mxu0 %v1386
        %1393 = vmatprep.subr.bf16.mxu0 0
        %1394 = vmatpush1.bf16.xpose.msra.mxu0 %v1389
        %1395 = vmatprep.subr.bf16.mxu0 0
        %1396 = vmatpush1.bf16.xpose.msra.mxu0 0
        %1397 = vmatprep.subr.bf16.mxu0 0
        %1398 = vmatpush1.bf16.xpose.msra.mxu0 0
        %1399 = vmatprep.subr.bf16.mxu0 0
        %1400 = vmatpush1.bf16.xpose.msra.mxu0 0
        %1401 = vmatprep.subr.bf16.mxu0 0
        %1402 = vmatpush1.bf16.xpose.msra.mxu0 0
        %1403 = vmatprep.subr.bf16.mxu0 0
        %1404 = vmatpush1.bf16.xpose.msra.mxu0 0
        %1405 = vmatprep.subr.bf16.mxu0 0
        %1406 = vmatpush1.bf16.xpose.msra.mxu0 0
        %1407 = vmatprep.subr.bf16.mxu0 0
        %1408 = vmatpush1.bf16.xpose.msra.mxu0 0
        %1409 = vmatprep.subr.bf16.mxu0 0
        %1410 = vmatpush1.bf16.xpose.msra.mxu0 0
        %1411 = vmatprep.subr.bf16.mxu0 0
        %1412 = vmatpush1.bf16.xpose.msra.mxu0 0
        %1413 = vmatprep.subr.bf16.mxu0 0
        %1414 = vmatpush1.bf16.xpose.msra.mxu0 0
        %1415 = vmatprep.subr.bf16.mxu0 0
        %1416 = vmatpush1.bf16.xpose.msra.mxu0 0
        %1417 = vmatprep.subr.bf16.mxu0 0
        %1418 = vmatpush1.bf16.xpose.msra.mxu0 0
        %1419 = vmatprep.subr.bf16.mxu0 0
        %1420 = vmatpush1.bf16.xpose.msra.mxu0 0
        %1421 = vmatprep.subr.bf16.mxu0 0
        %1422 = vmatpush1.bf16.xpose.msra.mxu0 0
        %1423 = vmatprep.mubr.bf16.mxu0 0
        %1424 = vmatmul.mubr.bf16.gmra.mrb[0].mxu0 %v1380
        %v1425 = vpop.f32.mrb[0].mxu0
        %v1426 = vadd.f32 0.0, %v1425
        %v1427 = vpop.f32.mrb[0].mxu0
        %v1428 = vpop.f32.mrb[0].mxu0
        %v1429 = vadd.f32 0.0, %v1428
        %v1430 = vpop.f32.mrb[0].mxu0
        %1431 = vmatprep.mubr.bf16.mxu0 0
        %1432 = vmatmul.mubr.bf16.gmra.mrb[0].mxu0 %v1383
        %v1433 = vpop.f32.mrb[0].mxu0
        %v1434 = vadd.f32 0.0, %v1433
        %v1435 = vpop.f32.mrb[0].mxu0
        %v1436 = vpop.f32.mrb[0].mxu0
        %v1437 = vpop.f32.mrb[0].mxu0
        %1438 = vdwg.mxu0
        %v1439 = vsel %vm1268, %v1426, -inf
        %1440 = vmax.xlane.f32.xlu0 %v1439
        %v1441 = vpop.xlane.xlu0 %1440
        %v1442 = vsel %vm1268, %v1429, -inf
        %1443 = vmax.xlane.f32.xlu0 %v1442
        %v1444 = vpop.xlane.xlu0 %1443
        %v1445 = vsel %vm1275, %v1434, -inf
        %1446 = vmax.xlane.f32.xlu0 %v1445
        %v1447 = vpop.xlane.xlu0 %1446
        %v1448 = vsub.f32 %v1426, %v1441
        %v1449 = vsub.f32 %v1429, %v1444
        %v1450 = vsub.f32 %v1434, %v1447
        %v1451 = vmul.f32 %v1448, 1.442695
        %v1452 = vpow.pop %v1451
        %v1453 = vmul.f32 %v1449, 1.442695
        %v1454 = vpow.pop %v1453
        %v1455 = vmul.f32 %v1450, 1.442695
        %v1456 = vpow.pop %v1455
        %v1457 = vsel %vm1268, %v1452, 0.0
        %1458 = vadd.xlane.f32.xlu0 %v1457
        %v1459 = vpop.xlane.xlu0 %1458
        %v1460 = vsel %vm1268, %v1454, 0.0
        %1461 = vadd.xlane.f32.xlu0 %v1460
        %v1462 = vpop.xlane.xlu0 %1461
        %v1463 = vsel %vm1275, %v1456, 0.0
        %1464 = vadd.xlane.f32.xlu0 %v1463
        %v1465 = vpop.xlane.xlu0 %1464
        %v1466 = vrcp.pop %v1459
        %v1467 = vrcp.pop %v1462
        %v1468 = vrcp.pop %v1465
        %v1469 = vmul.f32 %v1452, %v1466
        %v1470 = vmul.f32 %v1454, %v1467
        %v1471 = vmul.f32 %v1456, %v1468
        %v1472 = vpack.c.bf16 %v1470, %v1469
        %v1473 = vpack.c.bf16 %v1471, %v1471
        %1476 = vrot.lane.b32.xlu0 %v1205, 112
        %v1477 = vpop.permute.xlu0 %1476
        %1478 = vrot.lane.b32.xlu0 %v1206, 112
        %v1479 = vpop.permute.xlu0 %1478
        %v1482 = vsel %vm1268, %v1472, 0
        %v1485 = vsel %vm1268, %v1473, 0
        %v1488 = vand.u32 %v1479, %v1313
        %1490 = vmatprep.subr.bf16.mxu0 0
        %1491 = vmatpush1.bf16.msra.mxu0 %v1477
        %1492 = vmatprep.subr.bf16.mxu0 0
        %1493 = vmatpush1.bf16.msra.mxu0 %v1488
        %1494 = vmatprep.subr.bf16.mxu0 0
        %1495 = vmatpush1.bf16.msra.mxu0 0
        %1496 = vmatprep.subr.bf16.mxu0 0
        %1497 = vmatpush1.bf16.msra.mxu0 0
        %1498 = vmatprep.subr.bf16.mxu0 0
        %1499 = vmatpush1.bf16.msra.mxu0 0
        %1500 = vmatprep.subr.bf16.mxu0 0
        %1501 = vmatpush1.bf16.msra.mxu0 0
        %1502 = vmatprep.subr.bf16.mxu0 0
        %1503 = vmatpush1.bf16.msra.mxu0 0
        %1504 = vmatprep.subr.bf16.mxu0 0
        %1505 = vmatpush1.bf16.msra.mxu0 0
        %1506 = vmatprep.subr.bf16.mxu0 0
        %1507 = vmatpush1.bf16.msra.mxu0 0
        %1508 = vmatprep.subr.bf16.mxu0 0
        %1509 = vmatpush1.bf16.msra.mxu0 0
        %1510 = vmatprep.subr.bf16.mxu0 0
        %1511 = vmatpush1.bf16.msra.mxu0 0
        %1512 = vmatprep.subr.bf16.mxu0 0
        %1513 = vmatpush1.bf16.msra.mxu0 0
        %1514 = vmatprep.subr.bf16.mxu0 0
        %1515 = vmatpush1.bf16.msra.mxu0 0
        %1516 = vmatprep.subr.bf16.mxu0 0
        %1517 = vmatpush1.bf16.msra.mxu0 0
        %1518 = vmatprep.subr.bf16.mxu0 0
        %1519 = vmatpush1.bf16.msra.mxu0 0
        %1520 = vmatprep.subr.bf16.mxu0 0
        %1521 = vmatpush1.bf16.msra.mxu0 0
        %1522 = vmatprep.mubr.bf16.mxu0 0
        %1523 = vmatmul.mubr.bf16.gmra.mrb[0].mxu0 %v1482
        %v1524 = vpop.f32.mrb[0].mxu0
        %v1525 = vadd.f32 0.0, %v1524
        %v1526 = vpop.f32.mrb[0].mxu0
        %v1527 = vpop.f32.mrb[0].mxu0
        %v1528 = vadd.f32 0.0, %v1527
        %v1529 = vpop.f32.mrb[0].mxu0
        %1530 = vmatprep.mubr.bf16.mxu0 0
        %1531 = vmatmul.mubr.bf16.gmra.mrb[0].mxu0 %v1485
        %v1532 = vpop.f32.mrb[0].mxu0
        %v1533 = vadd.f32 0.0, %v1532
        %v1534 = vpop.f32.mrb[0].mxu0
        %v1535 = vpop.f32.mrb[0].mxu0
        %v1536 = vpop.f32.mrb[0].mxu0
        %1537 = vdwg.mxu0
        %v1538 = vpack.c.bf16 %v1528, %v1525
        %v1539 = vpack.c.bf16 %v1533, %v1533
        %v1542 = vunpack.c.l.b16 %v1195
        %v1543 = vunpack.c.l.b16 %v1196
        %v1544 = vpack.c.b16 %v1543, %v1542
        %v1547 = vsel %vm1207, %v1538, 0
        %v1550 = vsel %vm1207, %v1539, 0
        %1552 = vmatprep.subr.bf16.mxu0 0
        %1553 = vmatpush1.bf16.msra.mxu0 %v1544
        %1554 = vmatprep.subr.bf16.mxu0 0
        %1555 = vmatpush1.bf16.msra.mxu0 0
        %1556 = vmatprep.subr.bf16.mxu0 0
        %1557 = vmatpush1.bf16.msra.mxu0 0
        %1558 = vmatprep.subr.bf16.mxu0 0
        %1559 = vmatpush1.bf16.msra.mxu0 0
        %1560 = vmatprep.subr.bf16.mxu0 0
        %1561 = vmatpush1.bf16.msra.mxu0 0
        %1562 = vmatprep.subr.bf16.mxu0 0
        %1563 = vmatpush1.bf16.msra.mxu0 0
        %1564 = vmatprep.subr.bf16.mxu0 0
        %1565 = vmatpush1.bf16.msra.mxu0 0
        %1566 = vmatprep.subr.bf16.mxu0 0
        %1567 = vmatpush1.bf16.msra.mxu0 0
        %1568 = vmatprep.subr.bf16.mxu0 0
        %1569 = vmatpush1.bf16.msra.mxu0 0
        %1570 = vmatprep.subr.bf16.mxu0 0
        %1571 = vmatpush1.bf16.msra.mxu0 0
        %1572 = vmatprep.subr.bf16.mxu0 0
        %1573 = vmatpush1.bf16.msra.mxu0 0
        %1574 = vmatprep.subr.bf16.mxu0 0
        %1575 = vmatpush1.bf16.msra.mxu0 0
        %1576 = vmatprep.subr.bf16.mxu0 0
        %1577 = vmatpush1.bf16.msra.mxu0 0
        %1578 = vmatprep.subr.bf16.mxu0 0
        %1579 = vmatpush1.bf16.msra.mxu0 0
        %1580 = vmatprep.subr.bf16.mxu0 0
        %1581 = vmatpush1.bf16.msra.mxu0 0
        %1582 = vmatprep.subr.bf16.mxu0 0
        %1583 = vmatpush1.bf16.msra.mxu0 0
        %1584 = vmatprep.mubr.bf16.mxu0 0
        %1585 = vmatmul.mubr.bf16.gmra.mrb[0].mxu0 %v1547
        %v1586 = vpop.f32.mrb[0].mxu0
        %v1587 = vadd.f32 0.0, %v1586
        %v1588 = vpop.f32.mrb[0].mxu0
        %v1589 = vpop.f32.mrb[0].mxu0
        %v1590 = vadd.f32 0.0, %v1589
        %v1591 = vpop.f32.mrb[0].mxu0
        %1592 = vmatprep.mubr.bf16.mxu0 0
        %1593 = vmatmul.mubr.bf16.gmra.mrb[0].mxu0 %v1550
        %v1594 = vpop.f32.mrb[0].mxu0
        %v1595 = vadd.f32 0.0, %v1594
        %v1596 = vpop.f32.mrb[0].mxu0
        %v1597 = vpop.f32.mrb[0].mxu0
        %v1598 = vpop.f32.mrb[0].mxu0
        %1599 = vdwg.mxu0
        %v1602 = vunpack.c.l.b16 %v1193
        %v1603 = vunpack.c.l.b16 %v1194
        %v1604 = vpack.c.b16 %v1603, %v1602
        %v1607 = vsel %vm1207, %v1365, 0
        %v1610 = vsel %vm1207, %v1366, 0
        %1612 = vmatprep.subr.bf16.mxu0 0
        %1613 = vmatpush1.bf16.msra.mxu0 %v1604
        %1614 = vmatprep.subr.bf16.mxu0 0
        %1615 = vmatpush1.bf16.msra.mxu0 0
        %1616 = vmatprep.subr.bf16.mxu0 0
        %1617 = vmatpush1.bf16.msra.mxu0 0
        %1618 = vmatprep.subr.bf16.mxu0 0
        %1619 = vmatpush1.bf16.msra.mxu0 0
        %1620 = vmatprep.subr.bf16.mxu0 0
        %1621 = vmatpush1.bf16.msra.mxu0 0
        %1622 = vmatprep.subr.bf16.mxu0 0
        %1623 = vmatpush1.bf16.msra.mxu0 0
        %1624 = vmatprep.subr.bf16.mxu0 0
        %1625 = vmatpush1.bf16.msra.mxu0 0
        %1626 = vmatprep.subr.bf16.mxu0 0
        %1627 = vmatpush1.bf16.msra.mxu0 0
        %1628 = vmatprep.subr.bf16.mxu0 0
        %1629 = vmatpush1.bf16.msra.mxu0 0
        %1630 = vmatprep.subr.bf16.mxu0 0
        %1631 = vmatpush1.bf16.msra.mxu0 0
        %1632 = vmatprep.subr.bf16.mxu0 0
        %1633 = vmatpush1.bf16.msra.mxu0 0
        %1634 = vmatprep.subr.bf16.mxu0 0
        %1635 = vmatpush1.bf16.msra.mxu0 0
        %1636 = vmatprep.subr.bf16.mxu0 0
        %1637 = vmatpush1.bf16.msra.mxu0 0
        %1638 = vmatprep.subr.bf16.mxu0 0
        %1639 = vmatpush1.bf16.msra.mxu0 0
        %1640 = vmatprep.subr.bf16.mxu0 0
        %1641 = vmatpush1.bf16.msra.mxu0 0
        %1642 = vmatprep.subr.bf16.mxu0 0
        %1643 = vmatpush1.bf16.msra.mxu0 0
        %1644 = vmatprep.mubr.bf16.mxu0 0
        %1645 = vmatmul.mubr.bf16.gmra.mrb[0].mxu0 %v1607
        %v1646 = vpop.f32.mrb[0].mxu0
        %v1647 = vadd.f32 %v1587, %v1646
        %v1648 = vpop.f32.mrb[0].mxu0
        %v1649 = vpop.f32.mrb[0].mxu0
        %v1650 = vadd.f32 %v1590, %v1649
        %v1651 = vpop.f32.mrb[0].mxu0
        %1652 = vmatprep.mubr.bf16.mxu0 0
        %1653 = vmatmul.mubr.bf16.gmra.mrb[0].mxu0 %v1610
        %v1654 = vpop.f32.mrb[0].mxu0
        %v1655 = vadd.f32 %v1595, %v1654
        %v1656 = vpop.f32.mrb[0].mxu0
        %v1657 = vpop.f32.mrb[0].mxu0
        %v1658 = vpop.f32.mrb[0].mxu0
        %1659 = vdwg.mxu0
        %1660 = vrot.lane.b32.xlu0 %v1201, 96
        %v1661 = vpop.permute.xlu0 %1660
        %1662 = vrot.lane.b32.xlu0 %v1202, 96
        %v1663 = vpop.permute.xlu0 %1662
        %1664 = vrot.lane.b32.xlu0 %v1203, 96
        %v1665 = vpop.permute.xlu0 %1664
        %1666 = vrot.lane.b32.xlu0 %v1204, 96
        %v1667 = vpop.permute.xlu0 %1666
        %v1669 = vsel %vm1207, %v1661, 0
        %v1672 = vsel %vm1207, %v1663, 0
        %v1675 = vsel %vm1207, %v1665, 0
        %v1678 = vsel %vm1207, %v1667, 0
        %1680 = vmatprep.subr.bf16.mxu0 0
        %1681 = vmatpush1.bf16.xpose.msra.mxu0 %v1675
        %1682 = vmatprep.subr.bf16.mxu0 0
        %1683 = vmatpush1.bf16.xpose.msra.mxu0 %v1678
        %1684 = vmatprep.subr.bf16.mxu0 0
        %1685 = vmatpush1.bf16.xpose.msra.mxu0 0
        %1686 = vmatprep.subr.bf16.mxu0 0
        %1687 = vmatpush1.bf16.xpose.msra.mxu0 0
        %1688 = vmatprep.subr.bf16.mxu0 0
        %1689 = vmatpush1.bf16.xpose.msra.mxu0 0
        %1690 = vmatprep.subr.bf16.mxu0 0
        %1691 = vmatpush1.bf16.xpose.msra.mxu0 0
        %1692 = vmatprep.subr.bf16.mxu0 0
        %1693 = vmatpush1.bf16.xpose.msra.mxu0 0
        %1694 = vmatprep.subr.bf16.mxu0 0
        %1695 = vmatpush1.bf16.xpose.msra.mxu0 0
        %1696 = vmatprep.subr.bf16.mxu0 0
        %1697 = vmatpush1.bf16.xpose.msra.mxu0 0
        %1698 = vmatprep.subr.bf16.mxu0 0
        %1699 = vmatpush1.bf16.xpose.msra.mxu0 0
        %1700 = vmatprep.subr.bf16.mxu0 0
        %1701 = vmatpush1.bf16.xpose.msra.mxu0 0
        %1702 = vmatprep.subr.bf16.mxu0 0
        %1703 = vmatpush1.bf16.xpose.msra.mxu0 0
        %1704 = vmatprep.subr.bf16.mxu0 0
        %1705 = vmatpush1.bf16.xpose.msra.mxu0 0
        %1706 = vmatprep.subr.bf16.mxu0 0
        %1707 = vmatpush1.bf16.xpose.msra.mxu0 0
        %1708 = vmatprep.subr.bf16.mxu0 0
        %1709 = vmatpush1.bf16.xpose.msra.mxu0 0
        %1710 = vmatprep.subr.bf16.mxu0 0
        %1711 = vmatpush1.bf16.xpose.msra.mxu0 0
        %1712 = vmatprep.mubr.bf16.mxu0 0
        %1713 = vmatmul.mubr.bf16.gmra.mrb[0].mxu0 %v1669
        %v1714 = vpop.f32.mrb[0].mxu0
        %v1715 = vadd.f32 0.0, %v1714
        %v1716 = vpop.f32.mrb[0].mxu0
        %v1717 = vpop.f32.mrb[0].mxu0
        %v1718 = vadd.f32 0.0, %v1717
        %v1719 = vpop.f32.mrb[0].mxu0
        %1720 = vmatprep.mubr.bf16.mxu0 0
        %1721 = vmatmul.mubr.bf16.gmra.mrb[0].mxu0 %v1672
        %v1722 = vpop.f32.mrb[0].mxu0
        %v1723 = vadd.f32 0.0, %v1722
        %v1724 = vpop.f32.mrb[0].mxu0
        %v1725 = vpop.f32.mrb[0].mxu0
        %v1726 = vpop.f32.mrb[0].mxu0
        %1727 = vdwg.mxu0
        %v1728 = vsel %vm1268, %v1715, -inf
        %1729 = vmax.xlane.f32.xlu0 %v1728
        %v1730 = vpop.xlane.xlu0 %1729
        %v1731 = vsel %vm1268, %v1718, -inf
        %1732 = vmax.xlane.f32.xlu0 %v1731
        %v1733 = vpop.xlane.xlu0 %1732
        %v1734 = vsel %vm1275, %v1723, -inf
        %1735 = vmax.xlane.f32.xlu0 %v1734
        %v1736 = vpop.xlane.xlu0 %1735
        %v1737 = vsub.f32 %v1715, %v1730
        %v1738 = vsub.f32 %v1718, %v1733
        %v1739 = vsub.f32 %v1723, %v1736
        %v1740 = vmul.f32 %v1737, 1.442695
        %v1741 = vpow.pop %v1740
        %v1742 = vmul.f32 %v1738, 1.442695
        %v1743 = vpow.pop %v1742
        %v1744 = vmul.f32 %v1739, 1.442695
        %v1745 = vpow.pop %v1744
        %v1746 = vsel %vm1268, %v1741, 0.0
        %1747 = vadd.xlane.f32.xlu0 %v1746
        %v1748 = vpop.xlane.xlu0 %1747
        %v1749 = vsel %vm1268, %v1743, 0.0
        %1750 = vadd.xlane.f32.xlu0 %v1749
        %v1751 = vpop.xlane.xlu0 %1750
        %v1752 = vsel %vm1275, %v1745, 0.0
        %1753 = vadd.xlane.f32.xlu0 %v1752
        %v1754 = vpop.xlane.xlu0 %1753
        %v1755 = vrcp.pop %v1748
        %v1756 = vrcp.pop %v1751
        %v1757 = vrcp.pop %v1754
        %v1758 = vmul.f32 %v1741, %v1755
        %v1759 = vmul.f32 %v1743, %v1756
        %v1760 = vmul.f32 %v1745, %v1757
        %v1761 = vpack.c.bf16 %v1759, %v1758
        %v1762 = vpack.c.bf16 %v1760, %v1760
        %1763 = vrot.lane.b32.xlu0 %v1205, 96
        %v1764 = vpop.permute.xlu0 %1763
        %1765 = vrot.lane.b32.xlu0 %v1206, 96
        %v1766 = vpop.permute.xlu0 %1765
        %v1769 = vsel %vm1268, %v1761, 0
        %v1772 = vsel %vm1268, %v1762, 0
        %v1775 = vand.u32 %v1766, %v1313
        %1777 = vmatprep.subr.bf16.mxu0 0
        %1778 = vmatpush1.bf16.msra.mxu0 %v1764
        %1779 = vmatprep.subr.bf16.mxu0 0
        %1780 = vmatpush1.bf16.msra.mxu0 %v1775
        %1781 = vmatprep.subr.bf16.mxu0 0
        %1782 = vmatpush1.bf16.msra.mxu0 0
        %1783 = vmatprep.subr.bf16.mxu0 0
        %1784 = vmatpush1.bf16.msra.mxu0 0
        %1785 = vmatprep.subr.bf16.mxu0 0
        %1786 = vmatpush1.bf16.msra.mxu0 0
        %1787 = vmatprep.subr.bf16.mxu0 0
        %1788 = vmatpush1.bf16.msra.mxu0 0
        %1789 = vmatprep.subr.bf16.mxu0 0
        %1790 = vmatpush1.bf16.msra.mxu0 0
        %1791 = vmatprep.subr.bf16.mxu0 0
        %1792 = vmatpush1.bf16.msra.mxu0 0
        %1793 = vmatprep.subr.bf16.mxu0 0
        %1794 = vmatpush1.bf16.msra.mxu0 0
        %1795 = vmatprep.subr.bf16.mxu0 0
        %1796 = vmatpush1.bf16.msra.mxu0 0
        %1797 = vmatprep.subr.bf16.mxu0 0
        %1798 = vmatpush1.bf16.msra.mxu0 0
        %1799 = vmatprep.subr.bf16.mxu0 0
        %1800 = vmatpush1.bf16.msra.mxu0 0
        %1801 = vmatprep.subr.bf16.mxu0 0
        %1802 = vmatpush1.bf16.msra.mxu0 0
        %1803 = vmatprep.subr.bf16.mxu0 0
        %1804 = vmatpush1.bf16.msra.mxu0 0
        %1805 = vmatprep.subr.bf16.mxu0 0
        %1806 = vmatpush1.bf16.msra.mxu0 0
        %1807 = vmatprep.subr.bf16.mxu0 0
        %1808 = vmatpush1.bf16.msra.mxu0 0
        %1809 = vmatprep.mubr.bf16.mxu0 0
        %1810 = vmatmul.mubr.bf16.gmra.mrb[0].mxu0 %v1769
        %v1811 = vpop.f32.mrb[0].mxu0
        %v1812 = vadd.f32 0.0, %v1811
        %v1813 = vpop.f32.mrb[0].mxu0
        %v1814 = vpop.f32.mrb[0].mxu0
        %v1815 = vadd.f32 0.0, %v1814
        %v1816 = vpop.f32.mrb[0].mxu0
        %1817 = vmatprep.mubr.bf16.mxu0 0
        %1818 = vmatmul.mubr.bf16.gmra.mrb[0].mxu0 %v1772
        %v1819 = vpop.f32.mrb[0].mxu0
        %v1820 = vadd.f32 0.0, %v1819
        %v1821 = vpop.f32.mrb[0].mxu0
        %v1822 = vpop.f32.mrb[0].mxu0
        %v1823 = vpop.f32.mrb[0].mxu0
        %1824 = vdwg.mxu0
        %v1825 = vpack.c.bf16 %v1815, %v1812
        %v1826 = vpack.c.bf16 %v1820, %v1820
        %v1829 = vunpack.c.l.b16 %v1197
        %v1830 = vunpack.c.l.b16 %v1198
        %v1831 = vpack.c.b16 %v1830, %v1829
        %v1834 = vsel %vm1207, %v1825, 0
        %v1837 = vsel %vm1207, %v1826, 0
        %1839 = vmatprep.subr.bf16.mxu0 0
        %1840 = vmatpush1.bf16.msra.mxu0 %v1831
        %1841 = vmatprep.subr.bf16.mxu0 0
        %1842 = vmatpush1.bf16.msra.mxu0 0
        %1843 = vmatprep.subr.bf16.mxu0 0
        %1844 = vmatpush1.bf16.msra.mxu0 0
        %1845 = vmatprep.subr.bf16.mxu0 0
        %1846 = vmatpush1.bf16.msra.mxu0 0
        %1847 = vmatprep.subr.bf16.mxu0 0
        %1848 = vmatpush1.bf16.msra.mxu0 0
        %1849 = vmatprep.subr.bf16.mxu0 0
        %1850 = vmatpush1.bf16.msra.mxu0 0
        %1851 = vmatprep.subr.bf16.mxu0 0
        %1852 = vmatpush1.bf16.msra.mxu0 0
        %1853 = vmatprep.subr.bf16.mxu0 0
        %1854 = vmatpush1.bf16.msra.mxu0 0
        %1855 = vmatprep.subr.bf16.mxu0 0
        %1856 = vmatpush1.bf16.msra.mxu0 0
        %1857 = vmatprep.subr.bf16.mxu0 0
        %1858 = vmatpush1.bf16.msra.mxu0 0
        %1859 = vmatprep.subr.bf16.mxu0 0
        %1860 = vmatpush1.bf16.msra.mxu0 0
        %1861 = vmatprep.subr.bf16.mxu0 0
        %1862 = vmatpush1.bf16.msra.mxu0 0
        %1863 = vmatprep.subr.bf16.mxu0 0
        %1864 = vmatpush1.bf16.msra.mxu0 0
        %1865 = vmatprep.subr.bf16.mxu0 0
        %1866 = vmatpush1.bf16.msra.mxu0 0
        %1867 = vmatprep.subr.bf16.mxu0 0
        %1868 = vmatpush1.bf16.msra.mxu0 0
        %1869 = vmatprep.subr.bf16.mxu0 0
        %1870 = vmatpush1.bf16.msra.mxu0 0
        %1871 = vmatprep.mubr.bf16.mxu0 0
        %1872 = vmatmul.mubr.bf16.gmra.mrb[0].mxu0 %v1834
        %v1873 = vpop.f32.mrb[0].mxu0
        %v1874 = vadd.f32 0.0, %v1873
        %v1875 = vpop.f32.mrb[0].mxu0
        %v1876 = vpop.f32.mrb[0].mxu0
        %v1877 = vadd.f32 0.0, %v1876
        %v1878 = vpop.f32.mrb[0].mxu0
        %1879 = vmatprep.mubr.bf16.mxu0 0
        %1880 = vmatmul.mubr.bf16.gmra.mrb[0].mxu0 %v1837
        %v1881 = vpop.f32.mrb[0].mxu0
        %v1882 = vadd.f32 0.0, %v1881
        %v1883 = vpop.f32.mrb[0].mxu0
        %v1884 = vpop.f32.mrb[0].mxu0
        %v1885 = vpop.f32.mrb[0].mxu0
        %1886 = vdwg.mxu0
        %v1887 = vadd.f32 %v1647, %v1874
        %v1888 = vadd.f32 %v1650, %v1877
        %v1889 = vadd.f32 %v1655, %v1882
        %1890 = vrot.lane.b32.xlu0 %v1201, 80
        %v1891 = vpop.permute.xlu0 %1890
        %1892 = vrot.lane.b32.xlu0 %v1202, 80
        %v1893 = vpop.permute.xlu0 %1892
        %1894 = vrot.lane.b32.xlu0 %v1203, 80
        %v1895 = vpop.permute.xlu0 %1894
        %1896 = vrot.lane.b32.xlu0 %v1204, 80
        %v1897 = vpop.permute.xlu0 %1896
        %v1899 = vsel %vm1207, %v1891, 0
        %v1902 = vsel %vm1207, %v1893, 0
        %v1905 = vsel %vm1207, %v1895, 0
        %v1908 = vsel %vm1207, %v1897, 0
        %1910 = vmatprep.subr.bf16.mxu0 0
        %1911 = vmatpush1.bf16.xpose.msra.mxu0 %v1905
        %1912 = vmatprep.subr.bf16.mxu0 0
        %1913 = vmatpush1.bf16.xpose.msra.mxu0 %v1908
        %1914 = vmatprep.subr.bf16.mxu0 0
        %1915 = vmatpush1.bf16.xpose.msra.mxu0 0
        %1916 = vmatprep.subr.bf16.mxu0 0
        %1917 = vmatpush1.bf16.xpose.msra.mxu0 0
        %1918 = vmatprep.subr.bf16.mxu0 0
        %1919 = vmatpush1.bf16.xpose.msra.mxu0 0
        %1920 = vmatprep.subr.bf16.mxu0 0
        %1921 = vmatpush1.bf16.xpose.msra.mxu0 0
        %1922 = vmatprep.subr.bf16.mxu0 0
        %1923 = vmatpush1.bf16.xpose.msra.mxu0 0
        %1924 = vmatprep.subr.bf16.mxu0 0
        %1925 = vmatpush1.bf16.xpose.msra.mxu0 0
        %1926 = vmatprep.subr.bf16.mxu0 0
        %1927 = vmatpush1.bf16.xpose.msra.mxu0 0
        %1928 = vmatprep.subr.bf16.mxu0 0
        %1929 = vmatpush1.bf16.xpose.msra.mxu0 0
        %1930 = vmatprep.subr.bf16.mxu0 0
        %1931 = vmatpush1.bf16.xpose.msra.mxu0 0
        %1932 = vmatprep.subr.bf16.mxu0 0
        %1933 = vmatpush1.bf16.xpose.msra.mxu0 0
        %1934 = vmatprep.subr.bf16.mxu0 0
        %1935 = vmatpush1.bf16.xpose.msra.mxu0 0
        %1936 = vmatprep.subr.bf16.mxu0 0
        %1937 = vmatpush1.bf16.xpose.msra.mxu0 0
        %1938 = vmatprep.subr.bf16.mxu0 0
        %1939 = vmatpush1.bf16.xpose.msra.mxu0 0
        %1940 = vmatprep.subr.bf16.mxu0 0
        %1941 = vmatpush1.bf16.xpose.msra.mxu0 0
        %1942 = vmatprep.mubr.bf16.mxu0 0
        %1943 = vmatmul.mubr.bf16.gmra.mrb[0].mxu0 %v1899
        %v1944 = vpop.f32.mrb[0].mxu0
        %v1945 = vadd.f32 0.0, %v1944
        %v1946 = vpop.f32.mrb[0].mxu0
        %v1947 = vpop.f32.mrb[0].mxu0
        %v1948 = vadd.f32 0.0, %v1947
        %v1949 = vpop.f32.mrb[0].mxu0
        %1950 = vmatprep.mubr.bf16.mxu0 0
        %1951 = vmatmul.mubr.bf16.gmra.mrb[0].mxu0 %v1902
        %v1952 = vpop.f32.mrb[0].mxu0
        %v1953 = vadd.f32 0.0, %v1952
        %v1954 = vpop.f32.mrb[0].mxu0
        %v1955 = vpop.f32.mrb[0].mxu0
        %v1956 = vpop.f32.mrb[0].mxu0
        %1957 = vdwg.mxu0
        %v1958 = vsel %vm1268, %v1945, -inf
        %1959 = vmax.xlane.f32.xlu0 %v1958
        %v1960 = vpop.xlane.xlu0 %1959
        %v1961 = vsel %vm1268, %v1948, -inf
        %1962 = vmax.xlane.f32.xlu0 %v1961
        %v1963 = vpop.xlane.xlu0 %1962
        %v1964 = vsel %vm1275, %v1953, -inf
        %1965 = vmax.xlane.f32.xlu0 %v1964
        %v1966 = vpop.xlane.xlu0 %1965
        %v1967 = vsub.f32 %v1945, %v1960
        %v1968 = vsub.f32 %v1948, %v1963
        %v1969 = vsub.f32 %v1953, %v1966
        %v1970 = vmul.f32 %v1967, 1.442695
        %v1971 = vpow.pop %v1970
        %v1972 = vmul.f32 %v1968, 1.442695
        %v1973 = vpow.pop %v1972
        %v1974 = vmul.f32 %v1969, 1.442695
        %v1975 = vpow.pop %v1974
        %v1976 = vsel %vm1268, %v1971, 0.0
        %1977 = vadd.xlane.f32.xlu0 %v1976
        %v1978 = vpop.xlane.xlu0 %1977
        %v1979 = vsel %vm1268, %v1973, 0.0
        %1980 = vadd.xlane.f32.xlu0 %v1979
        %v1981 = vpop.xlane.xlu0 %1980
        %v1982 = vsel %vm1275, %v1975, 0.0
        %1983 = vadd.xlane.f32.xlu0 %v1982
        %v1984 = vpop.xlane.xlu0 %1983
        %v1985 = vrcp.pop %v1978
        %v1986 = vrcp.pop %v1981
        %v1987 = vrcp.pop %v1984
        %v1988 = vmul.f32 %v1971, %v1985
        %v1989 = vmul.f32 %v1973, %v1986
        %v1990 = vmul.f32 %v1975, %v1987
        %v1991 = vpack.c.bf16 %v1989, %v1988
        %v1992 = vpack.c.bf16 %v1990, %v1990
        %1993 = vrot.lane.b32.xlu0 %v1205, 80
        %v1994 = vpop.permute.xlu0 %1993
        %1995 = vrot.lane.b32.xlu0 %v1206, 80
        %v1996 = vpop.permute.xlu0 %1995
        %v1999 = vsel %vm1268, %v1991, 0
        %v2002 = vsel %vm1268, %v1992, 0
        %v2005 = vand.u32 %v1996, %v1313
        %2007 = vmatprep.subr.bf16.mxu0 0
        %2008 = vmatpush1.bf16.msra.mxu0 %v1994
        %2009 = vmatprep.subr.bf16.mxu0 0
        %2010 = vmatpush1.bf16.msra.mxu0 %v2005
        %2011 = vmatprep.subr.bf16.mxu0 0
        %2012 = vmatpush1.bf16.msra.mxu0 0
        %2013 = vmatprep.subr.bf16.mxu0 0
        %2014 = vmatpush1.bf16.msra.mxu0 0
        %2015 = vmatprep.subr.bf16.mxu0 0
        %2016 = vmatpush1.bf16.msra.mxu0 0
        %2017 = vmatprep.subr.bf16.mxu0 0
        %2018 = vmatpush1.bf16.msra.mxu0 0
        %2019 = vmatprep.subr.bf16.mxu0 0
        %2020 = vmatpush1.bf16.msra.mxu0 0
        %2021 = vmatprep.subr.bf16.mxu0 0
        %2022 = vmatpush1.bf16.msra.mxu0 0
        %2023 = vmatprep.subr.bf16.mxu0 0
        %2024 = vmatpush1.bf16.msra.mxu0 0
        %2025 = vmatprep.subr.bf16.mxu0 0
        %2026 = vmatpush1.bf16.msra.mxu0 0
        %2027 = vmatprep.subr.bf16.mxu0 0
        %2028 = vmatpush1.bf16.msra.mxu0 0
        %2029 = vmatprep.subr.bf16.mxu0 0
        %2030 = vmatpush1.bf16.msra.mxu0 0
        %2031 = vmatprep.subr.bf16.mxu0 0
        %2032 = vmatpush1.bf16.msra.mxu0 0
        %2033 = vmatprep.subr.bf16.mxu0 0
        %2034 = vmatpush1.bf16.msra.mxu0 0
        %2035 = vmatprep.subr.bf16.mxu0 0
        %2036 = vmatpush1.bf16.msra.mxu0 0
        %2037 = vmatprep.subr.bf16.mxu0 0
        %2038 = vmatpush1.bf16.msra.mxu0 0
        %2039 = vmatprep.mubr.bf16.mxu0 0
        %2040 = vmatmul.mubr.bf16.gmra.mrb[0].mxu0 %v1999
        %v2041 = vpop.f32.mrb[0].mxu0
        %v2042 = vadd.f32 0.0, %v2041
        %v2043 = vpop.f32.mrb[0].mxu0
        %v2044 = vpop.f32.mrb[0].mxu0
        %v2045 = vadd.f32 0.0, %v2044
        %v2046 = vpop.f32.mrb[0].mxu0
        %2047 = vmatprep.mubr.bf16.mxu0 0
        %2048 = vmatmul.mubr.bf16.gmra.mrb[0].mxu0 %v2002
        %v2049 = vpop.f32.mrb[0].mxu0
        %v2050 = vadd.f32 0.0, %v2049
        %v2051 = vpop.f32.mrb[0].mxu0
        %v2052 = vpop.f32.mrb[0].mxu0
        %v2053 = vpop.f32.mrb[0].mxu0
        %2054 = vdwg.mxu0
        %v2055 = vpack.c.bf16 %v2045, %v2042
        %v2056 = vpack.c.bf16 %v2050, %v2050
        %v2059 = vunpack.c.l.b16 %v1199
        %v2060 = vunpack.c.l.b16 %v1200
        %v2061 = vpack.c.b16 %v2060, %v2059
        %v2064 = vsel %vm1207, %v2055, 0
        %v2067 = vsel %vm1207, %v2056, 0
        %2069 = vmatprep.subr.bf16.mxu0 0
        %2070 = vmatpush1.bf16.msra.mxu0 %v2061
        %2071 = vmatprep.subr.bf16.mxu0 0
        %2072 = vmatpush1.bf16.msra.mxu0 0
        %2073 = vmatprep.subr.bf16.mxu0 0
        %2074 = vmatpush1.bf16.msra.mxu0 0
        %2075 = vmatprep.subr.bf16.mxu0 0
        %2076 = vmatpush1.bf16.msra.mxu0 0
        %2077 = vmatprep.subr.bf16.mxu0 0
        %2078 = vmatpush1.bf16.msra.mxu0 0
        %2079 = vmatprep.subr.bf16.mxu0 0
        %2080 = vmatpush1.bf16.msra.mxu0 0
        %2081 = vmatprep.subr.bf16.mxu0 0
        %2082 = vmatpush1.bf16.msra.mxu0 0
        %2083 = vmatprep.subr.bf16.mxu0 0
        %2084 = vmatpush1.bf16.msra.mxu0 0
        %2085 = vmatprep.subr.bf16.mxu0 0
        %2086 = vmatpush1.bf16.msra.mxu0 0
        %2087 = vmatprep.subr.bf16.mxu0 0
        %2088 = vmatpush1.bf16.msra.mxu0 0
        %2089 = vmatprep.subr.bf16.mxu0 0
        %2090 = vmatpush1.bf16.msra.mxu0 0
        %2091 = vmatprep.subr.bf16.mxu0 0
        %2092 = vmatpush1.bf16.msra.mxu0 0
        %2093 = vmatprep.subr.bf16.mxu0 0
        %2094 = vmatpush1.bf16.msra.mxu0 0
        %2095 = vmatprep.subr.bf16.mxu0 0
        %2096 = vmatpush1.bf16.msra.mxu0 0
        %2097 = vmatprep.subr.bf16.mxu0 0
        %2098 = vmatpush1.bf16.msra.mxu0 0
        %2099 = vmatprep.subr.bf16.mxu0 0
        %2100 = vmatpush1.bf16.msra.mxu0 0
        %2101 = vmatprep.mubr.bf16.mxu0 0
        %2102 = vmatmul.mubr.bf16.gmra.mrb[0].mxu0 %v2064
        %v2103 = vpop.f32.mrb[0].mxu0
        %v2104 = vadd.f32 0.0, %v2103
        %v2105 = vpop.f32.mrb[0].mxu0
        %v2106 = vpop.f32.mrb[0].mxu0
        %v2107 = vadd.f32 0.0, %v2106
        %v2108 = vpop.f32.mrb[0].mxu0
        %2109 = vmatprep.mubr.bf16.mxu0 0
        %2110 = vmatmul.mubr.bf16.gmra.mrb[0].mxu0 %v2067
        %v2111 = vpop.f32.mrb[0].mxu0
        %v2112 = vadd.f32 0.0, %v2111
        %v2113 = vpop.f32.mrb[0].mxu0
        %v2114 = vpop.f32.mrb[0].mxu0
        %v2115 = vpop.f32.mrb[0].mxu0
        %2116 = vdwg.mxu0
        %v2117 = vadd.f32 %v1887, %v2104
        %v2118 = vadd.f32 %v1888, %v2107
        %v2119 = vadd.f32 %v1889, %v2112
        %v2120 = vld [vmem:[#allocation19] sm:$0x1]
        %v2122 = vlaneseq
        %v2123 = vshrl.u32 %v2122, 7
        %v2124 = vsub.s32 0, %v2123
        %v2125 = vrot.slane %v2120, %v2124
        %v2127 = vadd.f32 %v2117, %v2125
        %v2128 = vadd.f32 %v2118, %v2125
        %v2129 = vadd.f32 %v2119, %v2125
        %v2130 = vmul.f32 %v2127, 2.0
        %v2131 = vmul.f32 %v2128, 2.0
        %v2132 = vmul.f32 %v2129, 2.0
        %v2133 = vld [vmem:[#allocation20] sm:$0x1]
        %v2134 = vld [vmem:[#allocation22] sm:$0x1]
        %v2135 = vsel %vm864, %v2130, 0.0
        %2136 = vadd.xlane.f32.xlu0 %v2135
        %v2137 = vpop.xlane.xlu0 %2136
        %v2138 = vsel %vm864, %v2131, 0.0
        %2139 = vadd.xlane.f32.xlu0 %v2138
        %v2140 = vpop.xlane.xlu0 %2139
        %v2141 = vsel %vm871, %v2132, 0.0
        %2142 = vadd.xlane.f32.xlu0 %v2141
        %v2143 = vpop.xlane.xlu0 %2142
        %v2144 = vmul.f32 %v2137, %v875
        %v2145 = vmul.f32 %v2140, %v875
        %v2146 = vmul.f32 %v2143, %v875
        %v2147 = vsub.f32 %v2130, %v2144
        %v2148 = vsub.f32 %v2131, %v2145
        %v2149 = vsub.f32 %v2132, %v2146
        %v2150 = vmul.f32 %v2147, %v2147
        %v2151 = vmul.f32 %v2148, %v2148
        %v2152 = vmul.f32 %v2149, %v2149
        %v2153 = vsel %vm864, %v2150, 0.0
        %2154 = vadd.xlane.f32.xlu0 %v2153
        %v2155 = vpop.xlane.xlu0 %2154
        %v2156 = vsel %vm864, %v2151, 0.0
        %2157 = vadd.xlane.f32.xlu0 %v2156
        %v2158 = vpop.xlane.xlu0 %2157
        %v2159 = vsel %vm871, %v2152, 0.0
        %2160 = vadd.xlane.f32.xlu0 %v2159
        %v2161 = vpop.xlane.xlu0 %2160
        %v2162 = vmul.f32 %v2155, %v875
        %v2163 = vmul.f32 %v2158, %v875
        %v2164 = vmul.f32 %v2161, %v875
        %v2165 = vadd.f32 %v2162, 1e-05
        %v2166 = vadd.f32 %v2163, 1e-05
        %v2167 = vadd.f32 %v2164, 1e-05
        %v2168 = vrsqrt.pop %v2165
        %v2169 = vrsqrt.pop %v2166
        %v2170 = vrsqrt.pop %v2167
        %v2171 = vmul.f32 %v2147, %v2168
        %v2172 = vmul.f32 %v2148, %v2169
        %v2173 = vmul.f32 %v2149, %v2170
        %v2175 = vlaneseq
        %v2176 = vshrl.u32 %v2175, 7
        %v2177 = vsub.s32 0, %v2176
        %v2178 = vrot.slane %v2133, %v2177
        %v2180 = vmul.f32 %v2171, %v2178
        %v2181 = vmul.f32 %v2172, %v2178
        %v2182 = vmul.f32 %v2173, %v2178
        %v2184 = vlaneseq
        %v2185 = vshrl.u32 %v2184, 7
        %v2186 = vsub.s32 0, %v2185
        %v2187 = vrot.slane %v2134, %v2186
        %v2189 = vadd.f32 %v2180, %v2187
        %v2190 = vadd.f32 %v2181, %v2187
        %v2191 = vadd.f32 %v2182, %v2187
        %v2192 = vpack.c.bf16 %v2190, %v2189
        %v2193 = vpack.c.bf16 %v2191, %v2191
        %v2194 = vld [vmem:[#allocation23] sm:$0xff]
        %v2195 = vld [vmem:[#allocation23 + $0x8] sm:$0xff]
        %v2196 = vld [vmem:[#allocation23 + $0x10] sm:$0xff]
        %v2197 = vld [vmem:[#allocation23 + $0x18] sm:$0xff]
        %v2198 = vld [vmem:[#allocation23 + $0x20] sm:$0xff]
        %v2199 = vld [vmem:[#allocation23 + $0x28] sm:$0xff]
        %v2200 = vld [vmem:[#allocation23 + $0x30] sm:$0xff]
        %v2201 = vld [vmem:[#allocation23 + $0x38] sm:$0xff]
        %v2202 = vld [vmem:[#allocation25] sm:$0x3]
        %v2204 = vlaneseq
        %v2205 = vshrl.u32 %v2204, 7
        %v2206 = vsub.s32 0, %v2205
        %v2207 = vrot.slane %v2202, %v2206
        %v2208 = vlaneseq
        %v2209 = vshrl.u32 %v2208, 7
        %v2210 = vsub.s32 1, %v2209
        %v2211 = vrot.slane %v2202, %v2210
        %v2222 = vunpack.c.l.b16 %v2194
        %v2223 = vunpack.c.h.b16 %v2194
        %v2224 = vunpack.c.l.b16 %v2195
        %v2225 = vunpack.c.h.b16 %v2195
        %v2226 = vunpack.c.l.b16 %v2196
        %v2227 = vunpack.c.h.b16 %v2196
        %v2228 = vunpack.c.l.b16 %v2197
        %v2229 = vunpack.c.h.b16 %v2197
        %v2230 = vunpack.c.l.b16 %v2198
        %v2231 = vunpack.c.h.b16 %v2198
        %v2232 = vunpack.c.l.b16 %v2199
        %v2233 = vunpack.c.h.b16 %v2199
        %v2234 = vunpack.c.l.b16 %v2200
        %v2235 = vunpack.c.h.b16 %v2200
        %v2236 = vunpack.c.l.b16 %v2201
        %v2237 = vunpack.c.h.b16 %v2201
        %v2238 = vpack.c.b16 %v2224, %v2222
        %v2239 = vpack.c.b16 %v2225, %v2223
        %v2240 = vpack.c.b16 %v2228, %v2226
        %v2241 = vpack.c.b16 %v2229, %v2227
        %v2242 = vpack.c.b16 %v2232, %v2230
        %v2243 = vpack.c.b16 %v2233, %v2231
        %v2244 = vpack.c.b16 %v2236, %v2234
        %v2245 = vpack.c.b16 %v2237, %v2235
        %v2255 = vsel %vm864, %v2192, 0
        %v2258 = vsel %vm864, %v2193, 0
        %2260 = vmatprep.subr.bf16.mxu0 %v2239
        %2261 = vmatpush1.bf16.msra.mxu0 %v2238
        %2262 = vmatprep.subr.bf16.mxu0 %v2241
        %2263 = vmatpush1.bf16.msra.mxu0 %v2240
        %2264 = vmatprep.subr.bf16.mxu0 %v2243
        %2265 = vmatpush1.bf16.msra.mxu0 %v2242
        %2266 = vmatprep.subr.bf16.mxu0 %v2245
        %2267 = vmatpush1.bf16.msra.mxu0 %v2244
        %2268 = vmatprep.subr.bf16.mxu0 0
        %2269 = vmatpush1.bf16.msra.mxu0 0
        %2270 = vmatprep.subr.bf16.mxu0 0
        %2271 = vmatpush1.bf16.msra.mxu0 0
        %2272 = vmatprep.subr.bf16.mxu0 0
        %2273 = vmatpush1.bf16.msra.mxu0 0
        %2274 = vmatprep.subr.bf16.mxu0 0
        %2275 = vmatpush1.bf16.msra.mxu0 0
        %2276 = vmatprep.subr.bf16.mxu0 0
        %2277 = vmatpush1.bf16.msra.mxu0 0
        %2278 = vmatprep.subr.bf16.mxu0 0
        %2279 = vmatpush1.bf16.msra.mxu0 0
        %2280 = vmatprep.subr.bf16.mxu0 0
        %2281 = vmatpush1.bf16.msra.mxu0 0
        %2282 = vmatprep.subr.bf16.mxu0 0
        %2283 = vmatpush1.bf16.msra.mxu0 0
        %2284 = vmatprep.subr.bf16.mxu0 0
        %2285 = vmatpush1.bf16.msra.mxu0 0
        %2286 = vmatprep.subr.bf16.mxu0 0
        %2287 = vmatpush1.bf16.msra.mxu0 0
        %2288 = vmatprep.subr.bf16.mxu0 0
        %2289 = vmatpush1.bf16.msra.mxu0 0
        %2290 = vmatprep.subr.bf16.mxu0 0
        %2291 = vmatpush1.bf16.msra.mxu0 0
        %2292 = vmatprep.mubr.bf16.mxu0 0
        %2293 = vmatmul.mubr.bf16.gmra.mrb[0].mxu0 %v2255
        %v2294 = vpop.f32.mrb[0].mxu0
        %v2295 = vadd.f32 %v2207, %v2294
        %v2296 = vpop.f32.mrb[0].mxu0
        %v2297 = vadd.f32 %v2211, %v2296
        %v2298 = vpop.f32.mrb[0].mxu0
        %v2299 = vadd.f32 %v2207, %v2298
        %v2300 = vpop.f32.mrb[0].mxu0
        %v2301 = vadd.f32 %v2211, %v2300
        %2302 = vmatprep.mubr.bf16.mxu0 0
        %2303 = vmatmul.mubr.bf16.gmra.mrb[0].mxu0 %v2258
        %v2304 = vpop.f32.mrb[0].mxu0
        %v2305 = vadd.f32 %v2207, %v2304
        %v2306 = vpop.f32.mrb[0].mxu0
        %v2307 = vadd.f32 %v2211, %v2306
        %v2308 = vpop.f32.mrb[0].mxu0
        %v2309 = vpop.f32.mrb[0].mxu0
        %2310 = vdwg.mxu0
        %v2311 = vmul.f32 %v2295, 0.5
        %v2312 = vmul.f32 %v2297, 0.5
        %v2313 = vmul.f32 %v2299, 0.5
        %v2314 = vmul.f32 %v2301, 0.5
        %v2315 = vmul.f32 %v2305, 0.5
        %v2316 = vmul.f32 %v2307, 0.5
        %v2317 = vmul.f32 %v2295, 0.70710677
        %v2318 = vmul.f32 %v2297, 0.70710677
        %v2319 = vmul.f32 %v2299, 0.70710677
        %v2320 = vmul.f32 %v2301, 0.70710677
        %v2321 = vmul.f32 %v2305, 0.70710677
        %v2322 = vmul.f32 %v2307, 0.70710677
        %v2323 = verf.f32.pop %v2317
        %v2324 = verf.f32.pop %v2318
        %v2325 = verf.f32.pop %v2319
        %v2326 = verf.f32.pop %v2320
        %v2327 = verf.f32.pop %v2321
        %v2328 = verf.f32.pop %v2322
        %v2329 = vadd.f32 %v2323, 1.0
        %v2330 = vadd.f32 %v2324, 1.0
        %v2331 = vadd.f32 %v2325, 1.0
        %v2332 = vadd.f32 %v2326, 1.0
        %v2333 = vadd.f32 %v2327, 1.0
        %v2334 = vadd.f32 %v2328, 1.0
        %v2335 = vmul.f32 %v2311, %v2329
        %v2336 = vmul.f32 %v2312, %v2330
        %v2337 = vmul.f32 %v2313, %v2331
        %v2338 = vmul.f32 %v2314, %v2332
        %v2339 = vmul.f32 %v2315, %v2333
        %v2340 = vmul.f32 %v2316, %v2334
        %v2341 = vld [vmem:[#allocation26] sm:$0x3]
        %v2342 = vld [vmem:[#allocation28] sm:$0x3]
        %v2343 = vadd.f32 %v2335, %v2336
        %2344 = vadd.xlane.f32.xlu0 %v2343
        %v2345 = vpop.xlane.xlu0 %2344
        %v2346 = vadd.f32 %v2337, %v2338
        %2347 = vadd.xlane.f32.xlu0 %v2346
        %v2348 = vpop.xlane.xlu0 %2347
        %v2349 = vsel %vm1311, %v2339, 0.0
        %v2350 = vsel %vm1311, %v2340, 0.0
        %v2351 = vadd.f32 %v2349, %v2350
        %2352 = vadd.xlane.f32.xlu0 %v2351
        %v2353 = vpop.xlane.xlu0 %2352
        %v2354 = vrcp.pop 256.0
        %v2355 = vmul.f32 %v2345, %v2354
        %v2356 = vmul.f32 %v2348, %v2354
        %v2357 = vmul.f32 %v2353, %v2354
        %v2358 = vsub.f32 %v2335, %v2355
        %v2359 = vsub.f32 %v2336, %v2355
        %v2360 = vsub.f32 %v2337, %v2356
        %v2361 = vsub.f32 %v2338, %v2356
        %v2362 = vsub.f32 %v2339, %v2357
        %v2363 = vsub.f32 %v2340, %v2357
        %v2364 = vmul.f32 %v2358, %v2358
        %v2365 = vmul.f32 %v2359, %v2359
        %v2366 = vmul.f32 %v2360, %v2360
        %v2367 = vmul.f32 %v2361, %v2361
        %v2368 = vmul.f32 %v2362, %v2362
        %v2369 = vmul.f32 %v2363, %v2363
        %v2370 = vadd.f32 %v2364, %v2365
        %2371 = vadd.xlane.f32.xlu0 %v2370
        %v2372 = vpop.xlane.xlu0 %2371
        %v2373 = vadd.f32 %v2366, %v2367
        %2374 = vadd.xlane.f32.xlu0 %v2373
        %v2375 = vpop.xlane.xlu0 %2374
        %v2376 = vsel %vm1311, %v2368, 0.0
        %v2377 = vsel %vm1311, %v2369, 0.0
        %v2378 = vadd.f32 %v2376, %v2377
        %2379 = vadd.xlane.f32.xlu0 %v2378
        %v2380 = vpop.xlane.xlu0 %2379
        %v2381 = vmul.f32 %v2372, %v2354
        %v2382 = vmul.f32 %v2375, %v2354
        %v2383 = vmul.f32 %v2380, %v2354
        %v2384 = vadd.f32 %v2381, 1e-05
        %v2385 = vadd.f32 %v2382, 1e-05
        %v2386 = vadd.f32 %v2383, 1e-05
        %v2387 = vrsqrt.pop %v2384
        %v2388 = vrsqrt.pop %v2385
        %v2389 = vrsqrt.pop %v2386
        %v2390 = vmul.f32 %v2358, %v2387
        %v2391 = vmul.f32 %v2359, %v2387
        %v2392 = vmul.f32 %v2360, %v2388
        %v2393 = vmul.f32 %v2361, %v2388
        %v2394 = vmul.f32 %v2362, %v2389
        %v2395 = vmul.f32 %v2363, %v2389
        %v2397 = vlaneseq
        %v2398 = vshrl.u32 %v2397, 7
        %v2399 = vsub.s32 0, %v2398
        %v2400 = vrot.slane %v2341, %v2399
        %v2401 = vlaneseq
        %v2402 = vshrl.u32 %v2401, 7
        %v2403 = vsub.s32 1, %v2402
        %v2404 = vrot.slane %v2341, %v2403
        %v2407 = vmul.f32 %v2390, %v2400
        %v2408 = vmul.f32 %v2391, %v2404
        %v2409 = vmul.f32 %v2392, %v2400
        %v2410 = vmul.f32 %v2393, %v2404
        %v2411 = vmul.f32 %v2394, %v2400
        %v2412 = vmul.f32 %v2395, %v2404
        %v2414 = vlaneseq
        %v2415 = vshrl.u32 %v2414, 7
        %v2416 = vsub.s32 0, %v2415
        %v2417 = vrot.slane %v2342, %v2416
        %v2418 = vlaneseq
        %v2419 = vshrl.u32 %v2418, 7
        %v2420 = vsub.s32 1, %v2419
        %v2421 = vrot.slane %v2342, %v2420
        %v2424 = vadd.f32 %v2407, %v2417
        %v2425 = vadd.f32 %v2408, %v2421
        %v2426 = vadd.f32 %v2409, %v2417
        %v2427 = vadd.f32 %v2410, %v2421
        %v2428 = vadd.f32 %v2411, %v2417
        %v2429 = vadd.f32 %v2412, %v2421
        %v2430 = vpack.c.bf16 %v2426, %v2424
        %v2431 = vpack.c.bf16 %v2427, %v2425
        %v2432 = vpack.c.bf16 %v2428, %v2428
        %v2433 = vpack.c.bf16 %v2429, %v2429
        %v2434 = vld [vmem:[#allocation29] sm:$0xf]
        %v2435 = vld [vmem:[#allocation29 + $0x4] sm:$0xf]
        %v2436 = vld [vmem:[#allocation29 + $0x8] sm:$0xf]
        %v2437 = vld [vmem:[#allocation29 + $0xc] sm:$0xf]
        %v2438 = vld [vmem:[#allocation29 + $0x10] sm:$0xf]
        %v2439 = vld [vmem:[#allocation29 + $0x14] sm:$0xf]
        %v2440 = vld [vmem:[#allocation29 + $0x18] sm:$0xf]
        %v2441 = vld [vmem:[#allocation29 + $0x1c] sm:$0xf]
        %v2442 = vld [vmem:[#allocation29 + $0x20] sm:$0xf]
        %v2443 = vld [vmem:[#allocation29 + $0x24] sm:$0xf]
        %v2444 = vld [vmem:[#allocation29 + $0x28] sm:$0xf]
        %v2445 = vld [vmem:[#allocation29 + $0x2c] sm:$0xf]
        %v2446 = vld [vmem:[#allocation29 + $0x30] sm:$0xf]
        %v2447 = vld [vmem:[#allocation29 + $0x34] sm:$0xf]
        %v2448 = vld [vmem:[#allocation29 + $0x38] sm:$0xf]
        %v2449 = vld [vmem:[#allocation29 + $0x3c] sm:$0xf]
        %v2450 = vld [vmem:[#allocation29 + $0x40] sm:$0xf]
        %v2451 = vld [vmem:[#allocation29 + $0x44] sm:$0xf]
        %v2452 = vld [vmem:[#allocation29 + $0x48] sm:$0xf]
        %v2453 = vld [vmem:[#allocation29 + $0x4c] sm:$0xf]
        %v2454 = vld [vmem:[#allocation29 + $0x50] sm:$0xf]
        %v2455 = vld [vmem:[#allocation29 + $0x54] sm:$0xf]
        %v2456 = vld [vmem:[#allocation29 + $0x58] sm:$0xf]
        %v2457 = vld [vmem:[#allocation29 + $0x5c] sm:$0xf]
        %v2458 = vld [vmem:[#allocation29 + $0x60] sm:$0xf]
        %v2459 = vld [vmem:[#allocation29 + $0x64] sm:$0xf]
        %v2460 = vld [vmem:[#allocation29 + $0x68] sm:$0xf]
        %v2461 = vld [vmem:[#allocation29 + $0x6c] sm:$0xf]
        %v2462 = vld [vmem:[#allocation29 + $0x70] sm:$0xf]
        %v2463 = vld [vmem:[#allocation29 + $0x74] sm:$0xf]
        %v2464 = vld [vmem:[#allocation29 + $0x78] sm:$0xf]
        %v2465 = vld [vmem:[#allocation29 + $0x7c] sm:$0xf]
        %v2466 = vld [vmem:[#allocation31] sm:$0x1]
        %v2468 = vlaneseq
        %v2469 = vshrl.u32 %v2468, 7
        %v2470 = vsub.s32 0, %v2469
        %v2471 = vrot.slane %v2466, %v2470
        %v2505 = vunpack.c.l.b16 %v2434
        %v2506 = vunpack.c.l.b16 %v2435
        %v2507 = vunpack.c.l.b16 %v2436
        %v2508 = vunpack.c.l.b16 %v2437
        %v2509 = vunpack.c.l.b16 %v2438
        %v2510 = vunpack.c.l.b16 %v2439
        %v2511 = vunpack.c.l.b16 %v2440
        %v2512 = vunpack.c.l.b16 %v2441
        %v2513 = vunpack.c.l.b16 %v2442
        %v2514 = vunpack.c.l.b16 %v2443
        %v2515 = vunpack.c.l.b16 %v2444
        %v2516 = vunpack.c.l.b16 %v2445
        %v2517 = vunpack.c.l.b16 %v2446
        %v2518 = vunpack.c.l.b16 %v2447
        %v2519 = vunpack.c.l.b16 %v2448
        %v2520 = vunpack.c.l.b16 %v2449
        %v2521 = vunpack.c.l.b16 %v2450
        %v2522 = vunpack.c.l.b16 %v2451
        %v2523 = vunpack.c.l.b16 %v2452
        %v2524 = vunpack.c.l.b16 %v2453
        %v2525 = vunpack.c.l.b16 %v2454
        %v2526 = vunpack.c.l.b16 %v2455
        %v2527 = vunpack.c.l.b16 %v2456
        %v2528 = vunpack.c.l.b16 %v2457
        %v2529 = vunpack.c.l.b16 %v2458
        %v2530 = vunpack.c.l.b16 %v2459
        %v2531 = vunpack.c.l.b16 %v2460
        %v2532 = vunpack.c.l.b16 %v2461
        %v2533 = vunpack.c.l.b16 %v2462
        %v2534 = vunpack.c.l.b16 %v2463
        %v2535 = vunpack.c.l.b16 %v2464
        %v2536 = vunpack.c.l.b16 %v2465
        %v2537 = vpack.c.b16 %v2506, %v2505
        %v2538 = vpack.c.b16 %v2508, %v2507
        %v2539 = vpack.c.b16 %v2510, %v2509
        %v2540 = vpack.c.b16 %v2512, %v2511
        %v2541 = vpack.c.b16 %v2514, %v2513
        %v2542 = vpack.c.b16 %v2516, %v2515
        %v2543 = vpack.c.b16 %v2518, %v2517
        %v2544 = vpack.c.b16 %v2520, %v2519
        %v2545 = vpack.c.b16 %v2522, %v2521
        %v2546 = vpack.c.b16 %v2524, %v2523
        %v2547 = vpack.c.b16 %v2526, %v2525
        %v2548 = vpack.c.b16 %v2528, %v2527
        %v2549 = vpack.c.b16 %v2530, %v2529
        %v2550 = vpack.c.b16 %v2532, %v2531
        %v2551 = vpack.c.b16 %v2534, %v2533
        %v2552 = vpack.c.b16 %v2536, %v2535
        %2569 = vmatprep.subr.bf16.mxu0 0
        %2570 = vmatpush1.bf16.msra.mxu0 %v2537
        %2571 = vmatprep.subr.bf16.mxu0 0
        %2572 = vmatpush1.bf16.msra.mxu0 %v2538
        %2573 = vmatprep.subr.bf16.mxu0 0
        %2574 = vmatpush1.bf16.msra.mxu0 %v2539
        %2575 = vmatprep.subr.bf16.mxu0 0
        %2576 = vmatpush1.bf16.msra.mxu0 %v2540
        %2577 = vmatprep.subr.bf16.mxu0 0
        %2578 = vmatpush1.bf16.msra.mxu0 %v2541
        %2579 = vmatprep.subr.bf16.mxu0 0
        %2580 = vmatpush1.bf16.msra.mxu0 %v2542
        %2581 = vmatprep.subr.bf16.mxu0 0
        %2582 = vmatpush1.bf16.msra.mxu0 %v2543
        %2583 = vmatprep.subr.bf16.mxu0 0
        %2584 = vmatpush1.bf16.msra.mxu0 %v2544
        %2585 = vmatprep.subr.bf16.mxu0 0
        %2586 = vmatpush1.bf16.msra.mxu0 %v2545
        %2587 = vmatprep.subr.bf16.mxu0 0
        %2588 = vmatpush1.bf16.msra.mxu0 %v2546
        %2589 = vmatprep.subr.bf16.mxu0 0
        %2590 = vmatpush1.bf16.msra.mxu0 %v2547
        %2591 = vmatprep.subr.bf16.mxu0 0
        %2592 = vmatpush1.bf16.msra.mxu0 %v2548
        %2593 = vmatprep.subr.bf16.mxu0 0
        %2594 = vmatpush1.bf16.msra.mxu0 %v2549
        %2595 = vmatprep.subr.bf16.mxu0 0
        %2596 = vmatpush1.bf16.msra.mxu0 %v2550
        %2597 = vmatprep.subr.bf16.mxu0 0
        %2598 = vmatpush1.bf16.msra.mxu0 %v2551
        %2599 = vmatprep.subr.bf16.mxu0 0
        %2600 = vmatpush1.bf16.msra.mxu0 %v2552
        %2601 = vmatprep.mubr.bf16.mxu0 %v2431
        %2602 = vmatmul.mubr.bf16.gmra.mrb[0].mxu0 %v2430
        %v2603 = vpop.f32.mrb[0].mxu0
        %v2604 = vadd.f32 %v2471, %v2603
        %v2605 = vpop.f32.mrb[0].mxu0
        %v2606 = vpop.f32.mrb[0].mxu0
        %v2607 = vadd.f32 %v2471, %v2606
        %v2608 = vpop.f32.mrb[0].mxu0
        %2609 = vmatprep.mubr.bf16.mxu0 %v2433
        %2610 = vmatmul.mubr.bf16.gmra.mrb[0].mxu0 %v2432
        %v2611 = vpop.f32.mrb[0].mxu0
        %v2612 = vadd.f32 %v2471, %v2611
        %v2613 = vpop.f32.mrb[0].mxu0
        %v2614 = vpop.f32.mrb[0].mxu0
        %v2615 = vpop.f32.mrb[0].mxu0
        %2616 = vdwg.mxu0
        %v2617 = vmul.f32 %v2604, 2.0
        %v2618 = vmul.f32 %v2607, 2.0
        %v2619 = vmul.f32 %v2612, 2.0
        %2620 = vst.msk [vmem:[%s857] sm:$0xff] %vm864, %v2617
        %2621 = vst.msk [vmem:[%s857 + $0x8] sm:$0xff] %vm864, %v2618
        %2622 = vst.msk [vmem:[%s857 + $0x10] sm:$0x1] %vm871, %v2619
        %s2623 = sand.u32 %s457, 1
        %s2624 = scalar_lea.sflag [#allocation4], %s2623
        %s2625 = sand.u32 %s457, 1
        %s2626 = smul.addr %s2625, 24
        %s2627 = scalar_lea.vmem [#allocation32], %s2626
        // Predicated region
        $region173: #{tpu_custom_call.1} parent=95 // pred_check
          %p2628 = pneg %p467
        $region174: #{tpu_custom_call.1} parent=95 // pred_check_branch
          %2630 = sbr.rel (%p2628) target = $region176
        $region175: #{tpu_custom_call.1} parent=95 // pred_region
          %s2632 = ssub.s32 384, 384
          %2633 = vsyncadd %s2624, %s2632
          %s2634 = smul.addr %s45, 3
          %s2635 = smul.addr %s2634, 128
          %s2636 = scalar_lea.hbm %s19, %s2635
          %s2637 = sshll.u32 %s2627, 4
          %s2638 = int_to_ptr.vmem [resolvable:$true] %s2637
          %2643 = dma.vmem_to_hbm [thread:$0]  %s2638, 384, %s2636, %s2624, 128, 128, 8
        $region176: #{tpu_custom_call.1} parent=95 // pred_fallthru
          _
      $region96: #{tpu_custom_call.1} parent=5 // pred_fallthru
        _
      %p2644 = scmp.le.s32.totalorder 2, %s40
      // Predicated region
      $region177: #{tpu_custom_call.1} parent=5 // pred_check
        %p2645 = pneg %p2644
      $region178: #{tpu_custom_call.1} parent=5 // pred_check_branch
        %2647 = sbr.rel (%p2645) target = $region180
      $region179: #{tpu_custom_call.1} parent=5 // pred_region
        %s2648 = ssub.s32 %s40, 2
        // Predicated region
        $region181: #{tpu_custom_call.1} parent=179 // pred_check
          %p2649 = pneg %p473
        $region182: #{tpu_custom_call.1} parent=179 // pred_check_branch
          %2651 = sbr.rel (%p2649) target = $region184
        $region183: #{tpu_custom_call.1} parent=179 // pred_region
          %s2652 = sand.u32 %s458, 1
          %s2653 = scalar_lea.sflag [#allocation4], %s2652
          %s2654 = sand.u32 %s458, 1
          %s2655 = smul.addr %s2654, 24
          %s2656 = scalar_lea.vmem [#allocation32], %s2655
          %2657 = dma.done %s2653, 384
        $region184: #{tpu_custom_call.1} parent=179 // pred_fallthru
          _
      $region180: #{tpu_custom_call.1} parent=5 // pred_fallthru
        _
    $region6: #{tpu_custom_call.1} parent=1 // loop_footer
      %s44 = sadd.s32 1, %s40
    $region7: #{tpu_custom_call.1} parent=1 // loop_footer_branch
      %39 = sbr.rel target = $region3
    $region8: #{tpu_custom_call.1} parent=1 // loop_exit
      _
    %2658 = vsyncpa [#allocation3], 1
    %s2659 = scalar_lea.sflag [#allocation3], 1
    %2660 = vsyncpa %s2659, 1
    %2661 = vsyncpa [#allocation6], 1
    %2662 = vsyncpa [#allocation9], 1
    %2663 = vsyncpa [#allocation12], 1
    %2664 = vsyncpa [#allocation15], 1
    %2665 = vsyncpa [#allocation18], 1
    %2666 = vsyncpa [#allocation21], 1
    %2667 = vsyncpa [#allocation24], 1
    %2668 = vsyncpa [#allocation27], 1
    %2669 = vsyncpa [#allocation30], 1
    %2670 = vsyncpa [#allocation4], 1
    %s2671 = scalar_lea.sflag [#allocation4], 1
    %2672 = vsyncpa %s2671, 1

</llo_original>
